<compile_context>
chip_gen: v7x
topology: tpu7x:2x2x1
jax: 0.10.0
libtpu: 0.0.40
codegen_flags: <defaults>
</compile_context>

<pallas_src>
import functools

import jax
import jax.numpy as jnp
from jax.experimental import pallas as pl
from jax.experimental.pallas import tpu as pltpu


def _round_up(n, m):
    return ((n + m - 1) // m) * m


def _softmax_f32(logits):
    """Numerically-stable softmax in f32; reciprocal goes to the EUP slot."""
    logits = logits.astype(jnp.float32)
    m = jnp.max(logits, axis=-1, keepdims=True)
    ex = jnp.exp(logits - m)
    return ex * pl.reciprocal(jnp.sum(ex, axis=-1, keepdims=True), approx=True)


def _gated_pw_combine(gates, y, c, n_exps, dout, dtype):
    """sum_e gates[:, e] * (y[:, e*dout:(e+1)*dout] - c[e, :]), computed in `dtype`."""
    g = gates.astype(dtype)
    yv = y.astype(dtype)
    cv = c.astype(dtype)
    acc = g[:, 0:1] * (yv[:, 0:dout] - cv[0:1, :])
    for e in range(1, n_exps):                       # E is small & static -> unrolled
        acc = acc + g[:, e:e + 1] * (yv[:, e * dout:(e + 1) * dout] - cv[e:e + 1, :])
    return acc


def _moe_adaptor_kernel(x_ref, wA_ref, cA_ref, wB_ref, cB_ref, o_ref, *,
                        n_exps, hp, d_model, gate_a_col, gate_b_col,
                        compute_dtype, combine_dtype):
    """Fused MoE_A -> MoE_B -> +residual for one token tile.

    x_ref:  (TM, D)        token tile (native HBM dtype)
    wA_ref: (D, WA_N)      concatenated expert weights A; gate cols at gate_a_col
    cA_ref: (E, Hp)        C_A[e] = bias_A[e] @ W_A[e]   (f32)
    wB_ref: (Hp, WB_N)     concatenated expert weights B; gate cols at gate_b_col
    cB_ref: (E, D)         C_B[e] = bias_B[e] @ W_B[e]   (f32)
    o_ref:  (TM, D)
    """
    x = x_ref[...]
    xc = x.astype(compute_dtype)                      # bf16 MXU path even for f32 inputs

    # ---- MoE layer A: one MXU matmul yields all expert outputs AND gate logits ----
    yA = jnp.dot(xc, wA_ref[...], preferred_element_type=jnp.float32)     # (TM, WA_N)
    gA = _softmax_f32(yA[:, gate_a_col:gate_a_col + n_exps])              # (TM, E)
    h = _gated_pw_combine(gA, yA, cA_ref[...], n_exps, hp, combine_dtype)  # (TM, Hp)
    h = h.astype(compute_dtype)

    # ---- MoE layer B ----
    yB = jnp.dot(h, wB_ref[...], preferred_element_type=jnp.float32)       # (TM, WB_N)
    gB = _softmax_f32(yB[:, gate_b_col:gate_b_col + n_exps])
    y = _gated_pw_combine(gB, yB, cB_ref[...], n_exps, d_model, jnp.float32)

    # ---- residual (f32) ----
    o_ref[...] = (y + x.astype(jnp.float32)).astype(o_ref.dtype)


def _prepare_fused_params(params, compute_dtype):
    """Build padded / concatenated parameter tensors consumed by the fused kernel."""
    wA, biasA, wgA = params["A"]["w"], params["A"]["bias"], params["A"]["w_gate"]
    wB, biasB, wgB = params["B"]["w"], params["B"]["bias"], params["B"]["w_gate"]
    wA, biasA, wgA = (t.astype(jnp.float32) for t in (wA, biasA, wgA))
    wB, biasB, wgB = (t.astype(jnp.float32) for t in (wB, biasB, wgB))
    E, D, H = wA.shape
    assert wB.shape == (E, H, D)

    Hp = _round_up(H, 128)                            # lane-align the bottleneck dim

    # ---- Layer A: pad Dout -> Hp, fold/append gate columns, concat along Dout ----
    wA_pad = jnp.pad(wA, ((0, 0), (0, 0), (0, Hp - H)))                   # (E, D, Hp)
    cA = jnp.einsum("ed,edh->eh", biasA, wA_pad)                          # (E, Hp); padded cols = 0
    if Hp - H >= E:
        # Gate columns ride in expert 0's padding lanes: zero extra MXU columns.
        # (Junk lands in h's padded lanes H..H+E; those lanes hit only zero rows
        #  of W_B / w_gate_B below, so nothing propagates.)
        gate_a_col = H
        wA_pad = wA_pad.at[0, :, H:H + E].set(wgA)
        wA_cat = jnp.transpose(wA_pad, (1, 0, 2)).reshape(D, E * Hp)
    else:
        # H is (nearly) 128-aligned: append one extra lane group holding the gate.
        gate_a_col = E * Hp
        wA_cat = jnp.transpose(wA_pad, (1, 0, 2)).reshape(D, E * Hp)
        gate_blk = jnp.zeros((D, 128), jnp.float32).at[:, :E].set(wgA)
        wA_cat = jnp.concatenate([wA_cat, gate_blk], axis=1)

    # ---- Layer B: pad Din -> Hp with zero rows, append gate lane group, concat ----
    wB_pad = jnp.pad(wB, ((0, 0), (0, Hp - H), (0, 0)))                   # (E, Hp, D)
    cB = jnp.einsum("eh,ehd->ed", biasB, wB)                              # (E, D)
    wB_cat = jnp.transpose(wB_pad, (1, 0, 2)).reshape(Hp, E * D)
    gate_b_col = E * D
    gate_blk_b = jnp.zeros((Hp, 128), jnp.float32).at[:H, :E].set(wgB)
    wB_cat = jnp.concatenate([wB_cat, gate_blk_b], axis=1)                # (Hp, E*D+128)

    return {
        "hp": Hp, "gate_a_col": gate_a_col, "gate_b_col": gate_b_col,
        "wA": wA_cat.astype(compute_dtype), "cA": cA,                     # cA/cB stay f32
        "wB": wB_cat.astype(compute_dtype), "cB": cB,
    }


def _tpu_generation():
    try:
        kind = jax.devices()[0].device_kind.lower().replace(" ", "")
    except Exception:
        return "unknown"
    if "v5lite" in kind or "v5e" in kind:
        return "v5e"
    if "v6" in kind:
        return "v6e"
    if "v7" in kind or "tpu7" in kind:
        return "v7x"
    return "other"


_WEIGHT_SINGLE_BUFFER_OK = True     # flipped if this JAX build rejects pl.Buffered(1)


def moe_adaptor_forward(x, params, *, tm=None, compute_dtype=jnp.bfloat16):
    """x: (B, S, D) -> (B, S, D). Fused MoE_A -> MoE_B -> +residual (eval mode)."""
    global _WEIGHT_SINGLE_BUFFER_OK
    B, S, D = x.shape
    E, Din, H = params["A"]["w"].shape
    assert Din == D
    T = B * S
    dtype = x.dtype
    xs = jnp.dtype(dtype).itemsize
    cs = jnp.dtype(compute_dtype).itemsize

    gen = _tpu_generation()
    # bf16 VPU combine only where the VALU supports bf16 (v6e/v7x); f32 elsewhere.
    combine_dtype = compute_dtype if gen in ("v6e", "v7x") else jnp.float32
    if gen == "v7x":
        tm_default, vmem_cap = 512, 56 * 1024 * 1024      # 64 MiB physical, keep scratch headroom
    elif gen in ("v5e", "v6e"):
        tm_default, vmem_cap = 1024, 100 * 1024 * 1024    # 128 MiB physical
    else:
        tm_default, vmem_cap = 512, 64 * 1024 * 1024

    fused = _prepare_fused_params(params, compute_dtype=compute_dtype)
    Hp = fused["hp"]
    WA_N = fused["wA"].shape[1]
    WB_N = fused["wB"].shape[1]

    # Token tiling: minimum sublane tile follows the HBM dtype of x (f32:8, bf16:16, int8:32).
    sub_min = {4: 8, 2: 16, 1: 32}.get(xs, 8)
    tm = tm_default if tm is None else int(tm)
    tm = max(sub_min, _round_up(min(tm, _round_up(T, sub_min)), sub_min))
    if gen == "v7x" and T >= 512:
        # Keep >= 2 grid steps so the "parallel" axis actually feeds both TensorCores.
        tm = min(tm, max(256, _round_up(-(-T // 2), sub_min)))
    T_pad = _round_up(T, tm)
    grid = (T_pad // tm,)

    xt = x.reshape(T, D)
    if T_pad != T:
        xt = jnp.pad(xt, ((0, T_pad - T), (0, 0)))

    kernel = functools.partial(
        _moe_adaptor_kernel, n_exps=E, hp=Hp, d_model=D,
        gate_a_col=fused["gate_a_col"], gate_b_col=fused["gate_b_col"],
        compute_dtype=compute_dtype, combine_dtype=combine_dtype)

    weight_bytes = (D * WA_N + Hp * WB_N) * cs + (E * Hp + E * D) * 4
    # Double-buffered x/out tiles + f32 matmul results + h copies (rough budget).
    tile_bytes = tm * (2 * 2 * D * xs + (WA_N + WB_N) * 4 + Hp * (4 + cs) + D * 4)

    flops = 2 * T_pad * (D * WA_N + Hp * WB_N) + 3 * T_pad * E * (Hp + D)
    cost = pl.CostEstimate(flops=flops, transcendentals=2 * T_pad * E,
                           bytes_accessed=2 * T_pad * D * xs + weight_bytes)

    def run(single_buffer_weights):
        def wspec(shape):
            if single_buffer_weights:
                # Constant-index operands: one resident copy, no double buffer.
                return pl.BlockSpec(shape, lambda i: (0, 0), pipeline_mode=pl.Buffered(1))
            return pl.BlockSpec(shape, lambda i: (0, 0))

        wf = 1 if single_buffer_weights else 2
        vmem_limit = int(min(vmem_cap,
                             max(32 << 20, wf * weight_bytes + 2 * tile_bytes + (16 << 20))))

        return pl.pallas_call(
            kernel,
            out_shape=jax.ShapeDtypeStruct((T_pad, D), dtype),
            grid_spec=pltpu.PrefetchScalarGridSpec(
                num_scalar_prefetch=0,
                grid=grid,
                in_specs=[
                    pl.BlockSpec((tm, D), lambda i: (i, 0)),   # x tile
                    wspec((D, WA_N)),                          # W_A concat (+gate cols)
                    wspec((E, Hp)),                            # C_A
                    wspec((Hp, WB_N)),                         # W_B concat (+gate block)
                    wspec((E, D)),                             # C_B
                ],
                out_specs=pl.BlockSpec((tm, D), lambda i: (i, 0)),
            ),
            compiler_params=pltpu.CompilerParams(
                dimension_semantics=("parallel",),
                vmem_limit_bytes=vmem_limit,
            ),
            cost_estimate=cost,
        )(xt, fused["wA"], fused["cA"], fused["wB"], fused["cB"])

    if _WEIGHT_SINGLE_BUFFER_OK:
        try:
            out = run(True)
        except Exception:
            # pipeline_mode=pl.Buffered(1) unsupported on this JAX/Mosaic build
            # (only detectable on the eager path); fall back to default
            # double-buffered weight blocks (~weight_bytes extra VMEM).
            _WEIGHT_SINGLE_BUFFER_OK = False
            out = run(False)
    else:
        out = run(False)

    return out[:T].reshape(B, S, D)


def init_moe_adaptor_params(key, d_model, b_dim, n_exps, test_random=False):
    """Parameter init mirroring the PyTorch __init__:
       expert nn.Linear weights ~ N(0, 0.02) stored transposed as (E, Din, Dout);
       PW bias and w_gate are zeros (set test_random=True to exercise those paths)."""
    kA, kB = jax.random.split(key)

    def layer(k, din, dout):
        kw, kb, kg = jax.random.split(k, 3)
        w = 0.02 * jax.random.normal(kw, (n_exps, din, dout), dtype=jnp.float32)
        if test_random:
            bias = 0.05 * jax.random.normal(kb, (n_exps, din), dtype=jnp.float32)
            w_gate = 0.1 * jax.random.normal(kg, (din, n_exps), dtype=jnp.float32)
        else:
            bias = jnp.zeros((n_exps, din), jnp.float32)
            w_gate = jnp.zeros((din, n_exps), jnp.float32)
        return {"w": w, "bias": bias, "w_gate": w_gate}

    return {"A": layer(kA, d_model, b_dim), "B": layer(kB, b_dim, d_model)}


def _reference_forward(x, params):
    """Pure-JAX f32 reference mirroring the PyTorch module (eval mode)."""
    def layer(xt, p):
        gates = jax.nn.softmax(xt @ p["w_gate"], axis=-1)                 # (T, E)
        exp_outs = jnp.stack(
            [(xt - p["bias"][e]) @ p["w"][e] for e in range(p["w"].shape[0])],
            axis=1)                                                       # (T, E, Dout)
        return jnp.sum(gates[..., None] * exp_outs, axis=1)

    B, S, D = x.shape
    xt = x.reshape(B * S, D)
    h = layer(xt, params["A"])
    y = layer(h, params["B"]) + xt
    return y.reshape(B, S, D)


if __name__ == "__main__":
    # Small shapes consistent with the module (original: D=768, b_dim=300, 4 experts).
    B, S, D, E = 2, 9, 256, 4
    key = jax.random.PRNGKey(0)
    k_x, k_p1, k_p2 = jax.random.split(key, 3)
    x = jax.random.normal(k_x, (B, S, D), dtype=jnp.float32)

    # Config 1: b_dim=120 -> gate-A folded into the 128-lane padding; S=9 exercises
    # token padding; tm=16 gives a multi-step grid (pipelining / megacore path).
    params = init_moe_adaptor_params(k_p1, D, 120, E, test_random=True)
    out = jax.block_until_ready(moe_adaptor_forward(x, params, tm=16))
    ref = _reference_forward(x, params)
    assert out.shape == (B, S, D)
    err = float(jnp.max(jnp.abs(out - ref)))
    assert jnp.allclose(out, ref, atol=5e-3, rtol=5e-3), \
        f"config1 mismatch vs JAX reference (max abs err {err})"

    # Config 2: b_dim=128 (already lane-aligned) -> appended gate lane-group path,
    # default per-generation tile size.
    params2 = init_moe_adaptor_params(k_p2, D, 128, E, test_random=True)
    out2 = jax.block_until_ready(moe_adaptor_forward(x, params2))
    ref2 = _reference_forward(x, params2)
    err2 = float(jnp.max(jnp.abs(out2 - ref2)))
    assert jnp.allclose(out2, ref2, atol=5e-3, rtol=5e-3), \
        f"config2 mismatch vs JAX reference (max abs err {err2})"

    print("KERNEL_OK")
</pallas_src>

<mosaic_0001>
module attributes {stable_mosaic.version = 11 : i64} {
  func.func @_moe_adaptor_kernel(%arg0: i32, %arg1: memref<16x256xf32, #tpu.memory_space<vmem>>, %arg2: memref<256x512xbf16, #tpu.memory_space<vmem>>, %arg3: memref<4x128xf32, #tpu.memory_space<vmem>>, %arg4: memref<128x1152xbf16, #tpu.memory_space<vmem>>, %arg5: memref<4x256xf32, #tpu.memory_space<vmem>>, %arg6: memref<16x256xf32, #tpu.memory_space<vmem>>) attributes {dimension_semantics = [#tpu.dimension_semantics<parallel>], iteration_bounds = array<i64: 2>, scalar_prefetch = 0 : i64, scratch_operands = 0 : i64, tpu.core_type = #tpu.core_type<tc>, window_params = [{transform_indices = @transform_0, window_bounds = array<i64: 16, 256>}, {pipeline_mode = #tpu.pipeline_mode<synchronous>, transform_indices = @transform_1, window_bounds = array<i64: 256, 512>}, {pipeline_mode = #tpu.pipeline_mode<synchronous>, transform_indices = @transform_2, window_bounds = array<i64: 4, 128>}, {pipeline_mode = #tpu.pipeline_mode<synchronous>, transform_indices = @transform_3, window_bounds = array<i64: 128, 1152>}, {pipeline_mode = #tpu.pipeline_mode<synchronous>, transform_indices = @transform_4, window_bounds = array<i64: 4, 256>}, {transform_indices = @transform_5, window_bounds = array<i64: 16, 256>}]} {
    %c0 = arith.constant 0 : index
    %c0_0 = arith.constant 0 : index
    %0 = vector.load %arg1[%c0, %c0_0] : memref<16x256xf32, #tpu.memory_space<vmem>>, vector<16x256xf32>
    %1 = arith.truncf %0 : vector<16x256xf32> to vector<16x256xbf16>
    %c0_1 = arith.constant 0 : index
    %c0_2 = arith.constant 0 : index
    %2 = vector.load %arg2[%c0_1, %c0_2] : memref<256x512xbf16, #tpu.memory_space<vmem>>, vector<256x512xbf16>
    %cst = arith.constant dense<0.000000e+00> : vector<16x512xf32>
    %3 = tpu.matmul %1, %2, %cst {dimension_numbers = #tpu.dot_dimension_numbers<[1], [0], [0], [1], [0, 0, 1, 1], [], []>} : vector<16x256xbf16>, vector<256x512xbf16>, vector<16x512xf32> -> vector<16x512xf32>
    %4 = vector.extract_strided_slice %3 {offsets = [0, 120], sizes = [16, 4], strides = [1, 1]} : vector<16x512xf32> to vector<16x4xf32>
    %cst_3 = arith.constant dense<0xFF800000> : vector<16xf32>
    %5 = vector.multi_reduction <maximumf>, %4, %cst_3 [1] : vector<16x4xf32> to vector<16xf32>
    %6 = vector.shape_cast %5 : vector<16xf32> to vector<16x1xf32>
    %7 = vector.broadcast %6 : vector<16x1xf32> to vector<16x4xf32>
    %8 = arith.subf %4, %7 : vector<16x4xf32>
    %9 = math.exp %8 : vector<16x4xf32>
    %cst_4 = arith.constant dense<0.000000e+00> : vector<16xf32>
    %10 = vector.multi_reduction <add>, %9, %cst_4 [1] : vector<16x4xf32> to vector<16xf32>
    %11 = vector.shape_cast %10 : vector<16xf32> to vector<16x1xf32>
    %12 = tpu.reciprocal %11 {approx = true} : vector<16x1xf32> -> vector<16x1xf32>
    %13 = vector.broadcast %12 : vector<16x1xf32> to vector<16x4xf32>
    %14 = arith.mulf %9, %13 : vector<16x4xf32>
    %c0_5 = arith.constant 0 : index
    %c0_6 = arith.constant 0 : index
    %15 = vector.load %arg3[%c0_5, %c0_6] : memref<4x128xf32, #tpu.memory_space<vmem>>, vector<4x128xf32>
    %16 = vector.extract_strided_slice %14 {offsets = [0, 0], sizes = [16, 1], strides = [1, 1]} : vector<16x4xf32> to vector<16x1xf32>
    %17 = vector.extract_strided_slice %3 {offsets = [0, 0], sizes = [16, 128], strides = [1, 1]} : vector<16x512xf32> to vector<16x128xf32>
    %18 = vector.extract_strided_slice %15 {offsets = [0, 0], sizes = [1, 128], strides = [1, 1]} : vector<4x128xf32> to vector<1x128xf32>
    %19 = vector.broadcast %18 : vector<1x128xf32> to vector<16x128xf32>
    %20 = arith.subf %17, %19 : vector<16x128xf32>
    %21 = vector.broadcast %16 : vector<16x1xf32> to vector<16x128xf32>
    %22 = arith.mulf %21, %20 : vector<16x128xf32>
    %23 = vector.extract_strided_slice %14 {offsets = [0, 1], sizes = [16, 1], strides = [1, 1]} : vector<16x4xf32> to vector<16x1xf32>
    %24 = vector.extract_strided_slice %3 {offsets = [0, 128], sizes = [16, 128], strides = [1, 1]} : vector<16x512xf32> to vector<16x128xf32>
    %25 = vector.extract_strided_slice %15 {offsets = [1, 0], sizes = [1, 128], strides = [1, 1]} : vector<4x128xf32> to vector<1x128xf32>
    %26 = vector.broadcast %25 : vector<1x128xf32> to vector<16x128xf32>
    %27 = arith.subf %24, %26 : vector<16x128xf32>
    %28 = vector.broadcast %23 : vector<16x1xf32> to vector<16x128xf32>
    %29 = arith.mulf %28, %27 : vector<16x128xf32>
    %30 = arith.addf %22, %29 : vector<16x128xf32>
    %31 = vector.extract_strided_slice %14 {offsets = [0, 2], sizes = [16, 1], strides = [1, 1]} : vector<16x4xf32> to vector<16x1xf32>
    %32 = vector.extract_strided_slice %3 {offsets = [0, 256], sizes = [16, 128], strides = [1, 1]} : vector<16x512xf32> to vector<16x128xf32>
    %33 = vector.extract_strided_slice %15 {offsets = [2, 0], sizes = [1, 128], strides = [1, 1]} : vector<4x128xf32> to vector<1x128xf32>
    %34 = vector.broadcast %33 : vector<1x128xf32> to vector<16x128xf32>
    %35 = arith.subf %32, %34 : vector<16x128xf32>
    %36 = vector.broadcast %31 : vector<16x1xf32> to vector<16x128xf32>
    %37 = arith.mulf %36, %35 : vector<16x128xf32>
    %38 = arith.addf %30, %37 : vector<16x128xf32>
    %39 = vector.extract_strided_slice %14 {offsets = [0, 3], sizes = [16, 1], strides = [1, 1]} : vector<16x4xf32> to vector<16x1xf32>
    %40 = vector.extract_strided_slice %3 {offsets = [0, 384], sizes = [16, 128], strides = [1, 1]} : vector<16x512xf32> to vector<16x128xf32>
    %41 = vector.extract_strided_slice %15 {offsets = [3, 0], sizes = [1, 128], strides = [1, 1]} : vector<4x128xf32> to vector<1x128xf32>
    %42 = vector.broadcast %41 : vector<1x128xf32> to vector<16x128xf32>
    %43 = arith.subf %40, %42 : vector<16x128xf32>
    %44 = vector.broadcast %39 : vector<16x1xf32> to vector<16x128xf32>
    %45 = arith.mulf %44, %43 : vector<16x128xf32>
    %46 = arith.addf %38, %45 : vector<16x128xf32>
    %47 = arith.truncf %46 : vector<16x128xf32> to vector<16x128xbf16>
    %c0_7 = arith.constant 0 : index
    %c0_8 = arith.constant 0 : index
    %48 = vector.load %arg4[%c0_7, %c0_8] : memref<128x1152xbf16, #tpu.memory_space<vmem>>, vector<128x1152xbf16>
    %cst_9 = arith.constant dense<0.000000e+00> : vector<16x1152xf32>
    %49 = tpu.matmul %47, %48, %cst_9 {dimension_numbers = #tpu.dot_dimension_numbers<[1], [0], [0], [1], [0, 0, 1, 1], [], []>} : vector<16x128xbf16>, vector<128x1152xbf16>, vector<16x1152xf32> -> vector<16x1152xf32>
    %50 = vector.extract_strided_slice %49 {offsets = [0, 1024], sizes = [16, 4], strides = [1, 1]} : vector<16x1152xf32> to vector<16x4xf32>
    %cst_10 = arith.constant dense<0xFF800000> : vector<16xf32>
    %51 = vector.multi_reduction <maximumf>, %50, %cst_10 [1] : vector<16x4xf32> to vector<16xf32>
    %52 = vector.shape_cast %51 : vector<16xf32> to vector<16x1xf32>
    %53 = vector.broadcast %52 : vector<16x1xf32> to vector<16x4xf32>
    %54 = arith.subf %50, %53 : vector<16x4xf32>
    %55 = math.exp %54 : vector<16x4xf32>
    %cst_11 = arith.constant dense<0.000000e+00> : vector<16xf32>
    %56 = vector.multi_reduction <add>, %55, %cst_11 [1] : vector<16x4xf32> to vector<16xf32>
    %57 = vector.shape_cast %56 : vector<16xf32> to vector<16x1xf32>
    %58 = tpu.reciprocal %57 {approx = true} : vector<16x1xf32> -> vector<16x1xf32>
    %59 = vector.broadcast %58 : vector<16x1xf32> to vector<16x4xf32>
    %60 = arith.mulf %55, %59 : vector<16x4xf32>
    %c0_12 = arith.constant 0 : index
    %c0_13 = arith.constant 0 : index
    %61 = vector.load %arg5[%c0_12, %c0_13] : memref<4x256xf32, #tpu.memory_space<vmem>>, vector<4x256xf32>
    %62 = vector.extract_strided_slice %60 {offsets = [0, 0], sizes = [16, 1], strides = [1, 1]} : vector<16x4xf32> to vector<16x1xf32>
    %63 = vector.extract_strided_slice %49 {offsets = [0, 0], sizes = [16, 256], strides = [1, 1]} : vector<16x1152xf32> to vector<16x256xf32>
    %64 = vector.extract_strided_slice %61 {offsets = [0, 0], sizes = [1, 256], strides = [1, 1]} : vector<4x256xf32> to vector<1x256xf32>
    %65 = vector.broadcast %64 : vector<1x256xf32> to vector<16x256xf32>
    %66 = arith.subf %63, %65 : vector<16x256xf32>
    %67 = vector.broadcast %62 : vector<16x1xf32> to vector<16x256xf32>
    %68 = arith.mulf %67, %66 : vector<16x256xf32>
    %69 = vector.extract_strided_slice %60 {offsets = [0, 1], sizes = [16, 1], strides = [1, 1]} : vector<16x4xf32> to vector<16x1xf32>
    %70 = vector.extract_strided_slice %49 {offsets = [0, 256], sizes = [16, 256], strides = [1, 1]} : vector<16x1152xf32> to vector<16x256xf32>
    %71 = vector.extract_strided_slice %61 {offsets = [1, 0], sizes = [1, 256], strides = [1, 1]} : vector<4x256xf32> to vector<1x256xf32>
    %72 = vector.broadcast %71 : vector<1x256xf32> to vector<16x256xf32>
    %73 = arith.subf %70, %72 : vector<16x256xf32>
    %74 = vector.broadcast %69 : vector<16x1xf32> to vector<16x256xf32>
    %75 = arith.mulf %74, %73 : vector<16x256xf32>
    %76 = arith.addf %68, %75 : vector<16x256xf32>
    %77 = vector.extract_strided_slice %60 {offsets = [0, 2], sizes = [16, 1], strides = [1, 1]} : vector<16x4xf32> to vector<16x1xf32>
    %78 = vector.extract_strided_slice %49 {offsets = [0, 512], sizes = [16, 256], strides = [1, 1]} : vector<16x1152xf32> to vector<16x256xf32>
    %79 = vector.extract_strided_slice %61 {offsets = [2, 0], sizes = [1, 256], strides = [1, 1]} : vector<4x256xf32> to vector<1x256xf32>
    %80 = vector.broadcast %79 : vector<1x256xf32> to vector<16x256xf32>
    %81 = arith.subf %78, %80 : vector<16x256xf32>
    %82 = vector.broadcast %77 : vector<16x1xf32> to vector<16x256xf32>
    %83 = arith.mulf %82, %81 : vector<16x256xf32>
    %84 = arith.addf %76, %83 : vector<16x256xf32>
    %85 = vector.extract_strided_slice %60 {offsets = [0, 3], sizes = [16, 1], strides = [1, 1]} : vector<16x4xf32> to vector<16x1xf32>
    %86 = vector.extract_strided_slice %49 {offsets = [0, 768], sizes = [16, 256], strides = [1, 1]} : vector<16x1152xf32> to vector<16x256xf32>
    %87 = vector.extract_strided_slice %61 {offsets = [3, 0], sizes = [1, 256], strides = [1, 1]} : vector<4x256xf32> to vector<1x256xf32>
    %88 = vector.broadcast %87 : vector<1x256xf32> to vector<16x256xf32>
    %89 = arith.subf %86, %88 : vector<16x256xf32>
    %90 = vector.broadcast %85 : vector<16x1xf32> to vector<16x256xf32>
    %91 = arith.mulf %90, %89 : vector<16x256xf32>
    %92 = arith.addf %84, %91 : vector<16x256xf32>
    %93 = arith.addf %92, %0 : vector<16x256xf32>
    %c0_14 = arith.constant 0 : index
    %c0_15 = arith.constant 0 : index
    %94 = vector.load %arg6[%c0_14, %c0_15] : memref<16x256xf32, #tpu.memory_space<vmem>>, vector<16x256xf32>
    tpu.vector_store %arg6[%c0_14, %c0_15], %93 {strides = array<i32>} : memref<16x256xf32, #tpu.memory_space<vmem>>, vector<16x256xf32>,
    return
  }
  func.func @transform_0(%arg0: i32) -> (i32, i32) {
    %c0_i32 = arith.constant 0 : i32
    %c0_i32_0 = arith.constant 0 : i32
    return %arg0, %c0_i32 : i32, i32
  }
  func.func @transform_1(%arg0: i32) -> (i32, i32) {
    %c0_i32 = arith.constant 0 : i32
    %c0_i32_0 = arith.constant 0 : i32
    %c0_i32_1 = arith.constant 0 : i32
    return %c0_i32, %c0_i32_0 : i32, i32
  }
  func.func @transform_2(%arg0: i32) -> (i32, i32) {
    %c0_i32 = arith.constant 0 : i32
    %c0_i32_0 = arith.constant 0 : i32
    %c0_i32_1 = arith.constant 0 : i32
    return %c0_i32, %c0_i32_0 : i32, i32
  }
  func.func @transform_3(%arg0: i32) -> (i32, i32) {
    %c0_i32 = arith.constant 0 : i32
    %c0_i32_0 = arith.constant 0 : i32
    %c0_i32_1 = arith.constant 0 : i32
    return %c0_i32, %c0_i32_0 : i32, i32
  }
  func.func @transform_4(%arg0: i32) -> (i32, i32) {
    %c0_i32 = arith.constant 0 : i32
    %c0_i32_0 = arith.constant 0 : i32
    %c0_i32_1 = arith.constant 0 : i32
    return %c0_i32, %c0_i32_0 : i32, i32
  }
  func.func @transform_5(%arg0: i32) -> (i32, i32) {
    %c0_i32 = arith.constant 0 : i32
    %c0_i32_0 = arith.constant 0 : i32
    return %arg0, %c0_i32 : i32, i32
  }
}

module attributes {stable_mosaic.version = 11 : i64} {
  func.func @_moe_adaptor_kernel(%arg0: i32, %arg1: memref<16x256xf32, #tpu.memory_space<vmem>>, %arg2: memref<256x512xbf16, #tpu.memory_space<vmem>>, %arg3: memref<4x128xf32, #tpu.memory_space<vmem>>, %arg4: memref<128x1152xbf16, #tpu.memory_space<vmem>>, %arg5: memref<4x256xf32, #tpu.memory_space<vmem>>, %arg6: memref<16x256xf32, #tpu.memory_space<vmem>>) attributes {dimension_semantics = [#tpu.dimension_semantics<parallel>], iteration_bounds = array<i64: 2>, scalar_prefetch = 0 : i64, scratch_operands = 0 : i64, tpu.core_type = #tpu.core_type<tc>, window_params = [{transform_indices = @transform_0, window_bounds = array<i64: 16, 256>}, {pipeline_mode = #tpu.pipeline_mode<synchronous>, transform_indices = @transform_1, window_bounds = array<i64: 256, 512>}, {pipeline_mode = #tpu.pipeline_mode<synchronous>, transform_indices = @transform_2, window_bounds = array<i64: 4, 128>}, {pipeline_mode = #tpu.pipeline_mode<synchronous>, transform_indices = @transform_3, window_bounds = array<i64: 128, 1152>}, {pipeline_mode = #tpu.pipeline_mode<synchronous>, transform_indices = @transform_4, window_bounds = array<i64: 4, 256>}, {transform_indices = @transform_5, window_bounds = array<i64: 16, 256>}]} {
    %c0 = arith.constant 0 : index
    %c0_0 = arith.constant 0 : index
    %0 = vector.load %arg1[%c0, %c0_0] : memref<16x256xf32, #tpu.memory_space<vmem>>, vector<16x256xf32>
    %1 = arith.truncf %0 : vector<16x256xf32> to vector<16x256xbf16>
    %c0_1 = arith.constant 0 : index
    %c0_2 = arith.constant 0 : index
    %2 = vector.load %arg2[%c0_1, %c0_2] : memref<256x512xbf16, #tpu.memory_space<vmem>>, vector<256x512xbf16>
    %cst = arith.constant dense<0.000000e+00> : vector<16x512xf32>
    %3 = tpu.matmul %1, %2, %cst {dimension_numbers = #tpu.dot_dimension_numbers<[1], [0], [0], [1], [0, 0, 1, 1], [], []>} : vector<16x256xbf16>, vector<256x512xbf16>, vector<16x512xf32> -> vector<16x512xf32>
    %4 = vector.extract_strided_slice %3 {offsets = [0, 120], sizes = [16, 4], strides = [1, 1]} : vector<16x512xf32> to vector<16x4xf32>
    %cst_3 = arith.constant dense<0xFF800000> : vector<16xf32>
    %5 = vector.multi_reduction <maximumf>, %4, %cst_3 [1] : vector<16x4xf32> to vector<16xf32>
    %6 = vector.shape_cast %5 : vector<16xf32> to vector<16x1xf32>
    %7 = vector.broadcast %6 : vector<16x1xf32> to vector<16x4xf32>
    %8 = arith.subf %4, %7 : vector<16x4xf32>
    %9 = math.exp %8 : vector<16x4xf32>
    %cst_4 = arith.constant dense<0.000000e+00> : vector<16xf32>
    %10 = vector.multi_reduction <add>, %9, %cst_4 [1] : vector<16x4xf32> to vector<16xf32>
    %11 = vector.shape_cast %10 : vector<16xf32> to vector<16x1xf32>
    %12 = tpu.reciprocal %11 {approx = true} : vector<16x1xf32> -> vector<16x1xf32>
    %13 = vector.broadcast %12 : vector<16x1xf32> to vector<16x4xf32>
    %14 = arith.mulf %9, %13 : vector<16x4xf32>
    %c0_5 = arith.constant 0 : index
    %c0_6 = arith.constant 0 : index
    %15 = vector.load %arg3[%c0_5, %c0_6] : memref<4x128xf32, #tpu.memory_space<vmem>>, vector<4x128xf32>
    %16 = vector.extract_strided_slice %14 {offsets = [0, 0], sizes = [16, 1], strides = [1, 1]} : vector<16x4xf32> to vector<16x1xf32>
    %17 = vector.extract_strided_slice %3 {offsets = [0, 0], sizes = [16, 128], strides = [1, 1]} : vector<16x512xf32> to vector<16x128xf32>
    %18 = vector.extract_strided_slice %15 {offsets = [0, 0], sizes = [1, 128], strides = [1, 1]} : vector<4x128xf32> to vector<1x128xf32>
    %19 = vector.broadcast %18 : vector<1x128xf32> to vector<16x128xf32>
    %20 = arith.subf %17, %19 : vector<16x128xf32>
    %21 = vector.broadcast %16 : vector<16x1xf32> to vector<16x128xf32>
    %22 = arith.mulf %21, %20 : vector<16x128xf32>
    %23 = vector.extract_strided_slice %14 {offsets = [0, 1], sizes = [16, 1], strides = [1, 1]} : vector<16x4xf32> to vector<16x1xf32>
    %24 = vector.extract_strided_slice %3 {offsets = [0, 128], sizes = [16, 128], strides = [1, 1]} : vector<16x512xf32> to vector<16x128xf32>
    %25 = vector.extract_strided_slice %15 {offsets = [1, 0], sizes = [1, 128], strides = [1, 1]} : vector<4x128xf32> to vector<1x128xf32>
    %26 = vector.broadcast %25 : vector<1x128xf32> to vector<16x128xf32>
    %27 = arith.subf %24, %26 : vector<16x128xf32>
    %28 = vector.broadcast %23 : vector<16x1xf32> to vector<16x128xf32>
    %29 = arith.mulf %28, %27 : vector<16x128xf32>
    %30 = arith.addf %22, %29 : vector<16x128xf32>
    %31 = vector.extract_strided_slice %14 {offsets = [0, 2], sizes = [16, 1], strides = [1, 1]} : vector<16x4xf32> to vector<16x1xf32>
    %32 = vector.extract_strided_slice %3 {offsets = [0, 256], sizes = [16, 128], strides = [1, 1]} : vector<16x512xf32> to vector<16x128xf32>
    %33 = vector.extract_strided_slice %15 {offsets = [2, 0], sizes = [1, 128], strides = [1, 1]} : vector<4x128xf32> to vector<1x128xf32>
    %34 = vector.broadcast %33 : vector<1x128xf32> to vector<16x128xf32>
    %35 = arith.subf %32, %34 : vector<16x128xf32>
    %36 = vector.broadcast %31 : vector<16x1xf32> to vector<16x128xf32>
    %37 = arith.mulf %36, %35 : vector<16x128xf32>
    %38 = arith.addf %30, %37 : vector<16x128xf32>
    %39 = vector.extract_strided_slice %14 {offsets = [0, 3], sizes = [16, 1], strides = [1, 1]} : vector<16x4xf32> to vector<16x1xf32>
    %40 = vector.extract_strided_slice %3 {offsets = [0, 384], sizes = [16, 128], strides = [1, 1]} : vector<16x512xf32> to vector<16x128xf32>
    %41 = vector.extract_strided_slice %15 {offsets = [3, 0], sizes = [1, 128], strides = [1, 1]} : vector<4x128xf32> to vector<1x128xf32>
    %42 = vector.broadcast %41 : vector<1x128xf32> to vector<16x128xf32>
    %43 = arith.subf %40, %42 : vector<16x128xf32>
    %44 = vector.broadcast %39 : vector<16x1xf32> to vector<16x128xf32>
    %45 = arith.mulf %44, %43 : vector<16x128xf32>
    %46 = arith.addf %38, %45 : vector<16x128xf32>
    %47 = arith.truncf %46 : vector<16x128xf32> to vector<16x128xbf16>
    %c0_7 = arith.constant 0 : index
    %c0_8 = arith.constant 0 : index
    %48 = vector.load %arg4[%c0_7, %c0_8] : memref<128x1152xbf16, #tpu.memory_space<vmem>>, vector<128x1152xbf16>
    %cst_9 = arith.constant dense<0.000000e+00> : vector<16x1152xf32>
    %49 = tpu.matmul %47, %48, %cst_9 {dimension_numbers = #tpu.dot_dimension_numbers<[1], [0], [0], [1], [0, 0, 1, 1], [], []>} : vector<16x128xbf16>, vector<128x1152xbf16>, vector<16x1152xf32> -> vector<16x1152xf32>
    %50 = vector.extract_strided_slice %49 {offsets = [0, 1024], sizes = [16, 4], strides = [1, 1]} : vector<16x1152xf32> to vector<16x4xf32>
    %cst_10 = arith.constant dense<0xFF800000> : vector<16xf32>
    %51 = vector.multi_reduction <maximumf>, %50, %cst_10 [1] : vector<16x4xf32> to vector<16xf32>
    %52 = vector.shape_cast %51 : vector<16xf32> to vector<16x1xf32>
    %53 = vector.broadcast %52 : vector<16x1xf32> to vector<16x4xf32>
    %54 = arith.subf %50, %53 : vector<16x4xf32>
    %55 = math.exp %54 : vector<16x4xf32>
    %cst_11 = arith.constant dense<0.000000e+00> : vector<16xf32>
    %56 = vector.multi_reduction <add>, %55, %cst_11 [1] : vector<16x4xf32> to vector<16xf32>
    %57 = vector.shape_cast %56 : vector<16xf32> to vector<16x1xf32>
    %58 = tpu.reciprocal %57 {approx = true} : vector<16x1xf32> -> vector<16x1xf32>
    %59 = vector.broadcast %58 : vector<16x1xf32> to vector<16x4xf32>
    %60 = arith.mulf %55, %59 : vector<16x4xf32>
    %c0_12 = arith.constant 0 : index
    %c0_13 = arith.constant 0 : index
    %61 = vector.load %arg5[%c0_12, %c0_13] : memref<4x256xf32, #tpu.memory_space<vmem>>, vector<4x256xf32>
    %62 = vector.extract_strided_slice %60 {offsets = [0, 0], sizes = [16, 1], strides = [1, 1]} : vector<16x4xf32> to vector<16x1xf32>
    %63 = vector.extract_strided_slice %49 {offsets = [0, 0], sizes = [16, 256], strides = [1, 1]} : vector<16x1152xf32> to vector<16x256xf32>
    %64 = vector.extract_strided_slice %61 {offsets = [0, 0], sizes = [1, 256], strides = [1, 1]} : vector<4x256xf32> to vector<1x256xf32>
    %65 = vector.broadcast %64 : vector<1x256xf32> to vector<16x256xf32>
    %66 = arith.subf %63, %65 : vector<16x256xf32>
    %67 = vector.broadcast %62 : vector<16x1xf32> to vector<16x256xf32>
    %68 = arith.mulf %67, %66 : vector<16x256xf32>
    %69 = vector.extract_strided_slice %60 {offsets = [0, 1], sizes = [16, 1], strides = [1, 1]} : vector<16x4xf32> to vector<16x1xf32>
    %70 = vector.extract_strided_slice %49 {offsets = [0, 256], sizes = [16, 256], strides = [1, 1]} : vector<16x1152xf32> to vector<16x256xf32>
    %71 = vector.extract_strided_slice %61 {offsets = [1, 0], sizes = [1, 256], strides = [1, 1]} : vector<4x256xf32> to vector<1x256xf32>
    %72 = vector.broadcast %71 : vector<1x256xf32> to vector<16x256xf32>
    %73 = arith.subf %70, %72 : vector<16x256xf32>
    %74 = vector.broadcast %69 : vector<16x1xf32> to vector<16x256xf32>
    %75 = arith.mulf %74, %73 : vector<16x256xf32>
    %76 = arith.addf %68, %75 : vector<16x256xf32>
    %77 = vector.extract_strided_slice %60 {offsets = [0, 2], sizes = [16, 1], strides = [1, 1]} : vector<16x4xf32> to vector<16x1xf32>
    %78 = vector.extract_strided_slice %49 {offsets = [0, 512], sizes = [16, 256], strides = [1, 1]} : vector<16x1152xf32> to vector<16x256xf32>
    %79 = vector.extract_strided_slice %61 {offsets = [2, 0], sizes = [1, 256], strides = [1, 1]} : vector<4x256xf32> to vector<1x256xf32>
    %80 = vector.broadcast %79 : vector<1x256xf32> to vector<16x256xf32>
    %81 = arith.subf %78, %80 : vector<16x256xf32>
    %82 = vector.broadcast %77 : vector<16x1xf32> to vector<16x256xf32>
    %83 = arith.mulf %82, %81 : vector<16x256xf32>
    %84 = arith.addf %76, %83 : vector<16x256xf32>
    %85 = vector.extract_strided_slice %60 {offsets = [0, 3], sizes = [16, 1], strides = [1, 1]} : vector<16x4xf32> to vector<16x1xf32>
    %86 = vector.extract_strided_slice %49 {offsets = [0, 768], sizes = [16, 256], strides = [1, 1]} : vector<16x1152xf32> to vector<16x256xf32>
    %87 = vector.extract_strided_slice %61 {offsets = [3, 0], sizes = [1, 256], strides = [1, 1]} : vector<4x256xf32> to vector<1x256xf32>
    %88 = vector.broadcast %87 : vector<1x256xf32> to vector<16x256xf32>
    %89 = arith.subf %86, %88 : vector<16x256xf32>
    %90 = vector.broadcast %85 : vector<16x1xf32> to vector<16x256xf32>
    %91 = arith.mulf %90, %89 : vector<16x256xf32>
    %92 = arith.addf %84, %91 : vector<16x256xf32>
    %93 = arith.addf %92, %0 : vector<16x256xf32>
    %c0_14 = arith.constant 0 : index
    %c0_15 = arith.constant 0 : index
    %94 = vector.load %arg6[%c0_14, %c0_15] : memref<16x256xf32, #tpu.memory_space<vmem>>, vector<16x256xf32>
    tpu.vector_store %arg6[%c0_14, %c0_15], %93 {strides = array<i32>} : memref<16x256xf32, #tpu.memory_space<vmem>>, vector<16x256xf32>,
    return
  }
  func.func @transform_0(%arg0: i32) -> (i32, i32) {
    %c0_i32 = arith.constant 0 : i32
    %c0_i32_0 = arith.constant 0 : i32
    return %arg0, %c0_i32 : i32, i32
  }
  func.func @transform_1(%arg0: i32) -> (i32, i32) {
    %c0_i32 = arith.constant 0 : i32
    %c0_i32_0 = arith.constant 0 : i32
    %c0_i32_1 = arith.constant 0 : i32
    return %c0_i32, %c0_i32_0 : i32, i32
  }
  func.func @transform_2(%arg0: i32) -> (i32, i32) {
    %c0_i32 = arith.constant 0 : i32
    %c0_i32_0 = arith.constant 0 : i32
    %c0_i32_1 = arith.constant 0 : i32
    return %c0_i32, %c0_i32_0 : i32, i32
  }
  func.func @transform_3(%arg0: i32) -> (i32, i32) {
    %c0_i32 = arith.constant 0 : i32
    %c0_i32_0 = arith.constant 0 : i32
    %c0_i32_1 = arith.constant 0 : i32
    return %c0_i32, %c0_i32_0 : i32, i32
  }
  func.func @transform_4(%arg0: i32) -> (i32, i32) {
    %c0_i32 = arith.constant 0 : i32
    %c0_i32_0 = arith.constant 0 : i32
    %c0_i32_1 = arith.constant 0 : i32
    return %c0_i32, %c0_i32_0 : i32, i32
  }
  func.func @transform_5(%arg0: i32) -> (i32, i32) {
    %c0_i32 = arith.constant 0 : i32
    %c0_i32_0 = arith.constant 0 : i32
    return %arg0, %c0_i32 : i32, i32
  }
}

</mosaic_0001>

<llo_original>
// kernel: tpu_custom_call.1
$region0: #{tpu_custom_call.1}
  #allocation0 [shape = 'u32[]', space=smem, size = 0x4, offset = 0x4, fixed_abs, tag = 'smem constant byte address 0x4 - core index']
  #allocation1 [shape = 'u32[144,128]{1,0:T(1,128)}', space=vmem, size = 0x12000, scoped, tag = 'internal scratch']
  %s0 = inlined_call_operand.hbm [shape: f32[32,256], index: 0, kind: input, shape index: {}]
  %s1 = inlined_call_operand.hbm [shape: bf16[256,512], index: 1, kind: input, shape index: {}]
  %s2 = inlined_call_operand.vmem [shape: f32[4,128], index: 2, kind: input, shape index: {}]
  %s3 = inlined_call_operand.hbm [shape: bf16[128,1152], index: 3, kind: input, shape index: {}]
  %s4 = inlined_call_operand.vmem [shape: f32[4,256], index: 4, kind: input, shape index: {}]
  %s5 = inlined_call_operand.hbm [shape: f32[32,256], index: 5, kind: output, shape index: {}]
  %s6 = sld [smem:[#allocation0]]
  $region65: #{tpu_custom_call.1} parent=0
    _
  %s8 = ssub.s32 1, %s6
  %s9 = scalar_select 0, %s8, %s6
  $region1: #{tpu_custom_call.1} parent=0
    #allocation2 [shape = 'u8[32768]{0}', space=vmem, size = 0x8000, scoped, tag = 'input window, operand 0']
    #allocation3 [shape = 's32[2]{0}', space=sflag, size = 0x8, scoped, tag = 'scoped memory for tpu_custom_call.1']
    #allocation4 [shape = 's32[2]{0}', space=sflag, size = 0x8, scoped, tag = 'scoped memory for tpu_custom_call.1']
    #allocation5 [shape = 'u8[262144]{0}', space=vmem, size = 0x40000, scoped, tag = 'input window, operand 1, single buffered']
    #allocation6 [shape = 's32[1]{0}', space=sflag, size = 0x4, scoped, tag = 'scoped memory for tpu_custom_call.1']
    #allocation7 [shape = 'u8[294912]{0}', space=vmem, size = 0x48000, scoped, tag = 'input window, operand 3, single buffered']
    #allocation8 [shape = 'u8[32768]{0}', space=vmem, size = 0x8000, scoped, tag = 'output window, operand 0']
    %10 = vsyncpa [#allocation3], 0
    %s11 = scalar_lea.sflag [#allocation3], 1
    %12 = vsyncpa %s11, 0
    %13 = vsyncpa [#allocation6], 0
    %14 = vsyncpa [#allocation4], 0
    %s15 = scalar_lea.sflag [#allocation4], 1
    %16 = vsyncpa %s15, 0
    loop: start=0, step=1, limit=4
    $region2: #{tpu_custom_call.1} parent=1 // loop_pre_header
      _
    $region3: #{tpu_custom_call.1} parent=1 // loop_header
      %s18 = sphi 0, %s22
      %p19 = scmp.ge.s32.totalorder %s18, 4
      %s28 = sphi 0, %s30
      %s31 = sphi 0, %s28
      %s32 = sphi 0, %s31
      %s48 = sphi 0, %s32
      %s52 = sphi 0, %s52
      %s54 = sphi 0, %s52
      %s55 = sphi 0, %s54
      %s69 = sphi 0, %s55
      %s73 = sphi 0, %s73
      %s75 = sphi 0, %s73
      %s76 = sphi 0, %s75
      %s90 = sphi 0, %s76
      %s94 = sphi 0, %s94
      %s96 = sphi 0, %s94
      %s97 = sphi 0, %s96
      %s111 = sphi 0, %s97
      %s115 = sphi 0, %s115
      %s117 = sphi 0, %s115
      %s118 = sphi 0, %s117
      %s132 = sphi 0, %s118
      %s138 = sphi 0, %s140
      %s141 = sphi 0, %s138
      %s142 = sphi 0, %s141
      %s158 = sphi 0, %s142
    $region4: #{tpu_custom_call.1} parent=1 // loop_header_branch
      %21 = sbr.rel (%p19) target = $region8
    $region5: #{tpu_custom_call.1} parent=1 // loop_body
      %s23 = ssub.s32 %s18, 1
      %s24 = ssub.s32 %s18, 2
      %s25 = sadd.s32 %s18, 1
      %s26 = ssub.s32 %s18, %s25
      %p27 = scmp.eq.s32.totalorder %s26, 0
      %s29 = sadd.s32 %s28, 1
      %s30 = scalar_select %p27, %s28, %s29
      %p33 = pneg %p27
      %p34 = scmp.eq.s32.totalorder %s18, 1
      %p35 = por %p33, %p34
      %p36 = scmp.ne.s32.totalorder %s28, %s31
      %p37 = scmp.eq.s32.totalorder %s18, 0
      %p38 = por %p36, %p37
      %p39 = scmp.ne.s32.totalorder %s28, %s31
      %p40 = scmp.eq.s32.totalorder %s23, 1
      %p41 = por %p39, %p40
      %p42 = scmp.ne.s32.totalorder %s31, %s32
      %p43 = scmp.eq.s32.totalorder %s23, 0
      %p44 = por %p42, %p43
      %p45 = scmp.ne.s32.totalorder %s31, %s32
      %p46 = scmp.eq.s32.totalorder %s24, 1
      %p47 = por %p45, %p46
      %p49 = scmp.ne.s32.totalorder %s32, %s48
      %p50 = scmp.eq.s32.totalorder %s24, 0
      %p51 = por %p49, %p50
      %s53 = sadd.s32 %s52, 1
      %p56 = scmp.eq.s32.totalorder %s18, 1
      %p57 = scmp.ne.s32.totalorder %s52, %s54
      %p58 = scmp.eq.s32.totalorder %s18, 0
      %p59 = por %p57, %p58
      %p60 = scmp.ne.s32.totalorder %s52, %s54
      %p61 = scmp.eq.s32.totalorder %s23, 1
      %p62 = por %p60, %p61
      %p63 = scmp.ne.s32.totalorder %s54, %s55
      %p64 = scmp.eq.s32.totalorder %s23, 0
      %p65 = por %p63, %p64
      %p66 = scmp.ne.s32.totalorder %s54, %s55
      %p67 = scmp.eq.s32.totalorder %s24, 1
      %p68 = por %p66, %p67
      %p70 = scmp.ne.s32.totalorder %s55, %s69
      %p71 = scmp.eq.s32.totalorder %s24, 0
      %p72 = por %p70, %p71
      %s74 = sadd.s32 %s73, 1
      %p77 = scmp.eq.s32.totalorder %s18, 1
      %p78 = scmp.ne.s32.totalorder %s73, %s75
      %p79 = scmp.eq.s32.totalorder %s18, 0
      %p80 = por %p78, %p79
      %p81 = scmp.ne.s32.totalorder %s73, %s75
      %p82 = scmp.eq.s32.totalorder %s23, 1
      %p83 = por %p81, %p82
      %p84 = scmp.ne.s32.totalorder %s75, %s76
      %p85 = scmp.eq.s32.totalorder %s23, 0
      %p86 = por %p84, %p85
      %p87 = scmp.ne.s32.totalorder %s75, %s76
      %p88 = scmp.eq.s32.totalorder %s24, 1
      %p89 = por %p87, %p88
      %p91 = scmp.ne.s32.totalorder %s76, %s90
      %p92 = scmp.eq.s32.totalorder %s24, 0
      %p93 = por %p91, %p92
      %s95 = sadd.s32 %s94, 1
      %p98 = scmp.eq.s32.totalorder %s18, 1
      %p99 = scmp.ne.s32.totalorder %s94, %s96
      %p100 = scmp.eq.s32.totalorder %s18, 0
      %p101 = por %p99, %p100
      %p102 = scmp.ne.s32.totalorder %s94, %s96
      %p103 = scmp.eq.s32.totalorder %s23, 1
      %p104 = por %p102, %p103
      %p105 = scmp.ne.s32.totalorder %s96, %s97
      %p106 = scmp.eq.s32.totalorder %s23, 0
      %p107 = por %p105, %p106
      %p108 = scmp.ne.s32.totalorder %s96, %s97
      %p109 = scmp.eq.s32.totalorder %s24, 1
      %p110 = por %p108, %p109
      %p112 = scmp.ne.s32.totalorder %s97, %s111
      %p113 = scmp.eq.s32.totalorder %s24, 0
      %p114 = por %p112, %p113
      %s116 = sadd.s32 %s115, 1
      %p119 = scmp.eq.s32.totalorder %s18, 1
      %p120 = scmp.ne.s32.totalorder %s115, %s117
      %p121 = scmp.eq.s32.totalorder %s18, 0
      %p122 = por %p120, %p121
      %p123 = scmp.ne.s32.totalorder %s115, %s117
      %p124 = scmp.eq.s32.totalorder %s23, 1
      %p125 = por %p123, %p124
      %p126 = scmp.ne.s32.totalorder %s117, %s118
      %p127 = scmp.eq.s32.totalorder %s23, 0
      %p128 = por %p126, %p127
      %p129 = scmp.ne.s32.totalorder %s117, %s118
      %p130 = scmp.eq.s32.totalorder %s24, 1
      %p131 = por %p129, %p130
      %p133 = scmp.ne.s32.totalorder %s118, %s132
      %p134 = scmp.eq.s32.totalorder %s24, 0
      %p135 = por %p133, %p134
      %s136 = ssub.s32 %s18, %s25
      %p137 = scmp.eq.s32.totalorder %s136, 0
      %s139 = sadd.s32 %s138, 1
      %s140 = scalar_select %p137, %s138, %s139
      %p143 = pneg %p137
      %p144 = scmp.eq.s32.totalorder %s18, 1
      %p145 = por %p143, %p144
      %p146 = scmp.ne.s32.totalorder %s138, %s141
      %p147 = scmp.eq.s32.totalorder %s18, 0
      %p148 = por %p146, %p147
      %p149 = scmp.ne.s32.totalorder %s138, %s141
      %p150 = scmp.eq.s32.totalorder %s23, 1
      %p151 = por %p149, %p150
      %p152 = scmp.ne.s32.totalorder %s141, %s142
      %p153 = scmp.eq.s32.totalorder %s23, 0
      %p154 = por %p152, %p153
      %p155 = scmp.ne.s32.totalorder %s141, %s142
      %p156 = scmp.eq.s32.totalorder %s24, 1
      %p157 = por %p155, %p156
      %p159 = scmp.ne.s32.totalorder %s142, %s158
      %p160 = scmp.eq.s32.totalorder %s24, 0
      %p161 = por %p159, %p160
      %p162 = scmp.le.s32.totalorder 1, %s18
      %p163 = scmp.lt.s32.totalorder %s18, 3
      %p164 = pnand %p162, %p163
      %p165 = pneg %p164
      // Predicated region
      $region9: #{tpu_custom_call.1} parent=5 // pred_check
        _
      $region10: #{tpu_custom_call.1} parent=5 // pred_check_branch
        %167 = sbr.rel (%p164) target = $region12
      $region11: #{tpu_custom_call.1} parent=5 // pred_region
        %s168 = ssub.s32 %s18, 1
        // Predicated region
        $region13: #{tpu_custom_call.1} parent=11 // pred_check
          %p169 = pneg %p65
        $region14: #{tpu_custom_call.1} parent=11 // pred_check_branch
          %171 = sbr.rel (%p169) target = $region16
        $region15: #{tpu_custom_call.1} parent=11 // pred_region
          %s173 = ssub.s32 8192, 8192
          %174 = vsyncadd [#allocation6], %s173
          %s175 = sshll.u32 [#allocation5], 4
          %s176 = int_to_ptr.vmem [resolvable:$true] %s175
          %181 = dma.hbm_to_vmem [thread:$0]  %s1, 8192, %s176, [#allocation6], 256, 256, 16
        $region16: #{tpu_custom_call.1} parent=11 // pred_fallthru
          _
        // Predicated region
        $region17: #{tpu_custom_call.1} parent=11 // pred_check
          %p182 = pneg %p86
        $region18: #{tpu_custom_call.1} parent=11 // pred_check_branch
          %184 = sbr.rel (%p182) target = $region20
        $region19: #{tpu_custom_call.1} parent=11 // pred_region
          _
        $region20: #{tpu_custom_call.1} parent=11 // pred_fallthru
          _
        // Predicated region
        $region21: #{tpu_custom_call.1} parent=11 // pred_check
          %p185 = pneg %p107
        $region22: #{tpu_custom_call.1} parent=11 // pred_check_branch
          %187 = sbr.rel (%p185) target = $region24
        $region23: #{tpu_custom_call.1} parent=11 // pred_region
          %s189 = ssub.s32 9216, 9216
          %190 = vsyncadd [#allocation6], %s189
          %s191 = sshll.u32 [#allocation7], 4
          %s192 = int_to_ptr.vmem [resolvable:$true] %s191
          %197 = dma.hbm_to_vmem [thread:$0]  %s3, 9216, %s192, [#allocation6], 576, 576, 36
        $region24: #{tpu_custom_call.1} parent=11 // pred_fallthru
          _
        // Predicated region
        $region25: #{tpu_custom_call.1} parent=11 // pred_check
          %p198 = pneg %p128
        $region26: #{tpu_custom_call.1} parent=11 // pred_check_branch
          %200 = sbr.rel (%p198) target = $region28
        $region27: #{tpu_custom_call.1} parent=11 // pred_region
          _
        $region28: #{tpu_custom_call.1} parent=11 // pred_fallthru
          _
      $region12: #{tpu_custom_call.1} parent=5 // pred_fallthru
        _
      %p201 = scmp.lt.s32.totalorder %s18, 2
      // Predicated region
      $region29: #{tpu_custom_call.1} parent=5 // pred_check
        %p202 = pneg %p201
      $region30: #{tpu_custom_call.1} parent=5 // pred_check_branch
        %204 = sbr.rel (%p202) target = $region32
      $region31: #{tpu_custom_call.1} parent=5 // pred_region
        // Predicated region
        $region33: #{tpu_custom_call.1} parent=31 // pred_check
          %p205 = pneg %p38
        $region34: #{tpu_custom_call.1} parent=31 // pred_check_branch
          %207 = sbr.rel (%p205) target = $region36
        $region35: #{tpu_custom_call.1} parent=31 // pred_region
          %s208 = sand.u32 %s28, 1
          %s209 = scalar_lea.sflag [#allocation3], %s208
          %s210 = sand.u32 %s28, 1
          %s211 = smul.addr %s210, 32
          %s212 = scalar_lea.vmem [#allocation2], %s211
          %s213 = smul.u32 2, %s18
          %s215 = ssub.s32 512, 512
          %216 = vsyncadd %s209, %s215
          %s217 = smul.addr %s213, 2
          %s218 = smul.addr %s217, 128
          %s219 = scalar_lea.hbm %s0, %s218
          %s220 = sshll.u32 %s212, 4
          %s221 = int_to_ptr.vmem [resolvable:$true] %s220
          %226 = dma.hbm_to_vmem [thread:$0]  %s219, 512, %s221, %s209, 256, 256, 16
        $region36: #{tpu_custom_call.1} parent=31 // pred_fallthru
          _
      $region32: #{tpu_custom_call.1} parent=5 // pred_fallthru
        _
      %p227 = scmp.le.s32.totalorder 1, %s18
      %p228 = scmp.lt.s32.totalorder %s18, 3
      %p229 = pnand %p227, %p228
      %p230 = pneg %p229
      // Predicated region
      $region37: #{tpu_custom_call.1} parent=5 // pred_check
        _
      $region38: #{tpu_custom_call.1} parent=5 // pred_check_branch
        %232 = sbr.rel (%p229) target = $region40
      $region39: #{tpu_custom_call.1} parent=5 // pred_region
        %s233 = ssub.s32 %s18, 1
        %s234 = sand.u32 %s31, 1
        %s235 = scalar_lea.sflag [#allocation3], %s234
        %s236 = sand.u32 %s31, 1
        %s237 = smul.addr %s236, 32
        %s238 = scalar_lea.vmem [#allocation2], %s237
        // Predicated region
        $region41: #{tpu_custom_call.1} parent=39 // pred_check
          %p239 = pneg %p44
        $region42: #{tpu_custom_call.1} parent=39 // pred_check_branch
          %241 = sbr.rel (%p239) target = $region44
        $region43: #{tpu_custom_call.1} parent=39 // pred_region
          %242 = dma.done %s235, 512
        $region44: #{tpu_custom_call.1} parent=39 // pred_fallthru
          _
        // Predicated region
        $region45: #{tpu_custom_call.1} parent=39 // pred_check
          %p243 = pneg %p65
        $region46: #{tpu_custom_call.1} parent=39 // pred_check_branch
          %245 = sbr.rel (%p243) target = $region48
        $region47: #{tpu_custom_call.1} parent=39 // pred_region
          %246 = dma.done [#allocation6], 8192
        $region48: #{tpu_custom_call.1} parent=39 // pred_fallthru
          _
        // Predicated region
        $region49: #{tpu_custom_call.1} parent=39 // pred_check
          %p247 = pneg %p107
        $region50: #{tpu_custom_call.1} parent=39 // pred_check_branch
          %249 = sbr.rel (%p247) target = $region52
        $region51: #{tpu_custom_call.1} parent=39 // pred_region
          %250 = dma.done [#allocation6], 9216
        $region52: #{tpu_custom_call.1} parent=39 // pred_fallthru
          _
        %s251 = sand.u32 %s31, 1
        %s252 = scalar_lea.sflag [#allocation3], %s251
        %s253 = sand.u32 %s31, 1
        %s254 = smul.addr %s253, 32
        %s255 = scalar_lea.vmem [#allocation2], %s254
        %p256 = pneg %p44
        %p257 = pneg %p41
        %p258 = pneg %p65
        %p259 = pneg %p62
        %p260 = pneg %p86
        %p261 = pneg %p83
        %p262 = pneg %p107
        %p263 = pneg %p104
        %p264 = pneg %p128
        %p265 = pneg %p125
        %p266 = pneg %p154
        %p267 = pneg %p151
        %s268 = sand.u32 %s141, 1
        %s269 = scalar_lea.sflag [#allocation4], %s268
        %s270 = sand.u32 %s141, 1
        %s271 = smul.addr %s270, 32
        %s272 = scalar_lea.vmem [#allocation8], %s271
        %s273 = smul.u32 2, %s23
        %s274 = smul.u32 2, %s23
        %v276 = vld [vmem:[%s238] sm:$0xff]
        %v277 = vld [vmem:[%s238 + $0x8] sm:$0xff]
        %v278 = vld [vmem:[%s238 + $0x10] sm:$0xff]
        %v279 = vld [vmem:[%s238 + $0x18] sm:$0xff]
        %v280 = vpack.c.bf16 %v278, %v276
        %v281 = vpack.c.bf16 %v279, %v277
        %v282 = vld [vmem:[#allocation5] sm:$0xff]
        %v283 = vld [vmem:[#allocation5 + $0x8] sm:$0xff]
        %v284 = vld [vmem:[#allocation5 + $0x10] sm:$0xff]
        %v285 = vld [vmem:[#allocation5 + $0x18] sm:$0xff]
        %v286 = vld [vmem:[#allocation5 + $0x20] sm:$0xff]
        %v287 = vld [vmem:[#allocation5 + $0x28] sm:$0xff]
        %v288 = vld [vmem:[#allocation5 + $0x30] sm:$0xff]
        %v289 = vld [vmem:[#allocation5 + $0x38] sm:$0xff]
        %v290 = vld [vmem:[#allocation5 + $0x40] sm:$0xff]
        %v291 = vld [vmem:[#allocation5 + $0x48] sm:$0xff]
        %v292 = vld [vmem:[#allocation5 + $0x50] sm:$0xff]
        %v293 = vld [vmem:[#allocation5 + $0x58] sm:$0xff]
        %v294 = vld [vmem:[#allocation5 + $0x60] sm:$0xff]
        %v295 = vld [vmem:[#allocation5 + $0x68] sm:$0xff]
        %v296 = vld [vmem:[#allocation5 + $0x70] sm:$0xff]
        %v297 = vld [vmem:[#allocation5 + $0x78] sm:$0xff]
        %v298 = vld [vmem:[#allocation5 + $0x80] sm:$0xff]
        %v299 = vld [vmem:[#allocation5 + $0x88] sm:$0xff]
        %v300 = vld [vmem:[#allocation5 + $0x90] sm:$0xff]
        %v301 = vld [vmem:[#allocation5 + $0x98] sm:$0xff]
        %v302 = vld [vmem:[#allocation5 + $0xa0] sm:$0xff]
        %v303 = vld [vmem:[#allocation5 + $0xa8] sm:$0xff]
        %v304 = vld [vmem:[#allocation5 + $0xb0] sm:$0xff]
        %v305 = vld [vmem:[#allocation5 + $0xb8] sm:$0xff]
        %v306 = vld [vmem:[#allocation5 + $0xc0] sm:$0xff]
        %v307 = vld [vmem:[#allocation5 + $0xc8] sm:$0xff]
        %v308 = vld [vmem:[#allocation5 + $0xd0] sm:$0xff]
        %v309 = vld [vmem:[#allocation5 + $0xd8] sm:$0xff]
        %v310 = vld [vmem:[#allocation5 + $0xe0] sm:$0xff]
        %v311 = vld [vmem:[#allocation5 + $0xe8] sm:$0xff]
        %v312 = vld [vmem:[#allocation5 + $0xf0] sm:$0xff]
        %v313 = vld [vmem:[#allocation5 + $0xf8] sm:$0xff]
        %v314 = vld [vmem:[#allocation5 + $0x100] sm:$0xff]
        %v315 = vld [vmem:[#allocation5 + $0x108] sm:$0xff]
        %v316 = vld [vmem:[#allocation5 + $0x110] sm:$0xff]
        %v317 = vld [vmem:[#allocation5 + $0x118] sm:$0xff]
        %v318 = vld [vmem:[#allocation5 + $0x120] sm:$0xff]
        %v319 = vld [vmem:[#allocation5 + $0x128] sm:$0xff]
        %v320 = vld [vmem:[#allocation5 + $0x130] sm:$0xff]
        %v321 = vld [vmem:[#allocation5 + $0x138] sm:$0xff]
        %v322 = vld [vmem:[#allocation5 + $0x140] sm:$0xff]
        %v323 = vld [vmem:[#allocation5 + $0x148] sm:$0xff]
        %v324 = vld [vmem:[#allocation5 + $0x150] sm:$0xff]
        %v325 = vld [vmem:[#allocation5 + $0x158] sm:$0xff]
        %v326 = vld [vmem:[#allocation5 + $0x160] sm:$0xff]
        %v327 = vld [vmem:[#allocation5 + $0x168] sm:$0xff]
        %v328 = vld [vmem:[#allocation5 + $0x170] sm:$0xff]
        %v329 = vld [vmem:[#allocation5 + $0x178] sm:$0xff]
        %v330 = vld [vmem:[#allocation5 + $0x180] sm:$0xff]
        %v331 = vld [vmem:[#allocation5 + $0x188] sm:$0xff]
        %v332 = vld [vmem:[#allocation5 + $0x190] sm:$0xff]
        %v333 = vld [vmem:[#allocation5 + $0x198] sm:$0xff]
        %v334 = vld [vmem:[#allocation5 + $0x1a0] sm:$0xff]
        %v335 = vld [vmem:[#allocation5 + $0x1a8] sm:$0xff]
        %v336 = vld [vmem:[#allocation5 + $0x1b0] sm:$0xff]
        %v337 = vld [vmem:[#allocation5 + $0x1b8] sm:$0xff]
        %v338 = vld [vmem:[#allocation5 + $0x1c0] sm:$0xff]
        %v339 = vld [vmem:[#allocation5 + $0x1c8] sm:$0xff]
        %v340 = vld [vmem:[#allocation5 + $0x1d0] sm:$0xff]
        %v341 = vld [vmem:[#allocation5 + $0x1d8] sm:$0xff]
        %v342 = vld [vmem:[#allocation5 + $0x1e0] sm:$0xff]
        %v343 = vld [vmem:[#allocation5 + $0x1e8] sm:$0xff]
        %v344 = vld [vmem:[#allocation5 + $0x1f0] sm:$0xff]
        %v345 = vld [vmem:[#allocation5 + $0x1f8] sm:$0xff]
        %v410 = vunpack.c.l.b16 %v282
        %v411 = vunpack.c.h.b16 %v282
        %v412 = vunpack.c.l.b16 %v283
        %v413 = vunpack.c.h.b16 %v283
        %v414 = vunpack.c.l.b16 %v284
        %v415 = vunpack.c.h.b16 %v284
        %v416 = vunpack.c.l.b16 %v285
        %v417 = vunpack.c.h.b16 %v285
        %v418 = vunpack.c.l.b16 %v286
        %v419 = vunpack.c.h.b16 %v286
        %v420 = vunpack.c.l.b16 %v287
        %v421 = vunpack.c.h.b16 %v287
        %v422 = vunpack.c.l.b16 %v288
        %v423 = vunpack.c.h.b16 %v288
        %v424 = vunpack.c.l.b16 %v289
        %v425 = vunpack.c.h.b16 %v289
        %v426 = vunpack.c.l.b16 %v290
        %v427 = vunpack.c.h.b16 %v290
        %v428 = vunpack.c.l.b16 %v291
        %v429 = vunpack.c.h.b16 %v291
        %v430 = vunpack.c.l.b16 %v292
        %v431 = vunpack.c.h.b16 %v292
        %v432 = vunpack.c.l.b16 %v293
        %v433 = vunpack.c.h.b16 %v293
        %v434 = vunpack.c.l.b16 %v294
        %v435 = vunpack.c.h.b16 %v294
        %v436 = vunpack.c.l.b16 %v295
        %v437 = vunpack.c.h.b16 %v295
        %v438 = vunpack.c.l.b16 %v296
        %v439 = vunpack.c.h.b16 %v296
        %v440 = vunpack.c.l.b16 %v297
        %v441 = vunpack.c.h.b16 %v297
        %v442 = vunpack.c.l.b16 %v298
        %v443 = vunpack.c.h.b16 %v298
        %v444 = vunpack.c.l.b16 %v299
        %v445 = vunpack.c.h.b16 %v299
        %v446 = vunpack.c.l.b16 %v300
        %v447 = vunpack.c.h.b16 %v300
        %v448 = vunpack.c.l.b16 %v301
        %v449 = vunpack.c.h.b16 %v301
        %v450 = vunpack.c.l.b16 %v302
        %v451 = vunpack.c.h.b16 %v302
        %v452 = vunpack.c.l.b16 %v303
        %v453 = vunpack.c.h.b16 %v303
        %v454 = vunpack.c.l.b16 %v304
        %v455 = vunpack.c.h.b16 %v304
        %v456 = vunpack.c.l.b16 %v305
        %v457 = vunpack.c.h.b16 %v305
        %v458 = vunpack.c.l.b16 %v306
        %v459 = vunpack.c.h.b16 %v306
        %v460 = vunpack.c.l.b16 %v307
        %v461 = vunpack.c.h.b16 %v307
        %v462 = vunpack.c.l.b16 %v308
        %v463 = vunpack.c.h.b16 %v308
        %v464 = vunpack.c.l.b16 %v309
        %v465 = vunpack.c.h.b16 %v309
        %v466 = vunpack.c.l.b16 %v310
        %v467 = vunpack.c.h.b16 %v310
        %v468 = vunpack.c.l.b16 %v311
        %v469 = vunpack.c.h.b16 %v311
        %v470 = vunpack.c.l.b16 %v312
        %v471 = vunpack.c.h.b16 %v312
        %v472 = vunpack.c.l.b16 %v313
        %v473 = vunpack.c.h.b16 %v313
        %v474 = vunpack.c.l.b16 %v314
        %v475 = vunpack.c.h.b16 %v314
        %v476 = vunpack.c.l.b16 %v315
        %v477 = vunpack.c.h.b16 %v315
        %v478 = vunpack.c.l.b16 %v316
        %v479 = vunpack.c.h.b16 %v316
        %v480 = vunpack.c.l.b16 %v317
        %v481 = vunpack.c.h.b16 %v317
        %v482 = vunpack.c.l.b16 %v318
        %v483 = vunpack.c.h.b16 %v318
        %v484 = vunpack.c.l.b16 %v319
        %v485 = vunpack.c.h.b16 %v319
        %v486 = vunpack.c.l.b16 %v320
        %v487 = vunpack.c.h.b16 %v320
        %v488 = vunpack.c.l.b16 %v321
        %v489 = vunpack.c.h.b16 %v321
        %v490 = vunpack.c.l.b16 %v322
        %v491 = vunpack.c.h.b16 %v322
        %v492 = vunpack.c.l.b16 %v323
        %v493 = vunpack.c.h.b16 %v323
        %v494 = vunpack.c.l.b16 %v324
        %v495 = vunpack.c.h.b16 %v324
        %v496 = vunpack.c.l.b16 %v325
        %v497 = vunpack.c.h.b16 %v325
        %v498 = vunpack.c.l.b16 %v326
        %v499 = vunpack.c.h.b16 %v326
        %v500 = vunpack.c.l.b16 %v327
        %v501 = vunpack.c.h.b16 %v327
        %v502 = vunpack.c.l.b16 %v328
        %v503 = vunpack.c.h.b16 %v328
        %v504 = vunpack.c.l.b16 %v329
        %v505 = vunpack.c.h.b16 %v329
        %v506 = vunpack.c.l.b16 %v330
        %v507 = vunpack.c.h.b16 %v330
        %v508 = vunpack.c.l.b16 %v331
        %v509 = vunpack.c.h.b16 %v331
        %v510 = vunpack.c.l.b16 %v332
        %v511 = vunpack.c.h.b16 %v332
        %v512 = vunpack.c.l.b16 %v333
        %v513 = vunpack.c.h.b16 %v333
        %v514 = vunpack.c.l.b16 %v334
        %v515 = vunpack.c.h.b16 %v334
        %v516 = vunpack.c.l.b16 %v335
        %v517 = vunpack.c.h.b16 %v335
        %v518 = vunpack.c.l.b16 %v336
        %v519 = vunpack.c.h.b16 %v336
        %v520 = vunpack.c.l.b16 %v337
        %v521 = vunpack.c.h.b16 %v337
        %v522 = vunpack.c.l.b16 %v338
        %v523 = vunpack.c.h.b16 %v338
        %v524 = vunpack.c.l.b16 %v339
        %v525 = vunpack.c.h.b16 %v339
        %v526 = vunpack.c.l.b16 %v340
        %v527 = vunpack.c.h.b16 %v340
        %v528 = vunpack.c.l.b16 %v341
        %v529 = vunpack.c.h.b16 %v341
        %v530 = vunpack.c.l.b16 %v342
        %v531 = vunpack.c.h.b16 %v342
        %v532 = vunpack.c.l.b16 %v343
        %v533 = vunpack.c.h.b16 %v343
        %v534 = vunpack.c.l.b16 %v344
        %v535 = vunpack.c.h.b16 %v344
        %v536 = vunpack.c.l.b16 %v345
        %v537 = vunpack.c.h.b16 %v345
        %v538 = vpack.c.b16 %v414, %v410
        %v539 = vpack.c.b16 %v415, %v411
        %v540 = vpack.c.b16 %v416, %v412
        %v541 = vpack.c.b16 %v417, %v413
        %v542 = vpack.c.b16 %v422, %v418
        %v543 = vpack.c.b16 %v423, %v419
        %v544 = vpack.c.b16 %v424, %v420
        %v545 = vpack.c.b16 %v425, %v421
        %v546 = vpack.c.b16 %v430, %v426
        %v547 = vpack.c.b16 %v431, %v427
        %v548 = vpack.c.b16 %v432, %v428
        %v549 = vpack.c.b16 %v433, %v429
        %v550 = vpack.c.b16 %v438, %v434
        %v551 = vpack.c.b16 %v439, %v435
        %v552 = vpack.c.b16 %v440, %v436
        %v553 = vpack.c.b16 %v441, %v437
        %v554 = vpack.c.b16 %v446, %v442
        %v555 = vpack.c.b16 %v447, %v443
        %v556 = vpack.c.b16 %v448, %v444
        %v557 = vpack.c.b16 %v449, %v445
        %v558 = vpack.c.b16 %v454, %v450
        %v559 = vpack.c.b16 %v455, %v451
        %v560 = vpack.c.b16 %v456, %v452
        %v561 = vpack.c.b16 %v457, %v453
        %v562 = vpack.c.b16 %v462, %v458
        %v563 = vpack.c.b16 %v463, %v459
        %v564 = vpack.c.b16 %v464, %v460
        %v565 = vpack.c.b16 %v465, %v461
        %v566 = vpack.c.b16 %v470, %v466
        %v567 = vpack.c.b16 %v471, %v467
        %v568 = vpack.c.b16 %v472, %v468
        %v569 = vpack.c.b16 %v473, %v469
        %v570 = vpack.c.b16 %v478, %v474
        %v571 = vpack.c.b16 %v479, %v475
        %v572 = vpack.c.b16 %v480, %v476
        %v573 = vpack.c.b16 %v481, %v477
        %v574 = vpack.c.b16 %v486, %v482
        %v575 = vpack.c.b16 %v487, %v483
        %v576 = vpack.c.b16 %v488, %v484
        %v577 = vpack.c.b16 %v489, %v485
        %v578 = vpack.c.b16 %v494, %v490
        %v579 = vpack.c.b16 %v495, %v491
        %v580 = vpack.c.b16 %v496, %v492
        %v581 = vpack.c.b16 %v497, %v493
        %v582 = vpack.c.b16 %v502, %v498
        %v583 = vpack.c.b16 %v503, %v499
        %v584 = vpack.c.b16 %v504, %v500
        %v585 = vpack.c.b16 %v505, %v501
        %v586 = vpack.c.b16 %v510, %v506
        %v587 = vpack.c.b16 %v511, %v507
        %v588 = vpack.c.b16 %v512, %v508
        %v589 = vpack.c.b16 %v513, %v509
        %v590 = vpack.c.b16 %v518, %v514
        %v591 = vpack.c.b16 %v519, %v515
        %v592 = vpack.c.b16 %v520, %v516
        %v593 = vpack.c.b16 %v521, %v517
        %v594 = vpack.c.b16 %v526, %v522
        %v595 = vpack.c.b16 %v527, %v523
        %v596 = vpack.c.b16 %v528, %v524
        %v597 = vpack.c.b16 %v529, %v525
        %v598 = vpack.c.b16 %v534, %v530
        %v599 = vpack.c.b16 %v535, %v531
        %v600 = vpack.c.b16 %v536, %v532
        %v601 = vpack.c.b16 %v537, %v533
        %666 = vmatprep.subr.bf16.mxu0 %v539
        %667 = vmatpush1.bf16.msra.mxu0 %v538
        %668 = vmatprep.subr.bf16.mxu0 %v543
        %669 = vmatpush1.bf16.msra.mxu0 %v542
        %670 = vmatprep.subr.bf16.mxu0 %v547
        %671 = vmatpush1.bf16.msra.mxu0 %v546
        %672 = vmatprep.subr.bf16.mxu0 %v551
        %673 = vmatpush1.bf16.msra.mxu0 %v550
        %674 = vmatprep.subr.bf16.mxu0 %v555
        %675 = vmatpush1.bf16.msra.mxu0 %v554
        %676 = vmatprep.subr.bf16.mxu0 %v559
        %677 = vmatpush1.bf16.msra.mxu0 %v558
        %678 = vmatprep.subr.bf16.mxu0 %v563
        %679 = vmatpush1.bf16.msra.mxu0 %v562
        %680 = vmatprep.subr.bf16.mxu0 %v567
        %681 = vmatpush1.bf16.msra.mxu0 %v566
        %682 = vmatprep.subr.bf16.mxu0 %v571
        %683 = vmatpush1.bf16.msra.mxu0 %v570
        %684 = vmatprep.subr.bf16.mxu0 %v575
        %685 = vmatpush1.bf16.msra.mxu0 %v574
        %686 = vmatprep.subr.bf16.mxu0 %v579
        %687 = vmatpush1.bf16.msra.mxu0 %v578
        %688 = vmatprep.subr.bf16.mxu0 %v583
        %689 = vmatpush1.bf16.msra.mxu0 %v582
        %690 = vmatprep.subr.bf16.mxu0 %v587
        %691 = vmatpush1.bf16.msra.mxu0 %v586
        %692 = vmatprep.subr.bf16.mxu0 %v591
        %693 = vmatpush1.bf16.msra.mxu0 %v590
        %694 = vmatprep.subr.bf16.mxu0 %v595
        %695 = vmatpush1.bf16.msra.mxu0 %v594
        %696 = vmatprep.subr.bf16.mxu0 %v599
        %697 = vmatpush1.bf16.msra.mxu0 %v598
        %698 = vmatprep.mubr.bf16.mxu0 %v281
        %699 = vmatmul.mubr.bf16.gmra.mrb[0].mxu0 %v280
        %v700 = vpop.f32.mrb[0].mxu0
        %v701 = vadd.f32 0.0, %v700
        %v702 = vpop.f32.mrb[0].mxu0
        %v703 = vadd.f32 0.0, %v702
        %v704 = vpop.f32.mrb[0].mxu0
        %v705 = vadd.f32 0.0, %v704
        %v706 = vpop.f32.mrb[0].mxu0
        %v707 = vadd.f32 0.0, %v706
        %708 = vdwg.mxu0
        %709 = vmatprep.subr.bf16.mxu0 %v541
        %710 = vmatpush1.bf16.msra.mxu0 %v540
        %711 = vmatprep.subr.bf16.mxu0 %v545
        %712 = vmatpush1.bf16.msra.mxu0 %v544
        %713 = vmatprep.subr.bf16.mxu0 %v549
        %714 = vmatpush1.bf16.msra.mxu0 %v548
        %715 = vmatprep.subr.bf16.mxu0 %v553
        %716 = vmatpush1.bf16.msra.mxu0 %v552
        %717 = vmatprep.subr.bf16.mxu0 %v557
        %718 = vmatpush1.bf16.msra.mxu0 %v556
        %719 = vmatprep.subr.bf16.mxu0 %v561
        %720 = vmatpush1.bf16.msra.mxu0 %v560
        %721 = vmatprep.subr.bf16.mxu0 %v565
        %722 = vmatpush1.bf16.msra.mxu0 %v564
        %723 = vmatprep.subr.bf16.mxu0 %v569
        %724 = vmatpush1.bf16.msra.mxu0 %v568
        %725 = vmatprep.subr.bf16.mxu0 %v573
        %726 = vmatpush1.bf16.msra.mxu0 %v572
        %727 = vmatprep.subr.bf16.mxu0 %v577
        %728 = vmatpush1.bf16.msra.mxu0 %v576
        %729 = vmatprep.subr.bf16.mxu0 %v581
        %730 = vmatpush1.bf16.msra.mxu0 %v580
        %731 = vmatprep.subr.bf16.mxu0 %v585
        %732 = vmatpush1.bf16.msra.mxu0 %v584
        %733 = vmatprep.subr.bf16.mxu0 %v589
        %734 = vmatpush1.bf16.msra.mxu0 %v588
        %735 = vmatprep.subr.bf16.mxu0 %v593
        %736 = vmatpush1.bf16.msra.mxu0 %v592
        %737 = vmatprep.subr.bf16.mxu0 %v597
        %738 = vmatpush1.bf16.msra.mxu0 %v596
        %739 = vmatprep.subr.bf16.mxu0 %v601
        %740 = vmatpush1.bf16.msra.mxu0 %v600
        %741 = vmatprep.mubr.bf16.mxu0 %v281
        %742 = vmatmul.mubr.bf16.gmra.mrb[0].mxu0 %v280
        %v743 = vpop.f32.mrb[0].mxu0
        %v744 = vadd.f32 0.0, %v743
        %v745 = vpop.f32.mrb[0].mxu0
        %v746 = vadd.f32 0.0, %v745
        %v747 = vpop.f32.mrb[0].mxu0
        %v748 = vadd.f32 0.0, %v747
        %v749 = vpop.f32.mrb[0].mxu0
        %v750 = vadd.f32 0.0, %v749
        %751 = vdwg.mxu0
        %vm752 = vcmask 1015744
        %v753 = vsel %vm752, %v701, -inf
        %754 = vmax.xlane.f32.xlu0 %v753
        %v755 = vpop.xlane.xlu0 %754
        %v756 = vsel %vm752, %v705, -inf
        %757 = vmax.xlane.f32.xlu0 %v756
        %v758 = vpop.xlane.xlu0 %757
        %v759 = vsub.f32 %v701, %v755
        %v760 = vsub.f32 %v705, %v758
        %v761 = vmul.f32 %v759, 1.442695
        %v762 = vpow.pop %v761
        %v763 = vmul.f32 %v760, 1.442695
        %v764 = vpow.pop %v763
        %767 = vrot.lane.b32.xlu0 %v762, 8
        %v768 = vpop.permute.xlu0 %767
        %769 = vrot.lane.b32.xlu0 %v764, 8
        %v770 = vpop.permute.xlu0 %769
        %vm773 = vcmask 31744
        %v774 = vsel %vm773, %v768, 0.0
        %775 = vadd.xlane.f32.xlu0 %v774
        %v776 = vpop.xlane.xlu0 %775
        %v777 = vsel %vm773, %v770, 0.0
        %778 = vadd.xlane.f32.xlu0 %v777
        %v779 = vpop.xlane.xlu0 %778
        %v780 = vrcp.pop %v776
        %v781 = vrcp.pop %v779
        %v782 = vmul.f32 %v762, %v780
        %v783 = vmul.f32 %v764, %v781
        %v784 = vld [vmem:[%s2] sm:$0xf]
        %v785 = vlaneseq
        %v786 = vshrl.u32 %v785, 7
        %v787 = vsub.s32 0, %v786
        %v788 = vrot.slane %v784, %v787
        %v789 = vsub.f32 %v701, %v788
        %v790 = vsub.f32 %v705, %v788
        %792 = vset.pattern.permute.xlu0 120
        %793 = vperm.xlu0 %792, %v782
        %v794 = vpop.permute.xlu0 %793
        %797 = vset.pattern.permute.xlu0 120
        %798 = vperm.xlu0 %797, %v783
        %v799 = vpop.permute.xlu0 %798
        %v801 = vmul.f32 %v794, %v789
        %v802 = vmul.f32 %v799, %v790
        %v803 = vlaneseq
        %v804 = vshrl.u32 %v803, 7
        %v805 = vsub.s32 1, %v804
        %v806 = vrot.slane %v784, %v805
        %v807 = vsub.f32 %v703, %v806
        %v808 = vsub.f32 %v707, %v806
        %809 = vset.pattern.permute.xlu0 121
        %810 = vperm.xlu0 %809, %v782
        %v811 = vpop.permute.xlu0 %810
        %813 = vset.pattern.permute.xlu0 121
        %814 = vperm.xlu0 %813, %v783
        %v815 = vpop.permute.xlu0 %814
        %v817 = vmul.f32 %v811, %v807
        %v818 = vmul.f32 %v815, %v808
        %v819 = vadd.f32 %v801, %v817
        %v820 = vadd.f32 %v802, %v818
        %v821 = vlaneseq
        %v822 = vshrl.u32 %v821, 7
        %v823 = vsub.s32 2, %v822
        %v824 = vrot.slane %v784, %v823
        %v825 = vsub.f32 %v744, %v824
        %v826 = vsub.f32 %v748, %v824
        %827 = vset.pattern.permute.xlu0 122
        %828 = vperm.xlu0 %827, %v782
        %v829 = vpop.permute.xlu0 %828
        %831 = vset.pattern.permute.xlu0 122
        %832 = vperm.xlu0 %831, %v783
        %v833 = vpop.permute.xlu0 %832
        %v835 = vmul.f32 %v829, %v825
        %v836 = vmul.f32 %v833, %v826
        %v837 = vadd.f32 %v819, %v835
        %v838 = vadd.f32 %v820, %v836
        %v839 = vlaneseq
        %v840 = vshrl.u32 %v839, 7
        %v841 = vsub.s32 3, %v840
        %v842 = vrot.slane %v784, %v841
        %v843 = vsub.f32 %v746, %v842
        %v844 = vsub.f32 %v750, %v842
        %845 = vset.pattern.permute.xlu0 123
        %846 = vperm.xlu0 %845, %v782
        %v847 = vpop.permute.xlu0 %846
        %849 = vset.pattern.permute.xlu0 123
        %850 = vperm.xlu0 %849, %v783
        %v851 = vpop.permute.xlu0 %850
        %v853 = vmul.f32 %v847, %v843
        %v854 = vmul.f32 %v851, %v844
        %v855 = vadd.f32 %v837, %v853
        %v856 = vadd.f32 %v838, %v854
        %v857 = vpack.c.bf16 %v856, %v855
        %v858 = vld [vmem:[#allocation7] sm:$0xff]
        %v859 = vld [vmem:[#allocation7 + $0x8] sm:$0xff]
        %v860 = vld [vmem:[#allocation7 + $0x10] sm:$0xff]
        %v861 = vld [vmem:[#allocation7 + $0x18] sm:$0xff]
        %v862 = vld [vmem:[#allocation7 + $0x20] sm:$0xf]
        %v863 = vld [vmem:[#allocation7 + $0x24] sm:$0xff]
        %v864 = vld [vmem:[#allocation7 + $0x2c] sm:$0xff]
        %v865 = vld [vmem:[#allocation7 + $0x34] sm:$0xff]
        %v866 = vld [vmem:[#allocation7 + $0x3c] sm:$0xff]
        %v867 = vld [vmem:[#allocation7 + $0x44] sm:$0xf]
        %v868 = vld [vmem:[#allocation7 + $0x48] sm:$0xff]
        %v869 = vld [vmem:[#allocation7 + $0x50] sm:$0xff]
        %v870 = vld [vmem:[#allocation7 + $0x58] sm:$0xff]
        %v871 = vld [vmem:[#allocation7 + $0x60] sm:$0xff]
        %v872 = vld [vmem:[#allocation7 + $0x68] sm:$0xf]
        %v873 = vld [vmem:[#allocation7 + $0x6c] sm:$0xff]
        %v874 = vld [vmem:[#allocation7 + $0x74] sm:$0xff]
        %v875 = vld [vmem:[#allocation7 + $0x7c] sm:$0xff]
        %v876 = vld [vmem:[#allocation7 + $0x84] sm:$0xff]
        %v877 = vld [vmem:[#allocation7 + $0x8c] sm:$0xf]
        %v878 = vld [vmem:[#allocation7 + $0x90] sm:$0xff]
        %v879 = vld [vmem:[#allocation7 + $0x98] sm:$0xff]
        %v880 = vld [vmem:[#allocation7 + $0xa0] sm:$0xff]
        %v881 = vld [vmem:[#allocation7 + $0xa8] sm:$0xff]
        %v882 = vld [vmem:[#allocation7 + $0xb0] sm:$0xf]
        %v883 = vld [vmem:[#allocation7 + $0xb4] sm:$0xff]
        %v884 = vld [vmem:[#allocation7 + $0xbc] sm:$0xff]
        %v885 = vld [vmem:[#allocation7 + $0xc4] sm:$0xff]
        %v886 = vld [vmem:[#allocation7 + $0xcc] sm:$0xff]
        %v887 = vld [vmem:[#allocation7 + $0xd4] sm:$0xf]
        %v888 = vld [vmem:[#allocation7 + $0xd8] sm:$0xff]
        %v889 = vld [vmem:[#allocation7 + $0xe0] sm:$0xff]
        %v890 = vld [vmem:[#allocation7 + $0xe8] sm:$0xff]
        %v891 = vld [vmem:[#allocation7 + $0xf0] sm:$0xff]
        %v892 = vld [vmem:[#allocation7 + $0xf8] sm:$0xf]
        %v893 = vld [vmem:[#allocation7 + $0xfc] sm:$0xff]
        %v894 = vld [vmem:[#allocation7 + $0x104] sm:$0xff]
        %v895 = vld [vmem:[#allocation7 + $0x10c] sm:$0xff]
        %v896 = vld [vmem:[#allocation7 + $0x114] sm:$0xff]
        %v897 = vld [vmem:[#allocation7 + $0x11c] sm:$0xf]
        %v898 = vld [vmem:[#allocation7 + $0x120] sm:$0xff]
        %v899 = vld [vmem:[#allocation7 + $0x128] sm:$0xff]
        %v900 = vld [vmem:[#allocation7 + $0x130] sm:$0xff]
        %v901 = vld [vmem:[#allocation7 + $0x138] sm:$0xff]
        %v902 = vld [vmem:[#allocation7 + $0x140] sm:$0xf]
        %v903 = vld [vmem:[#allocation7 + $0x144] sm:$0xff]
        %v904 = vld [vmem:[#allocation7 + $0x14c] sm:$0xff]
        %v905 = vld [vmem:[#allocation7 + $0x154] sm:$0xff]
        %v906 = vld [vmem:[#allocation7 + $0x15c] sm:$0xff]
        %v907 = vld [vmem:[#allocation7 + $0x164] sm:$0xf]
        %v908 = vld [vmem:[#allocation7 + $0x168] sm:$0xff]
        %v909 = vld [vmem:[#allocation7 + $0x170] sm:$0xff]
        %v910 = vld [vmem:[#allocation7 + $0x178] sm:$0xff]
        %v911 = vld [vmem:[#allocation7 + $0x180] sm:$0xff]
        %v912 = vld [vmem:[#allocation7 + $0x188] sm:$0xf]
        %v913 = vld [vmem:[#allocation7 + $0x18c] sm:$0xff]
        %v914 = vld [vmem:[#allocation7 + $0x194] sm:$0xff]
        %v915 = vld [vmem:[#allocation7 + $0x19c] sm:$0xff]
        %v916 = vld [vmem:[#allocation7 + $0x1a4] sm:$0xff]
        %v917 = vld [vmem:[#allocation7 + $0x1ac] sm:$0xf]
        %v918 = vld [vmem:[#allocation7 + $0x1b0] sm:$0xff]
        %v919 = vld [vmem:[#allocation7 + $0x1b8] sm:$0xff]
        %v920 = vld [vmem:[#allocation7 + $0x1c0] sm:$0xff]
        %v921 = vld [vmem:[#allocation7 + $0x1c8] sm:$0xff]
        %v922 = vld [vmem:[#allocation7 + $0x1d0] sm:$0xf]
        %v923 = vld [vmem:[#allocation7 + $0x1d4] sm:$0xff]
        %v924 = vld [vmem:[#allocation7 + $0x1dc] sm:$0xff]
        %v925 = vld [vmem:[#allocation7 + $0x1e4] sm:$0xff]
        %v926 = vld [vmem:[#allocation7 + $0x1ec] sm:$0xff]
        %v927 = vld [vmem:[#allocation7 + $0x1f4] sm:$0xf]
        %v928 = vld [vmem:[#allocation7 + $0x1f8] sm:$0xff]
        %v929 = vld [vmem:[#allocation7 + $0x200] sm:$0xff]
        %v930 = vld [vmem:[#allocation7 + $0x208] sm:$0xff]
        %v931 = vld [vmem:[#allocation7 + $0x210] sm:$0xff]
        %v932 = vld [vmem:[#allocation7 + $0x218] sm:$0xf]
        %v933 = vld [vmem:[#allocation7 + $0x21c] sm:$0xff]
        %v934 = vld [vmem:[#allocation7 + $0x224] sm:$0xff]
        %v935 = vld [vmem:[#allocation7 + $0x22c] sm:$0xff]
        %v936 = vld [vmem:[#allocation7 + $0x234] sm:$0xff]
        %v937 = vld [vmem:[#allocation7 + $0x23c] sm:$0xf]
        %v1018 = vunpack.c.l.b16 %v858
        %v1019 = vunpack.c.h.b16 %v858
        %v1020 = vunpack.c.l.b16 %v859
        %v1021 = vunpack.c.h.b16 %v859
        %v1022 = vunpack.c.l.b16 %v860
        %v1023 = vunpack.c.h.b16 %v860
        %v1024 = vunpack.c.l.b16 %v861
        %v1025 = vunpack.c.h.b16 %v861
        %v1026 = vunpack.c.l.b16 %v862
        %v1027 = vunpack.c.l.b16 %v863
        %v1028 = vunpack.c.h.b16 %v863
        %v1029 = vunpack.c.l.b16 %v864
        %v1030 = vunpack.c.h.b16 %v864
        %v1031 = vunpack.c.l.b16 %v865
        %v1032 = vunpack.c.h.b16 %v865
        %v1033 = vunpack.c.l.b16 %v866
        %v1034 = vunpack.c.h.b16 %v866
        %v1035 = vunpack.c.l.b16 %v867
        %v1036 = vunpack.c.l.b16 %v868
        %v1037 = vunpack.c.h.b16 %v868
        %v1038 = vunpack.c.l.b16 %v869
        %v1039 = vunpack.c.h.b16 %v869
        %v1040 = vunpack.c.l.b16 %v870
        %v1041 = vunpack.c.h.b16 %v870
        %v1042 = vunpack.c.l.b16 %v871
        %v1043 = vunpack.c.h.b16 %v871
        %v1044 = vunpack.c.l.b16 %v872
        %v1045 = vunpack.c.l.b16 %v873
        %v1046 = vunpack.c.h.b16 %v873
        %v1047 = vunpack.c.l.b16 %v874
        %v1048 = vunpack.c.h.b16 %v874
        %v1049 = vunpack.c.l.b16 %v875
        %v1050 = vunpack.c.h.b16 %v875
        %v1051 = vunpack.c.l.b16 %v876
        %v1052 = vunpack.c.h.b16 %v876
        %v1053 = vunpack.c.l.b16 %v877
        %v1054 = vunpack.c.l.b16 %v878
        %v1055 = vunpack.c.h.b16 %v878
        %v1056 = vunpack.c.l.b16 %v879
        %v1057 = vunpack.c.h.b16 %v879
        %v1058 = vunpack.c.l.b16 %v880
        %v1059 = vunpack.c.h.b16 %v880
        %v1060 = vunpack.c.l.b16 %v881
        %v1061 = vunpack.c.h.b16 %v881
        %v1062 = vunpack.c.l.b16 %v882
        %v1063 = vunpack.c.l.b16 %v883
        %v1064 = vunpack.c.h.b16 %v883
        %v1065 = vunpack.c.l.b16 %v884
        %v1066 = vunpack.c.h.b16 %v884
        %v1067 = vunpack.c.l.b16 %v885
        %v1068 = vunpack.c.h.b16 %v885
        %v1069 = vunpack.c.l.b16 %v886
        %v1070 = vunpack.c.h.b16 %v886
        %v1071 = vunpack.c.l.b16 %v887
        %v1072 = vunpack.c.l.b16 %v888
        %v1073 = vunpack.c.h.b16 %v888
        %v1074 = vunpack.c.l.b16 %v889
        %v1075 = vunpack.c.h.b16 %v889
        %v1076 = vunpack.c.l.b16 %v890
        %v1077 = vunpack.c.h.b16 %v890
        %v1078 = vunpack.c.l.b16 %v891
        %v1079 = vunpack.c.h.b16 %v891
        %v1080 = vunpack.c.l.b16 %v892
        %v1081 = vunpack.c.l.b16 %v893
        %v1082 = vunpack.c.h.b16 %v893
        %v1083 = vunpack.c.l.b16 %v894
        %v1084 = vunpack.c.h.b16 %v894
        %v1085 = vunpack.c.l.b16 %v895
        %v1086 = vunpack.c.h.b16 %v895
        %v1087 = vunpack.c.l.b16 %v896
        %v1088 = vunpack.c.h.b16 %v896
        %v1089 = vunpack.c.l.b16 %v897
        %v1090 = vunpack.c.l.b16 %v898
        %v1091 = vunpack.c.h.b16 %v898
        %v1092 = vunpack.c.l.b16 %v899
        %v1093 = vunpack.c.h.b16 %v899
        %v1094 = vunpack.c.l.b16 %v900
        %v1095 = vunpack.c.h.b16 %v900
        %v1096 = vunpack.c.l.b16 %v901
        %v1097 = vunpack.c.h.b16 %v901
        %v1098 = vunpack.c.l.b16 %v902
        %v1099 = vunpack.c.l.b16 %v903
        %v1100 = vunpack.c.h.b16 %v903
        %v1101 = vunpack.c.l.b16 %v904
        %v1102 = vunpack.c.h.b16 %v904
        %v1103 = vunpack.c.l.b16 %v905
        %v1104 = vunpack.c.h.b16 %v905
        %v1105 = vunpack.c.l.b16 %v906
        %v1106 = vunpack.c.h.b16 %v906
        %v1107 = vunpack.c.l.b16 %v907
        %v1108 = vunpack.c.l.b16 %v908
        %v1109 = vunpack.c.h.b16 %v908
        %v1110 = vunpack.c.l.b16 %v909
        %v1111 = vunpack.c.h.b16 %v909
        %v1112 = vunpack.c.l.b16 %v910
        %v1113 = vunpack.c.h.b16 %v910
        %v1114 = vunpack.c.l.b16 %v911
        %v1115 = vunpack.c.h.b16 %v911
        %v1116 = vunpack.c.l.b16 %v912
        %v1117 = vunpack.c.l.b16 %v913
        %v1118 = vunpack.c.h.b16 %v913
        %v1119 = vunpack.c.l.b16 %v914
        %v1120 = vunpack.c.h.b16 %v914
        %v1121 = vunpack.c.l.b16 %v915
        %v1122 = vunpack.c.h.b16 %v915
        %v1123 = vunpack.c.l.b16 %v916
        %v1124 = vunpack.c.h.b16 %v916
        %v1125 = vunpack.c.l.b16 %v917
        %v1126 = vunpack.c.l.b16 %v918
        %v1127 = vunpack.c.h.b16 %v918
        %v1128 = vunpack.c.l.b16 %v919
        %v1129 = vunpack.c.h.b16 %v919
        %v1130 = vunpack.c.l.b16 %v920
        %v1131 = vunpack.c.h.b16 %v920
        %v1132 = vunpack.c.l.b16 %v921
        %v1133 = vunpack.c.h.b16 %v921
        %v1134 = vunpack.c.l.b16 %v922
        %v1135 = vunpack.c.l.b16 %v923
        %v1136 = vunpack.c.h.b16 %v923
        %v1137 = vunpack.c.l.b16 %v924
        %v1138 = vunpack.c.h.b16 %v924
        %v1139 = vunpack.c.l.b16 %v925
        %v1140 = vunpack.c.h.b16 %v925
        %v1141 = vunpack.c.l.b16 %v926
        %v1142 = vunpack.c.h.b16 %v926
        %v1143 = vunpack.c.l.b16 %v927
        %v1144 = vunpack.c.l.b16 %v928
        %v1145 = vunpack.c.h.b16 %v928
        %v1146 = vunpack.c.l.b16 %v929
        %v1147 = vunpack.c.h.b16 %v929
        %v1148 = vunpack.c.l.b16 %v930
        %v1149 = vunpack.c.h.b16 %v930
        %v1150 = vunpack.c.l.b16 %v931
        %v1151 = vunpack.c.h.b16 %v931
        %v1152 = vunpack.c.l.b16 %v932
        %v1153 = vunpack.c.l.b16 %v933
        %v1154 = vunpack.c.h.b16 %v933
        %v1155 = vunpack.c.l.b16 %v934
        %v1156 = vunpack.c.h.b16 %v934
        %v1157 = vunpack.c.l.b16 %v935
        %v1158 = vunpack.c.h.b16 %v935
        %v1159 = vunpack.c.l.b16 %v936
        %v1160 = vunpack.c.h.b16 %v936
        %v1161 = vunpack.c.l.b16 %v937
        %v1162 = vpack.c.b16 %v1027, %v1018
        %v1163 = vpack.c.b16 %v1028, %v1019
        %v1164 = vpack.c.b16 %v1029, %v1020
        %v1165 = vpack.c.b16 %v1030, %v1021
        %v1166 = vpack.c.b16 %v1031, %v1022
        %v1167 = vpack.c.b16 %v1032, %v1023
        %v1168 = vpack.c.b16 %v1033, %v1024
        %v1169 = vpack.c.b16 %v1034, %v1025
        %v1170 = vpack.c.b16 %v1035, %v1026
        %v1171 = vpack.c.b16 %v1045, %v1036
        %v1172 = vpack.c.b16 %v1046, %v1037
        %v1173 = vpack.c.b16 %v1047, %v1038
        %v1174 = vpack.c.b16 %v1048, %v1039
        %v1175 = vpack.c.b16 %v1049, %v1040
        %v1176 = vpack.c.b16 %v1050, %v1041
        %v1177 = vpack.c.b16 %v1051, %v1042
        %v1178 = vpack.c.b16 %v1052, %v1043
        %v1179 = vpack.c.b16 %v1053, %v1044
        %v1180 = vpack.c.b16 %v1063, %v1054
        %v1181 = vpack.c.b16 %v1064, %v1055
        %v1182 = vpack.c.b16 %v1065, %v1056
        %v1183 = vpack.c.b16 %v1066, %v1057
        %v1184 = vpack.c.b16 %v1067, %v1058
        %v1185 = vpack.c.b16 %v1068, %v1059
        %v1186 = vpack.c.b16 %v1069, %v1060
        %v1187 = vpack.c.b16 %v1070, %v1061
        %v1188 = vpack.c.b16 %v1071, %v1062
        %v1189 = vpack.c.b16 %v1081, %v1072
        %v1190 = vpack.c.b16 %v1082, %v1073
        %v1191 = vpack.c.b16 %v1083, %v1074
        %v1192 = vpack.c.b16 %v1084, %v1075
        %v1193 = vpack.c.b16 %v1085, %v1076
        %v1194 = vpack.c.b16 %v1086, %v1077
        %v1195 = vpack.c.b16 %v1087, %v1078
        %v1196 = vpack.c.b16 %v1088, %v1079
        %v1197 = vpack.c.b16 %v1089, %v1080
        %v1198 = vpack.c.b16 %v1099, %v1090
        %v1199 = vpack.c.b16 %v1100, %v1091
        %v1200 = vpack.c.b16 %v1101, %v1092
        %v1201 = vpack.c.b16 %v1102, %v1093
        %v1202 = vpack.c.b16 %v1103, %v1094
        %v1203 = vpack.c.b16 %v1104, %v1095
        %v1204 = vpack.c.b16 %v1105, %v1096
        %v1205 = vpack.c.b16 %v1106, %v1097
        %v1206 = vpack.c.b16 %v1107, %v1098
        %v1207 = vpack.c.b16 %v1117, %v1108
        %v1208 = vpack.c.b16 %v1118, %v1109
        %v1209 = vpack.c.b16 %v1119, %v1110
        %v1210 = vpack.c.b16 %v1120, %v1111
        %v1211 = vpack.c.b16 %v1121, %v1112
        %v1212 = vpack.c.b16 %v1122, %v1113
        %v1213 = vpack.c.b16 %v1123, %v1114
        %v1214 = vpack.c.b16 %v1124, %v1115
        %v1215 = vpack.c.b16 %v1125, %v1116
        %v1216 = vpack.c.b16 %v1135, %v1126
        %v1217 = vpack.c.b16 %v1136, %v1127
        %v1218 = vpack.c.b16 %v1137, %v1128
        %v1219 = vpack.c.b16 %v1138, %v1129
        %v1220 = vpack.c.b16 %v1139, %v1130
        %v1221 = vpack.c.b16 %v1140, %v1131
        %v1222 = vpack.c.b16 %v1141, %v1132
        %v1223 = vpack.c.b16 %v1142, %v1133
        %v1224 = vpack.c.b16 %v1143, %v1134
        %v1225 = vpack.c.b16 %v1153, %v1144
        %v1226 = vpack.c.b16 %v1154, %v1145
        %v1227 = vpack.c.b16 %v1155, %v1146
        %v1228 = vpack.c.b16 %v1156, %v1147
        %v1229 = vpack.c.b16 %v1157, %v1148
        %v1230 = vpack.c.b16 %v1158, %v1149
        %v1231 = vpack.c.b16 %v1159, %v1150
        %v1232 = vpack.c.b16 %v1160, %v1151
        %v1233 = vpack.c.b16 %v1161, %v1152
        %1306 = vmatprep.subr.bf16.mxu0 %v1163
        %1307 = vmatpush1.bf16.msra.mxu0 %v1162
        %1308 = vmatprep.subr.bf16.mxu0 %v1172
        %1309 = vmatpush1.bf16.msra.mxu0 %v1171
        %1310 = vmatprep.subr.bf16.mxu0 %v1181
        %1311 = vmatpush1.bf16.msra.mxu0 %v1180
        %1312 = vmatprep.subr.bf16.mxu0 %v1190
        %1313 = vmatpush1.bf16.msra.mxu0 %v1189
        %1314 = vmatprep.subr.bf16.mxu0 %v1199
        %1315 = vmatpush1.bf16.msra.mxu0 %v1198
        %1316 = vmatprep.subr.bf16.mxu0 %v1208
        %1317 = vmatpush1.bf16.msra.mxu0 %v1207
        %1318 = vmatprep.subr.bf16.mxu0 %v1217
        %1319 = vmatpush1.bf16.msra.mxu0 %v1216
        %1320 = vmatprep.subr.bf16.mxu0 %v1226
        %1321 = vmatpush1.bf16.msra.mxu0 %v1225
        %1322 = vmatprep.subr.bf16.mxu0 0
        %1323 = vmatpush1.bf16.msra.mxu0 0
        %1324 = vmatprep.subr.bf16.mxu0 0
        %1325 = vmatpush1.bf16.msra.mxu0 0
        %1326 = vmatprep.subr.bf16.mxu0 0
        %1327 = vmatpush1.bf16.msra.mxu0 0
        %1328 = vmatprep.subr.bf16.mxu0 0
        %1329 = vmatpush1.bf16.msra.mxu0 0
        %1330 = vmatprep.subr.bf16.mxu0 0
        %1331 = vmatpush1.bf16.msra.mxu0 0
        %1332 = vmatprep.subr.bf16.mxu0 0
        %1333 = vmatpush1.bf16.msra.mxu0 0
        %1334 = vmatprep.subr.bf16.mxu0 0
        %1335 = vmatpush1.bf16.msra.mxu0 0
        %1336 = vmatprep.subr.bf16.mxu0 0
        %1337 = vmatpush1.bf16.msra.mxu0 0
        %1338 = vmatprep.mubr.bf16.mxu0 0
        %1339 = vmatmul.mubr.bf16.gmra.mrb[0].mxu0 %v857
        %v1340 = vpop.f32.mrb[0].mxu0
        %v1341 = vadd.f32 0.0, %v1340
        %v1342 = vpop.f32.mrb[0].mxu0
        %v1343 = vadd.f32 0.0, %v1342
        %v1344 = vpop.f32.mrb[0].mxu0
        %v1345 = vadd.f32 0.0, %v1344
        %v1346 = vpop.f32.mrb[0].mxu0
        %v1347 = vadd.f32 0.0, %v1346
        %1348 = vdwg.mxu0
        %1349 = vmatprep.subr.bf16.mxu0 %v1165
        %1350 = vmatpush1.bf16.msra.mxu0 %v1164
        %1351 = vmatprep.subr.bf16.mxu0 %v1174
        %1352 = vmatpush1.bf16.msra.mxu0 %v1173
        %1353 = vmatprep.subr.bf16.mxu0 %v1183
        %1354 = vmatpush1.bf16.msra.mxu0 %v1182
        %1355 = vmatprep.subr.bf16.mxu0 %v1192
        %1356 = vmatpush1.bf16.msra.mxu0 %v1191
        %1357 = vmatprep.subr.bf16.mxu0 %v1201
        %1358 = vmatpush1.bf16.msra.mxu0 %v1200
        %1359 = vmatprep.subr.bf16.mxu0 %v1210
        %1360 = vmatpush1.bf16.msra.mxu0 %v1209
        %1361 = vmatprep.subr.bf16.mxu0 %v1219
        %1362 = vmatpush1.bf16.msra.mxu0 %v1218
        %1363 = vmatprep.subr.bf16.mxu0 %v1228
        %1364 = vmatpush1.bf16.msra.mxu0 %v1227
        %1365 = vmatprep.subr.bf16.mxu0 0
        %1366 = vmatpush1.bf16.msra.mxu0 0
        %1367 = vmatprep.subr.bf16.mxu0 0
        %1368 = vmatpush1.bf16.msra.mxu0 0
        %1369 = vmatprep.subr.bf16.mxu0 0
        %1370 = vmatpush1.bf16.msra.mxu0 0
        %1371 = vmatprep.subr.bf16.mxu0 0
        %1372 = vmatpush1.bf16.msra.mxu0 0
        %1373 = vmatprep.subr.bf16.mxu0 0
        %1374 = vmatpush1.bf16.msra.mxu0 0
        %1375 = vmatprep.subr.bf16.mxu0 0
        %1376 = vmatpush1.bf16.msra.mxu0 0
        %1377 = vmatprep.subr.bf16.mxu0 0
        %1378 = vmatpush1.bf16.msra.mxu0 0
        %1379 = vmatprep.subr.bf16.mxu0 0
        %1380 = vmatpush1.bf16.msra.mxu0 0
        %1381 = vmatprep.mubr.bf16.mxu0 0
        %1382 = vmatmul.mubr.bf16.gmra.mrb[0].mxu0 %v857
        %v1383 = vpop.f32.mrb[0].mxu0
        %v1384 = vadd.f32 0.0, %v1383
        %v1385 = vpop.f32.mrb[0].mxu0
        %v1386 = vadd.f32 0.0, %v1385
        %v1387 = vpop.f32.mrb[0].mxu0
        %v1388 = vadd.f32 0.0, %v1387
        %v1389 = vpop.f32.mrb[0].mxu0
        %v1390 = vadd.f32 0.0, %v1389
        %1391 = vdwg.mxu0
        %1392 = vmatprep.subr.bf16.mxu0 %v1167
        %1393 = vmatpush1.bf16.msra.mxu0 %v1166
        %1394 = vmatprep.subr.bf16.mxu0 %v1176
        %1395 = vmatpush1.bf16.msra.mxu0 %v1175
        %1396 = vmatprep.subr.bf16.mxu0 %v1185
        %1397 = vmatpush1.bf16.msra.mxu0 %v1184
        %1398 = vmatprep.subr.bf16.mxu0 %v1194
        %1399 = vmatpush1.bf16.msra.mxu0 %v1193
        %1400 = vmatprep.subr.bf16.mxu0 %v1203
        %1401 = vmatpush1.bf16.msra.mxu0 %v1202
        %1402 = vmatprep.subr.bf16.mxu0 %v1212
        %1403 = vmatpush1.bf16.msra.mxu0 %v1211
        %1404 = vmatprep.subr.bf16.mxu0 %v1221
        %1405 = vmatpush1.bf16.msra.mxu0 %v1220
        %1406 = vmatprep.subr.bf16.mxu0 %v1230
        %1407 = vmatpush1.bf16.msra.mxu0 %v1229
        %1408 = vmatprep.subr.bf16.mxu0 0
        %1409 = vmatpush1.bf16.msra.mxu0 0
        %1410 = vmatprep.subr.bf16.mxu0 0
        %1411 = vmatpush1.bf16.msra.mxu0 0
        %1412 = vmatprep.subr.bf16.mxu0 0
        %1413 = vmatpush1.bf16.msra.mxu0 0
        %1414 = vmatprep.subr.bf16.mxu0 0
        %1415 = vmatpush1.bf16.msra.mxu0 0
        %1416 = vmatprep.subr.bf16.mxu0 0
        %1417 = vmatpush1.bf16.msra.mxu0 0
        %1418 = vmatprep.subr.bf16.mxu0 0
        %1419 = vmatpush1.bf16.msra.mxu0 0
        %1420 = vmatprep.subr.bf16.mxu0 0
        %1421 = vmatpush1.bf16.msra.mxu0 0
        %1422 = vmatprep.subr.bf16.mxu0 0
        %1423 = vmatpush1.bf16.msra.mxu0 0
        %1424 = vmatprep.mubr.bf16.mxu0 0
        %1425 = vmatmul.mubr.bf16.gmra.mrb[0].mxu0 %v857
        %v1426 = vpop.f32.mrb[0].mxu0
        %v1427 = vadd.f32 0.0, %v1426
        %v1428 = vpop.f32.mrb[0].mxu0
        %v1429 = vadd.f32 0.0, %v1428
        %v1430 = vpop.f32.mrb[0].mxu0
        %v1431 = vadd.f32 0.0, %v1430
        %v1432 = vpop.f32.mrb[0].mxu0
        %v1433 = vadd.f32 0.0, %v1432
        %1434 = vdwg.mxu0
        %1435 = vmatprep.subr.bf16.mxu0 %v1169
        %1436 = vmatpush1.bf16.msra.mxu0 %v1168
        %1437 = vmatprep.subr.bf16.mxu0 %v1178
        %1438 = vmatpush1.bf16.msra.mxu0 %v1177
        %1439 = vmatprep.subr.bf16.mxu0 %v1187
        %1440 = vmatpush1.bf16.msra.mxu0 %v1186
        %1441 = vmatprep.subr.bf16.mxu0 %v1196
        %1442 = vmatpush1.bf16.msra.mxu0 %v1195
        %1443 = vmatprep.subr.bf16.mxu0 %v1205
        %1444 = vmatpush1.bf16.msra.mxu0 %v1204
        %1445 = vmatprep.subr.bf16.mxu0 %v1214
        %1446 = vmatpush1.bf16.msra.mxu0 %v1213
        %1447 = vmatprep.subr.bf16.mxu0 %v1223
        %1448 = vmatpush1.bf16.msra.mxu0 %v1222
        %1449 = vmatprep.subr.bf16.mxu0 %v1232
        %1450 = vmatpush1.bf16.msra.mxu0 %v1231
        %1451 = vmatprep.subr.bf16.mxu0 0
        %1452 = vmatpush1.bf16.msra.mxu0 0
        %1453 = vmatprep.subr.bf16.mxu0 0
        %1454 = vmatpush1.bf16.msra.mxu0 0
        %1455 = vmatprep.subr.bf16.mxu0 0
        %1456 = vmatpush1.bf16.msra.mxu0 0
        %1457 = vmatprep.subr.bf16.mxu0 0
        %1458 = vmatpush1.bf16.msra.mxu0 0
        %1459 = vmatprep.subr.bf16.mxu0 0
        %1460 = vmatpush1.bf16.msra.mxu0 0
        %1461 = vmatprep.subr.bf16.mxu0 0
        %1462 = vmatpush1.bf16.msra.mxu0 0
        %1463 = vmatprep.subr.bf16.mxu0 0
        %1464 = vmatpush1.bf16.msra.mxu0 0
        %1465 = vmatprep.subr.bf16.mxu0 0
        %1466 = vmatpush1.bf16.msra.mxu0 0
        %1467 = vmatprep.mubr.bf16.mxu0 0
        %1468 = vmatmul.mubr.bf16.gmra.mrb[0].mxu0 %v857
        %v1469 = vpop.f32.mrb[0].mxu0
        %v1470 = vadd.f32 0.0, %v1469
        %v1471 = vpop.f32.mrb[0].mxu0
        %v1472 = vadd.f32 0.0, %v1471
        %v1473 = vpop.f32.mrb[0].mxu0
        %v1474 = vadd.f32 0.0, %v1473
        %v1475 = vpop.f32.mrb[0].mxu0
        %v1476 = vadd.f32 0.0, %v1475
        %1477 = vdwg.mxu0
        %1478 = vmatprep.subr.bf16.mxu0 0
        %1479 = vmatpush1.bf16.msra.mxu0 %v1170
        %1480 = vmatprep.subr.bf16.mxu0 0
        %1481 = vmatpush1.bf16.msra.mxu0 %v1179
        %1482 = vmatprep.subr.bf16.mxu0 0
        %1483 = vmatpush1.bf16.msra.mxu0 %v1188
        %1484 = vmatprep.subr.bf16.mxu0 0
        %1485 = vmatpush1.bf16.msra.mxu0 %v1197
        %1486 = vmatprep.subr.bf16.mxu0 0
        %1487 = vmatpush1.bf16.msra.mxu0 %v1206
        %1488 = vmatprep.subr.bf16.mxu0 0
        %1489 = vmatpush1.bf16.msra.mxu0 %v1215
        %1490 = vmatprep.subr.bf16.mxu0 0
        %1491 = vmatpush1.bf16.msra.mxu0 %v1224
        %1492 = vmatprep.subr.bf16.mxu0 0
        %1493 = vmatpush1.bf16.msra.mxu0 %v1233
        %1494 = vmatprep.subr.bf16.mxu0 0
        %1495 = vmatpush1.bf16.msra.mxu0 0
        %1496 = vmatprep.subr.bf16.mxu0 0
        %1497 = vmatpush1.bf16.msra.mxu0 0
        %1498 = vmatprep.subr.bf16.mxu0 0
        %1499 = vmatpush1.bf16.msra.mxu0 0
        %1500 = vmatprep.subr.bf16.mxu0 0
        %1501 = vmatpush1.bf16.msra.mxu0 0
        %1502 = vmatprep.subr.bf16.mxu0 0
        %1503 = vmatpush1.bf16.msra.mxu0 0
        %1504 = vmatprep.subr.bf16.mxu0 0
        %1505 = vmatpush1.bf16.msra.mxu0 0
        %1506 = vmatprep.subr.bf16.mxu0 0
        %1507 = vmatpush1.bf16.msra.mxu0 0
        %1508 = vmatprep.subr.bf16.mxu0 0
        %1509 = vmatpush1.bf16.msra.mxu0 0
        %1510 = vmatprep.mubr.bf16.mxu0 0
        %1511 = vmatmul.mubr.bf16.gmra.mrb[0].mxu0 %v857
        %v1512 = vpop.f32.mrb[0].mxu0
        %v1513 = vadd.f32 0.0, %v1512
        %v1514 = vpop.f32.mrb[0].mxu0
        %v1515 = vpop.f32.mrb[0].mxu0
        %v1516 = vadd.f32 0.0, %v1515
        %v1517 = vpop.f32.mrb[0].mxu0
        %1518 = vdwg.mxu0
        %v1519 = vsel %vm773, %v1513, -inf
        %1520 = vmax.xlane.f32.xlu0 %v1519
        %v1521 = vpop.xlane.xlu0 %1520
        %v1522 = vsel %vm773, %v1516, -inf
        %1523 = vmax.xlane.f32.xlu0 %v1522
        %v1524 = vpop.xlane.xlu0 %1523
        %v1525 = vsub.f32 %v1513, %v1521
        %v1526 = vsub.f32 %v1516, %v1524
        %v1527 = vmul.f32 %v1525, 1.442695
        %v1528 = vpow.pop %v1527
        %v1529 = vmul.f32 %v1526, 1.442695
        %v1530 = vpow.pop %v1529
        %v1531 = vsel %vm773, %v1528, 0.0
        %1532 = vadd.xlane.f32.xlu0 %v1531
        %v1533 = vpop.xlane.xlu0 %1532
        %v1534 = vsel %vm773, %v1530, 0.0
        %1535 = vadd.xlane.f32.xlu0 %v1534
        %v1536 = vpop.xlane.xlu0 %1535
        %v1537 = vrcp.pop %v1533
        %v1538 = vrcp.pop %v1536
        %v1539 = vmul.f32 %v1528, %v1537
        %v1540 = vmul.f32 %v1530, %v1538
        %v1541 = vld [vmem:[%s4] sm:$0xff]
        %v1543 = vlaneseq
        %v1544 = vshrl.u32 %v1543, 7
        %v1545 = vsub.s32 0, %v1544
        %v1546 = vrot.slane %v1541, %v1545
        %v1547 = vlaneseq
        %v1548 = vshrl.u32 %v1547, 7
        %v1549 = vsub.s32 4, %v1548
        %v1550 = vrot.slane %v1541, %v1549
        %v1553 = vlaneseq
        %v1554 = vshrl.u32 %v1553, 7
        %v1555 = vsub.s32 0, %v1554
        %v1556 = vrot.slane %v1546, %v1555
        %v1557 = vlaneseq
        %v1558 = vshrl.u32 %v1557, 7
        %v1559 = vsub.s32 0, %v1558
        %v1560 = vrot.slane %v1550, %v1559
        %v1561 = vsub.f32 %v1341, %v1556
        %v1562 = vsub.f32 %v1343, %v1560
        %v1563 = vsub.f32 %v1345, %v1556
        %v1564 = vsub.f32 %v1347, %v1560
        %1566 = vset.pattern.permute.xlu0 0
        %1567 = vperm.xlu0 %1566, %v1539
        %v1568 = vpop.permute.xlu0 %1567
        %1571 = vset.pattern.permute.xlu0 0
        %1572 = vperm.xlu0 %1571, %v1540
        %v1573 = vpop.permute.xlu0 %1572
        %v1575 = vmul.f32 %v1568, %v1561
        %v1576 = vmul.f32 %v1568, %v1562
        %v1577 = vmul.f32 %v1573, %v1563
        %v1578 = vmul.f32 %v1573, %v1564
        %v1579 = vlaneseq
        %v1580 = vshrl.u32 %v1579, 7
        %v1581 = vsub.s32 1, %v1580
        %v1582 = vrot.slane %v1541, %v1581
        %v1583 = vlaneseq
        %v1584 = vshrl.u32 %v1583, 7
        %v1585 = vsub.s32 5, %v1584
        %v1586 = vrot.slane %v1541, %v1585
        %v1589 = vlaneseq
        %v1590 = vshrl.u32 %v1589, 7
        %v1591 = vsub.s32 1, %v1590
        %v1592 = vrot.slane %v1582, %v1591
        %v1593 = vlaneseq
        %v1594 = vshrl.u32 %v1593, 7
        %v1595 = vsub.s32 1, %v1594
        %v1596 = vrot.slane %v1586, %v1595
        %v1597 = vsub.f32 %v1384, %v1592
        %v1598 = vsub.f32 %v1386, %v1596
        %v1599 = vsub.f32 %v1388, %v1592
        %v1600 = vsub.f32 %v1390, %v1596
        %1601 = vset.pattern.permute.xlu0 1
        %1602 = vperm.xlu0 %1601, %v1539
        %v1603 = vpop.permute.xlu0 %1602
        %1605 = vset.pattern.permute.xlu0 1
        %1606 = vperm.xlu0 %1605, %v1540
        %v1607 = vpop.permute.xlu0 %1606
        %v1609 = vmul.f32 %v1603, %v1597
        %v1610 = vmul.f32 %v1603, %v1598
        %v1611 = vmul.f32 %v1607, %v1599
        %v1612 = vmul.f32 %v1607, %v1600
        %v1613 = vadd.f32 %v1575, %v1609
        %v1614 = vadd.f32 %v1576, %v1610
        %v1615 = vadd.f32 %v1577, %v1611
        %v1616 = vadd.f32 %v1578, %v1612
        %v1617 = vlaneseq
        %v1618 = vshrl.u32 %v1617, 7
        %v1619 = vsub.s32 2, %v1618
        %v1620 = vrot.slane %v1541, %v1619
        %v1621 = vlaneseq
        %v1622 = vshrl.u32 %v1621, 7
        %v1623 = vsub.s32 6, %v1622
        %v1624 = vrot.slane %v1541, %v1623
        %v1627 = vlaneseq
        %v1628 = vshrl.u32 %v1627, 7
        %v1629 = vsub.s32 2, %v1628
        %v1630 = vrot.slane %v1620, %v1629
        %v1631 = vlaneseq
        %v1632 = vshrl.u32 %v1631, 7
        %v1633 = vsub.s32 2, %v1632
        %v1634 = vrot.slane %v1624, %v1633
        %v1635 = vsub.f32 %v1427, %v1630
        %v1636 = vsub.f32 %v1429, %v1634
        %v1637 = vsub.f32 %v1431, %v1630
        %v1638 = vsub.f32 %v1433, %v1634
        %1639 = vset.pattern.permute.xlu0 2
        %1640 = vperm.xlu0 %1639, %v1539
        %v1641 = vpop.permute.xlu0 %1640
        %1643 = vset.pattern.permute.xlu0 2
        %1644 = vperm.xlu0 %1643, %v1540
        %v1645 = vpop.permute.xlu0 %1644
        %v1647 = vmul.f32 %v1641, %v1635
        %v1648 = vmul.f32 %v1641, %v1636
        %v1649 = vmul.f32 %v1645, %v1637
        %v1650 = vmul.f32 %v1645, %v1638
        %v1651 = vadd.f32 %v1613, %v1647
        %v1652 = vadd.f32 %v1614, %v1648
        %v1653 = vadd.f32 %v1615, %v1649
        %v1654 = vadd.f32 %v1616, %v1650
        %v1655 = vlaneseq
        %v1656 = vshrl.u32 %v1655, 7
        %v1657 = vsub.s32 3, %v1656
        %v1658 = vrot.slane %v1541, %v1657
        %v1659 = vlaneseq
        %v1660 = vshrl.u32 %v1659, 7
        %v1661 = vsub.s32 7, %v1660
        %v1662 = vrot.slane %v1541, %v1661
        %v1665 = vlaneseq
        %v1666 = vshrl.u32 %v1665, 7
        %v1667 = vsub.s32 3, %v1666
        %v1668 = vrot.slane %v1658, %v1667
        %v1669 = vlaneseq
        %v1670 = vshrl.u32 %v1669, 7
        %v1671 = vsub.s32 3, %v1670
        %v1672 = vrot.slane %v1662, %v1671
        %v1673 = vsub.f32 %v1470, %v1668
        %v1674 = vsub.f32 %v1472, %v1672
        %v1675 = vsub.f32 %v1474, %v1668
        %v1676 = vsub.f32 %v1476, %v1672
        %1677 = vset.pattern.permute.xlu0 3
        %1678 = vperm.xlu0 %1677, %v1539
        %v1679 = vpop.permute.xlu0 %1678
        %1681 = vset.pattern.permute.xlu0 3
        %1682 = vperm.xlu0 %1681, %v1540
        %v1683 = vpop.permute.xlu0 %1682
        %v1685 = vmul.f32 %v1679, %v1673
        %v1686 = vmul.f32 %v1679, %v1674
        %v1687 = vmul.f32 %v1683, %v1675
        %v1688 = vmul.f32 %v1683, %v1676
        %v1689 = vadd.f32 %v1651, %v1685
        %v1690 = vadd.f32 %v1652, %v1686
        %v1691 = vadd.f32 %v1653, %v1687
        %v1692 = vadd.f32 %v1654, %v1688
        %v1693 = vadd.f32 %v1689, %v276
        %v1694 = vadd.f32 %v1690, %v277
        %v1695 = vadd.f32 %v1691, %v278
        %v1696 = vadd.f32 %v1692, %v279
        %1697 = vst [vmem:[%s272] sm:$0xff] %v1693
        %1698 = vst [vmem:[%s272 + $0x8] sm:$0xff] %v1694
        %1699 = vst [vmem:[%s272 + $0x10] sm:$0xff] %v1695
        %1700 = vst [vmem:[%s272 + $0x18] sm:$0xff] %v1696
        %s1701 = sand.u32 %s141, 1
        %s1702 = scalar_lea.sflag [#allocation4], %s1701
        %s1703 = sand.u32 %s141, 1
        %s1704 = smul.addr %s1703, 32
        %s1705 = scalar_lea.vmem [#allocation8], %s1704
        // Predicated region
        $region53: #{tpu_custom_call.1} parent=39 // pred_check
          %p1706 = pneg %p151
        $region54: #{tpu_custom_call.1} parent=39 // pred_check_branch
          %1708 = sbr.rel (%p1706) target = $region56
        $region55: #{tpu_custom_call.1} parent=39 // pred_region
          %s1709 = smul.u32 2, %s23
          %s1711 = ssub.s32 512, 512
          %1712 = vsyncadd %s1702, %s1711
          %s1713 = smul.addr %s1709, 2
          %s1714 = smul.addr %s1713, 128
          %s1715 = scalar_lea.hbm %s5, %s1714
          %s1716 = sshll.u32 %s1705, 4
          %s1717 = int_to_ptr.vmem [resolvable:$true] %s1716
          %1722 = dma.vmem_to_hbm [thread:$0]  %s1717, 512, %s1715, %s1702, 256, 256, 16
        $region56: #{tpu_custom_call.1} parent=39 // pred_fallthru
          _
      $region40: #{tpu_custom_call.1} parent=5 // pred_fallthru
        _
      %p1723 = scmp.le.s32.totalorder 2, %s18
      // Predicated region
      $region57: #{tpu_custom_call.1} parent=5 // pred_check
        %p1724 = pneg %p1723
      $region58: #{tpu_custom_call.1} parent=5 // pred_check_branch
        %1726 = sbr.rel (%p1724) target = $region60
      $region59: #{tpu_custom_call.1} parent=5 // pred_region
        %s1727 = ssub.s32 %s18, 2
        // Predicated region
        $region61: #{tpu_custom_call.1} parent=59 // pred_check
          %p1728 = pneg %p157
        $region62: #{tpu_custom_call.1} parent=59 // pred_check_branch
          %1730 = sbr.rel (%p1728) target = $region64
        $region63: #{tpu_custom_call.1} parent=59 // pred_region
          %s1731 = sand.u32 %s142, 1
          %s1732 = scalar_lea.sflag [#allocation4], %s1731
          %s1733 = sand.u32 %s142, 1
          %s1734 = smul.addr %s1733, 32
          %s1735 = scalar_lea.vmem [#allocation8], %s1734
          %1736 = dma.done %s1732, 512
        $region64: #{tpu_custom_call.1} parent=59 // pred_fallthru
          _
      $region60: #{tpu_custom_call.1} parent=5 // pred_fallthru
        _
    $region6: #{tpu_custom_call.1} parent=1 // loop_footer
      %s22 = sadd.s32 1, %s18
    $region7: #{tpu_custom_call.1} parent=1 // loop_footer_branch
      %17 = sbr.rel target = $region3
    $region8: #{tpu_custom_call.1} parent=1 // loop_exit
      _
    %1737 = vsyncpa [#allocation3], 1
    %s1738 = scalar_lea.sflag [#allocation3], 1
    %1739 = vsyncpa %s1738, 1
    %1740 = vsyncpa [#allocation6], 1
    %1741 = vsyncpa [#allocation4], 1
    %s1742 = scalar_lea.sflag [#allocation4], 1
    %1743 = vsyncpa %s1742, 1

// kernel: tpu_custom_call.1
$region0: #{tpu_custom_call.1}
  #allocation0 [shape = 'u32[]', space=smem, size = 0x4, offset = 0x4, fixed_abs, tag = 'smem constant byte address 0x4 - core index']
  #allocation1 [shape = 'u32[144,128]{1,0:T(1,128)}', space=vmem, size = 0x12000, scoped, tag = 'internal scratch']
  %s0 = inlined_call_operand.hbm [shape: f32[32,256], index: 0, kind: input, shape index: {}]
  %s1 = inlined_call_operand.hbm [shape: bf16[256,512], index: 1, kind: input, shape index: {}]
  %s2 = inlined_call_operand.vmem [shape: f32[4,128], index: 2, kind: input, shape index: {}]
  %s3 = inlined_call_operand.hbm [shape: bf16[128,1152], index: 3, kind: input, shape index: {}]
  %s4 = inlined_call_operand.vmem [shape: f32[4,256], index: 4, kind: input, shape index: {}]
  %s5 = inlined_call_operand.hbm [shape: f32[32,256], index: 5, kind: output, shape index: {}]
  %s6 = sld [smem:[#allocation0]]
  $region65: #{tpu_custom_call.1} parent=0
    _
  %s8 = ssub.s32 1, %s6
  %s9 = scalar_select 0, %s8, %s6
  $region1: #{tpu_custom_call.1} parent=0
    #allocation2 [shape = 'u8[32768]{0}', space=vmem, size = 0x8000, scoped, tag = 'input window, operand 0']
    #allocation3 [shape = 's32[2]{0}', space=sflag, size = 0x8, scoped, tag = 'scoped memory for tpu_custom_call.1']
    #allocation4 [shape = 's32[2]{0}', space=sflag, size = 0x8, scoped, tag = 'scoped memory for tpu_custom_call.1']
    #allocation5 [shape = 'u8[262144]{0}', space=vmem, size = 0x40000, scoped, tag = 'input window, operand 1, single buffered']
    #allocation6 [shape = 's32[1]{0}', space=sflag, size = 0x4, scoped, tag = 'scoped memory for tpu_custom_call.1']
    #allocation7 [shape = 'u8[294912]{0}', space=vmem, size = 0x48000, scoped, tag = 'input window, operand 3, single buffered']
    #allocation8 [shape = 'u8[32768]{0}', space=vmem, size = 0x8000, scoped, tag = 'output window, operand 0']
    %10 = vsyncpa [#allocation3], 0
    %s11 = scalar_lea.sflag [#allocation3], 1
    %12 = vsyncpa %s11, 0
    %13 = vsyncpa [#allocation6], 0
    %14 = vsyncpa [#allocation4], 0
    %s15 = scalar_lea.sflag [#allocation4], 1
    %16 = vsyncpa %s15, 0
    loop: start=0, step=1, limit=4
    $region2: #{tpu_custom_call.1} parent=1 // loop_pre_header
      _
    $region3: #{tpu_custom_call.1} parent=1 // loop_header
      %s18 = sphi 0, %s22
      %p19 = scmp.ge.s32.totalorder %s18, 4
      %s28 = sphi 0, %s30
      %s31 = sphi 0, %s28
      %s32 = sphi 0, %s31
      %s48 = sphi 0, %s32
      %s52 = sphi 0, %s52
      %s54 = sphi 0, %s52
      %s55 = sphi 0, %s54
      %s69 = sphi 0, %s55
      %s73 = sphi 0, %s73
      %s75 = sphi 0, %s73
      %s76 = sphi 0, %s75
      %s90 = sphi 0, %s76
      %s94 = sphi 0, %s94
      %s96 = sphi 0, %s94
      %s97 = sphi 0, %s96
      %s111 = sphi 0, %s97
      %s115 = sphi 0, %s115
      %s117 = sphi 0, %s115
      %s118 = sphi 0, %s117
      %s132 = sphi 0, %s118
      %s138 = sphi 0, %s140
      %s141 = sphi 0, %s138
      %s142 = sphi 0, %s141
      %s158 = sphi 0, %s142
    $region4: #{tpu_custom_call.1} parent=1 // loop_header_branch
      %21 = sbr.rel (%p19) target = $region8
    $region5: #{tpu_custom_call.1} parent=1 // loop_body
      %s23 = ssub.s32 %s18, 1
      %s24 = ssub.s32 %s18, 2
      %s25 = sadd.s32 %s18, 1
      %s26 = ssub.s32 %s18, %s25
      %p27 = scmp.eq.s32.totalorder %s26, 0
      %s29 = sadd.s32 %s28, 1
      %s30 = scalar_select %p27, %s28, %s29
      %p33 = pneg %p27
      %p34 = scmp.eq.s32.totalorder %s18, 1
      %p35 = por %p33, %p34
      %p36 = scmp.ne.s32.totalorder %s28, %s31
      %p37 = scmp.eq.s32.totalorder %s18, 0
      %p38 = por %p36, %p37
      %p39 = scmp.ne.s32.totalorder %s28, %s31
      %p40 = scmp.eq.s32.totalorder %s23, 1
      %p41 = por %p39, %p40
      %p42 = scmp.ne.s32.totalorder %s31, %s32
      %p43 = scmp.eq.s32.totalorder %s23, 0
      %p44 = por %p42, %p43
      %p45 = scmp.ne.s32.totalorder %s31, %s32
      %p46 = scmp.eq.s32.totalorder %s24, 1
      %p47 = por %p45, %p46
      %p49 = scmp.ne.s32.totalorder %s32, %s48
      %p50 = scmp.eq.s32.totalorder %s24, 0
      %p51 = por %p49, %p50
      %s53 = sadd.s32 %s52, 1
      %p56 = scmp.eq.s32.totalorder %s18, 1
      %p57 = scmp.ne.s32.totalorder %s52, %s54
      %p58 = scmp.eq.s32.totalorder %s18, 0
      %p59 = por %p57, %p58
      %p60 = scmp.ne.s32.totalorder %s52, %s54
      %p61 = scmp.eq.s32.totalorder %s23, 1
      %p62 = por %p60, %p61
      %p63 = scmp.ne.s32.totalorder %s54, %s55
      %p64 = scmp.eq.s32.totalorder %s23, 0
      %p65 = por %p63, %p64
      %p66 = scmp.ne.s32.totalorder %s54, %s55
      %p67 = scmp.eq.s32.totalorder %s24, 1
      %p68 = por %p66, %p67
      %p70 = scmp.ne.s32.totalorder %s55, %s69
      %p71 = scmp.eq.s32.totalorder %s24, 0
      %p72 = por %p70, %p71
      %s74 = sadd.s32 %s73, 1
      %p77 = scmp.eq.s32.totalorder %s18, 1
      %p78 = scmp.ne.s32.totalorder %s73, %s75
      %p79 = scmp.eq.s32.totalorder %s18, 0
      %p80 = por %p78, %p79
      %p81 = scmp.ne.s32.totalorder %s73, %s75
      %p82 = scmp.eq.s32.totalorder %s23, 1
      %p83 = por %p81, %p82
      %p84 = scmp.ne.s32.totalorder %s75, %s76
      %p85 = scmp.eq.s32.totalorder %s23, 0
      %p86 = por %p84, %p85
      %p87 = scmp.ne.s32.totalorder %s75, %s76
      %p88 = scmp.eq.s32.totalorder %s24, 1
      %p89 = por %p87, %p88
      %p91 = scmp.ne.s32.totalorder %s76, %s90
      %p92 = scmp.eq.s32.totalorder %s24, 0
      %p93 = por %p91, %p92
      %s95 = sadd.s32 %s94, 1
      %p98 = scmp.eq.s32.totalorder %s18, 1
      %p99 = scmp.ne.s32.totalorder %s94, %s96
      %p100 = scmp.eq.s32.totalorder %s18, 0
      %p101 = por %p99, %p100
      %p102 = scmp.ne.s32.totalorder %s94, %s96
      %p103 = scmp.eq.s32.totalorder %s23, 1
      %p104 = por %p102, %p103
      %p105 = scmp.ne.s32.totalorder %s96, %s97
      %p106 = scmp.eq.s32.totalorder %s23, 0
      %p107 = por %p105, %p106
      %p108 = scmp.ne.s32.totalorder %s96, %s97
      %p109 = scmp.eq.s32.totalorder %s24, 1
      %p110 = por %p108, %p109
      %p112 = scmp.ne.s32.totalorder %s97, %s111
      %p113 = scmp.eq.s32.totalorder %s24, 0
      %p114 = por %p112, %p113
      %s116 = sadd.s32 %s115, 1
      %p119 = scmp.eq.s32.totalorder %s18, 1
      %p120 = scmp.ne.s32.totalorder %s115, %s117
      %p121 = scmp.eq.s32.totalorder %s18, 0
      %p122 = por %p120, %p121
      %p123 = scmp.ne.s32.totalorder %s115, %s117
      %p124 = scmp.eq.s32.totalorder %s23, 1
      %p125 = por %p123, %p124
      %p126 = scmp.ne.s32.totalorder %s117, %s118
      %p127 = scmp.eq.s32.totalorder %s23, 0
      %p128 = por %p126, %p127
      %p129 = scmp.ne.s32.totalorder %s117, %s118
      %p130 = scmp.eq.s32.totalorder %s24, 1
      %p131 = por %p129, %p130
      %p133 = scmp.ne.s32.totalorder %s118, %s132
      %p134 = scmp.eq.s32.totalorder %s24, 0
      %p135 = por %p133, %p134
      %s136 = ssub.s32 %s18, %s25
      %p137 = scmp.eq.s32.totalorder %s136, 0
      %s139 = sadd.s32 %s138, 1
      %s140 = scalar_select %p137, %s138, %s139
      %p143 = pneg %p137
      %p144 = scmp.eq.s32.totalorder %s18, 1
      %p145 = por %p143, %p144
      %p146 = scmp.ne.s32.totalorder %s138, %s141
      %p147 = scmp.eq.s32.totalorder %s18, 0
      %p148 = por %p146, %p147
      %p149 = scmp.ne.s32.totalorder %s138, %s141
      %p150 = scmp.eq.s32.totalorder %s23, 1
      %p151 = por %p149, %p150
      %p152 = scmp.ne.s32.totalorder %s141, %s142
      %p153 = scmp.eq.s32.totalorder %s23, 0
      %p154 = por %p152, %p153
      %p155 = scmp.ne.s32.totalorder %s141, %s142
      %p156 = scmp.eq.s32.totalorder %s24, 1
      %p157 = por %p155, %p156
      %p159 = scmp.ne.s32.totalorder %s142, %s158
      %p160 = scmp.eq.s32.totalorder %s24, 0
      %p161 = por %p159, %p160
      %p162 = scmp.le.s32.totalorder 1, %s18
      %p163 = scmp.lt.s32.totalorder %s18, 3
      %p164 = pnand %p162, %p163
      %p165 = pneg %p164
      // Predicated region
      $region9: #{tpu_custom_call.1} parent=5 // pred_check
        _
      $region10: #{tpu_custom_call.1} parent=5 // pred_check_branch
        %167 = sbr.rel (%p164) target = $region12
      $region11: #{tpu_custom_call.1} parent=5 // pred_region
        %s168 = ssub.s32 %s18, 1
        // Predicated region
        $region13: #{tpu_custom_call.1} parent=11 // pred_check
          %p169 = pneg %p65
        $region14: #{tpu_custom_call.1} parent=11 // pred_check_branch
          %171 = sbr.rel (%p169) target = $region16
        $region15: #{tpu_custom_call.1} parent=11 // pred_region
          %s173 = ssub.s32 8192, 8192
          %174 = vsyncadd [#allocation6], %s173
          %s175 = sshll.u32 [#allocation5], 4
          %s176 = int_to_ptr.vmem [resolvable:$true] %s175
          %181 = dma.hbm_to_vmem [thread:$0]  %s1, 8192, %s176, [#allocation6], 256, 256, 16
        $region16: #{tpu_custom_call.1} parent=11 // pred_fallthru
          _
        // Predicated region
        $region17: #{tpu_custom_call.1} parent=11 // pred_check
          %p182 = pneg %p86
        $region18: #{tpu_custom_call.1} parent=11 // pred_check_branch
          %184 = sbr.rel (%p182) target = $region20
        $region19: #{tpu_custom_call.1} parent=11 // pred_region
          _
        $region20: #{tpu_custom_call.1} parent=11 // pred_fallthru
          _
        // Predicated region
        $region21: #{tpu_custom_call.1} parent=11 // pred_check
          %p185 = pneg %p107
        $region22: #{tpu_custom_call.1} parent=11 // pred_check_branch
          %187 = sbr.rel (%p185) target = $region24
        $region23: #{tpu_custom_call.1} parent=11 // pred_region
          %s189 = ssub.s32 9216, 9216
          %190 = vsyncadd [#allocation6], %s189
          %s191 = sshll.u32 [#allocation7], 4
          %s192 = int_to_ptr.vmem [resolvable:$true] %s191
          %197 = dma.hbm_to_vmem [thread:$0]  %s3, 9216, %s192, [#allocation6], 576, 576, 36
        $region24: #{tpu_custom_call.1} parent=11 // pred_fallthru
          _
        // Predicated region
        $region25: #{tpu_custom_call.1} parent=11 // pred_check
          %p198 = pneg %p128
        $region26: #{tpu_custom_call.1} parent=11 // pred_check_branch
          %200 = sbr.rel (%p198) target = $region28
        $region27: #{tpu_custom_call.1} parent=11 // pred_region
          _
        $region28: #{tpu_custom_call.1} parent=11 // pred_fallthru
          _
      $region12: #{tpu_custom_call.1} parent=5 // pred_fallthru
        _
      %p201 = scmp.lt.s32.totalorder %s18, 2
      // Predicated region
      $region29: #{tpu_custom_call.1} parent=5 // pred_check
        %p202 = pneg %p201
      $region30: #{tpu_custom_call.1} parent=5 // pred_check_branch
        %204 = sbr.rel (%p202) target = $region32
      $region31: #{tpu_custom_call.1} parent=5 // pred_region
        // Predicated region
        $region33: #{tpu_custom_call.1} parent=31 // pred_check
          %p205 = pneg %p38
        $region34: #{tpu_custom_call.1} parent=31 // pred_check_branch
          %207 = sbr.rel (%p205) target = $region36
        $region35: #{tpu_custom_call.1} parent=31 // pred_region
          %s208 = sand.u32 %s28, 1
          %s209 = scalar_lea.sflag [#allocation3], %s208
          %s210 = sand.u32 %s28, 1
          %s211 = smul.addr %s210, 32
          %s212 = scalar_lea.vmem [#allocation2], %s211
          %s213 = smul.u32 2, %s18
          %s215 = ssub.s32 512, 512
          %216 = vsyncadd %s209, %s215
          %s217 = smul.addr %s213, 2
          %s218 = smul.addr %s217, 128
          %s219 = scalar_lea.hbm %s0, %s218
          %s220 = sshll.u32 %s212, 4
          %s221 = int_to_ptr.vmem [resolvable:$true] %s220
          %226 = dma.hbm_to_vmem [thread:$0]  %s219, 512, %s221, %s209, 256, 256, 16
        $region36: #{tpu_custom_call.1} parent=31 // pred_fallthru
          _
      $region32: #{tpu_custom_call.1} parent=5 // pred_fallthru
        _
      %p227 = scmp.le.s32.totalorder 1, %s18
      %p228 = scmp.lt.s32.totalorder %s18, 3
      %p229 = pnand %p227, %p228
      %p230 = pneg %p229
      // Predicated region
      $region37: #{tpu_custom_call.1} parent=5 // pred_check
        _
      $region38: #{tpu_custom_call.1} parent=5 // pred_check_branch
        %232 = sbr.rel (%p229) target = $region40
      $region39: #{tpu_custom_call.1} parent=5 // pred_region
        %s233 = ssub.s32 %s18, 1
        %s234 = sand.u32 %s31, 1
        %s235 = scalar_lea.sflag [#allocation3], %s234
        %s236 = sand.u32 %s31, 1
        %s237 = smul.addr %s236, 32
        %s238 = scalar_lea.vmem [#allocation2], %s237
        // Predicated region
        $region41: #{tpu_custom_call.1} parent=39 // pred_check
          %p239 = pneg %p44
        $region42: #{tpu_custom_call.1} parent=39 // pred_check_branch
          %241 = sbr.rel (%p239) target = $region44
        $region43: #{tpu_custom_call.1} parent=39 // pred_region
          %242 = dma.done %s235, 512
        $region44: #{tpu_custom_call.1} parent=39 // pred_fallthru
          _
        // Predicated region
        $region45: #{tpu_custom_call.1} parent=39 // pred_check
          %p243 = pneg %p65
        $region46: #{tpu_custom_call.1} parent=39 // pred_check_branch
          %245 = sbr.rel (%p243) target = $region48
        $region47: #{tpu_custom_call.1} parent=39 // pred_region
          %246 = dma.done [#allocation6], 8192
        $region48: #{tpu_custom_call.1} parent=39 // pred_fallthru
          _
        // Predicated region
        $region49: #{tpu_custom_call.1} parent=39 // pred_check
          %p247 = pneg %p107
        $region50: #{tpu_custom_call.1} parent=39 // pred_check_branch
          %249 = sbr.rel (%p247) target = $region52
        $region51: #{tpu_custom_call.1} parent=39 // pred_region
          %250 = dma.done [#allocation6], 9216
        $region52: #{tpu_custom_call.1} parent=39 // pred_fallthru
          _
        %s251 = sand.u32 %s31, 1
        %s252 = scalar_lea.sflag [#allocation3], %s251
        %s253 = sand.u32 %s31, 1
        %s254 = smul.addr %s253, 32
        %s255 = scalar_lea.vmem [#allocation2], %s254
        %p256 = pneg %p44
        %p257 = pneg %p41
        %p258 = pneg %p65
        %p259 = pneg %p62
        %p260 = pneg %p86
        %p261 = pneg %p83
        %p262 = pneg %p107
        %p263 = pneg %p104
        %p264 = pneg %p128
        %p265 = pneg %p125
        %p266 = pneg %p154
        %p267 = pneg %p151
        %s268 = sand.u32 %s141, 1
        %s269 = scalar_lea.sflag [#allocation4], %s268
        %s270 = sand.u32 %s141, 1
        %s271 = smul.addr %s270, 32
        %s272 = scalar_lea.vmem [#allocation8], %s271
        %s273 = smul.u32 2, %s23
        %s274 = smul.u32 2, %s23
        %v276 = vld [vmem:[%s238] sm:$0xff]
        %v277 = vld [vmem:[%s238 + $0x8] sm:$0xff]
        %v278 = vld [vmem:[%s238 + $0x10] sm:$0xff]
        %v279 = vld [vmem:[%s238 + $0x18] sm:$0xff]
        %v280 = vpack.c.bf16 %v278, %v276
        %v281 = vpack.c.bf16 %v279, %v277
        %v282 = vld [vmem:[#allocation5] sm:$0xff]
        %v283 = vld [vmem:[#allocation5 + $0x8] sm:$0xff]
        %v284 = vld [vmem:[#allocation5 + $0x10] sm:$0xff]
        %v285 = vld [vmem:[#allocation5 + $0x18] sm:$0xff]
        %v286 = vld [vmem:[#allocation5 + $0x20] sm:$0xff]
        %v287 = vld [vmem:[#allocation5 + $0x28] sm:$0xff]
        %v288 = vld [vmem:[#allocation5 + $0x30] sm:$0xff]
        %v289 = vld [vmem:[#allocation5 + $0x38] sm:$0xff]
        %v290 = vld [vmem:[#allocation5 + $0x40] sm:$0xff]
        %v291 = vld [vmem:[#allocation5 + $0x48] sm:$0xff]
        %v292 = vld [vmem:[#allocation5 + $0x50] sm:$0xff]
        %v293 = vld [vmem:[#allocation5 + $0x58] sm:$0xff]
        %v294 = vld [vmem:[#allocation5 + $0x60] sm:$0xff]
        %v295 = vld [vmem:[#allocation5 + $0x68] sm:$0xff]
        %v296 = vld [vmem:[#allocation5 + $0x70] sm:$0xff]
        %v297 = vld [vmem:[#allocation5 + $0x78] sm:$0xff]
        %v298 = vld [vmem:[#allocation5 + $0x80] sm:$0xff]
        %v299 = vld [vmem:[#allocation5 + $0x88] sm:$0xff]
        %v300 = vld [vmem:[#allocation5 + $0x90] sm:$0xff]
        %v301 = vld [vmem:[#allocation5 + $0x98] sm:$0xff]
        %v302 = vld [vmem:[#allocation5 + $0xa0] sm:$0xff]
        %v303 = vld [vmem:[#allocation5 + $0xa8] sm:$0xff]
        %v304 = vld [vmem:[#allocation5 + $0xb0] sm:$0xff]
        %v305 = vld [vmem:[#allocation5 + $0xb8] sm:$0xff]
        %v306 = vld [vmem:[#allocation5 + $0xc0] sm:$0xff]
        %v307 = vld [vmem:[#allocation5 + $0xc8] sm:$0xff]
        %v308 = vld [vmem:[#allocation5 + $0xd0] sm:$0xff]
        %v309 = vld [vmem:[#allocation5 + $0xd8] sm:$0xff]
        %v310 = vld [vmem:[#allocation5 + $0xe0] sm:$0xff]
        %v311 = vld [vmem:[#allocation5 + $0xe8] sm:$0xff]
        %v312 = vld [vmem:[#allocation5 + $0xf0] sm:$0xff]
        %v313 = vld [vmem:[#allocation5 + $0xf8] sm:$0xff]
        %v314 = vld [vmem:[#allocation5 + $0x100] sm:$0xff]
        %v315 = vld [vmem:[#allocation5 + $0x108] sm:$0xff]
        %v316 = vld [vmem:[#allocation5 + $0x110] sm:$0xff]
        %v317 = vld [vmem:[#allocation5 + $0x118] sm:$0xff]
        %v318 = vld [vmem:[#allocation5 + $0x120] sm:$0xff]
        %v319 = vld [vmem:[#allocation5 + $0x128] sm:$0xff]
        %v320 = vld [vmem:[#allocation5 + $0x130] sm:$0xff]
        %v321 = vld [vmem:[#allocation5 + $0x138] sm:$0xff]
        %v322 = vld [vmem:[#allocation5 + $0x140] sm:$0xff]
        %v323 = vld [vmem:[#allocation5 + $0x148] sm:$0xff]
        %v324 = vld [vmem:[#allocation5 + $0x150] sm:$0xff]
        %v325 = vld [vmem:[#allocation5 + $0x158] sm:$0xff]
        %v326 = vld [vmem:[#allocation5 + $0x160] sm:$0xff]
        %v327 = vld [vmem:[#allocation5 + $0x168] sm:$0xff]
        %v328 = vld [vmem:[#allocation5 + $0x170] sm:$0xff]
        %v329 = vld [vmem:[#allocation5 + $0x178] sm:$0xff]
        %v330 = vld [vmem:[#allocation5 + $0x180] sm:$0xff]
        %v331 = vld [vmem:[#allocation5 + $0x188] sm:$0xff]
        %v332 = vld [vmem:[#allocation5 + $0x190] sm:$0xff]
        %v333 = vld [vmem:[#allocation5 + $0x198] sm:$0xff]
        %v334 = vld [vmem:[#allocation5 + $0x1a0] sm:$0xff]
        %v335 = vld [vmem:[#allocation5 + $0x1a8] sm:$0xff]
        %v336 = vld [vmem:[#allocation5 + $0x1b0] sm:$0xff]
        %v337 = vld [vmem:[#allocation5 + $0x1b8] sm:$0xff]
        %v338 = vld [vmem:[#allocation5 + $0x1c0] sm:$0xff]
        %v339 = vld [vmem:[#allocation5 + $0x1c8] sm:$0xff]
        %v340 = vld [vmem:[#allocation5 + $0x1d0] sm:$0xff]
        %v341 = vld [vmem:[#allocation5 + $0x1d8] sm:$0xff]
        %v342 = vld [vmem:[#allocation5 + $0x1e0] sm:$0xff]
        %v343 = vld [vmem:[#allocation5 + $0x1e8] sm:$0xff]
        %v344 = vld [vmem:[#allocation5 + $0x1f0] sm:$0xff]
        %v345 = vld [vmem:[#allocation5 + $0x1f8] sm:$0xff]
        %v410 = vunpack.c.l.b16 %v282
        %v411 = vunpack.c.h.b16 %v282
        %v412 = vunpack.c.l.b16 %v283
        %v413 = vunpack.c.h.b16 %v283
        %v414 = vunpack.c.l.b16 %v284
        %v415 = vunpack.c.h.b16 %v284
        %v416 = vunpack.c.l.b16 %v285
        %v417 = vunpack.c.h.b16 %v285
        %v418 = vunpack.c.l.b16 %v286
        %v419 = vunpack.c.h.b16 %v286
        %v420 = vunpack.c.l.b16 %v287
        %v421 = vunpack.c.h.b16 %v287
        %v422 = vunpack.c.l.b16 %v288
        %v423 = vunpack.c.h.b16 %v288
        %v424 = vunpack.c.l.b16 %v289
        %v425 = vunpack.c.h.b16 %v289
        %v426 = vunpack.c.l.b16 %v290
        %v427 = vunpack.c.h.b16 %v290
        %v428 = vunpack.c.l.b16 %v291
        %v429 = vunpack.c.h.b16 %v291
        %v430 = vunpack.c.l.b16 %v292
        %v431 = vunpack.c.h.b16 %v292
        %v432 = vunpack.c.l.b16 %v293
        %v433 = vunpack.c.h.b16 %v293
        %v434 = vunpack.c.l.b16 %v294
        %v435 = vunpack.c.h.b16 %v294
        %v436 = vunpack.c.l.b16 %v295
        %v437 = vunpack.c.h.b16 %v295
        %v438 = vunpack.c.l.b16 %v296
        %v439 = vunpack.c.h.b16 %v296
        %v440 = vunpack.c.l.b16 %v297
        %v441 = vunpack.c.h.b16 %v297
        %v442 = vunpack.c.l.b16 %v298
        %v443 = vunpack.c.h.b16 %v298
        %v444 = vunpack.c.l.b16 %v299
        %v445 = vunpack.c.h.b16 %v299
        %v446 = vunpack.c.l.b16 %v300
        %v447 = vunpack.c.h.b16 %v300
        %v448 = vunpack.c.l.b16 %v301
        %v449 = vunpack.c.h.b16 %v301
        %v450 = vunpack.c.l.b16 %v302
        %v451 = vunpack.c.h.b16 %v302
        %v452 = vunpack.c.l.b16 %v303
        %v453 = vunpack.c.h.b16 %v303
        %v454 = vunpack.c.l.b16 %v304
        %v455 = vunpack.c.h.b16 %v304
        %v456 = vunpack.c.l.b16 %v305
        %v457 = vunpack.c.h.b16 %v305
        %v458 = vunpack.c.l.b16 %v306
        %v459 = vunpack.c.h.b16 %v306
        %v460 = vunpack.c.l.b16 %v307
        %v461 = vunpack.c.h.b16 %v307
        %v462 = vunpack.c.l.b16 %v308
        %v463 = vunpack.c.h.b16 %v308
        %v464 = vunpack.c.l.b16 %v309
        %v465 = vunpack.c.h.b16 %v309
        %v466 = vunpack.c.l.b16 %v310
        %v467 = vunpack.c.h.b16 %v310
        %v468 = vunpack.c.l.b16 %v311
        %v469 = vunpack.c.h.b16 %v311
        %v470 = vunpack.c.l.b16 %v312
        %v471 = vunpack.c.h.b16 %v312
        %v472 = vunpack.c.l.b16 %v313
        %v473 = vunpack.c.h.b16 %v313
        %v474 = vunpack.c.l.b16 %v314
        %v475 = vunpack.c.h.b16 %v314
        %v476 = vunpack.c.l.b16 %v315
        %v477 = vunpack.c.h.b16 %v315
        %v478 = vunpack.c.l.b16 %v316
        %v479 = vunpack.c.h.b16 %v316
        %v480 = vunpack.c.l.b16 %v317
        %v481 = vunpack.c.h.b16 %v317
        %v482 = vunpack.c.l.b16 %v318
        %v483 = vunpack.c.h.b16 %v318
        %v484 = vunpack.c.l.b16 %v319
        %v485 = vunpack.c.h.b16 %v319
        %v486 = vunpack.c.l.b16 %v320
        %v487 = vunpack.c.h.b16 %v320
        %v488 = vunpack.c.l.b16 %v321
        %v489 = vunpack.c.h.b16 %v321
        %v490 = vunpack.c.l.b16 %v322
        %v491 = vunpack.c.h.b16 %v322
        %v492 = vunpack.c.l.b16 %v323
        %v493 = vunpack.c.h.b16 %v323
        %v494 = vunpack.c.l.b16 %v324
        %v495 = vunpack.c.h.b16 %v324
        %v496 = vunpack.c.l.b16 %v325
        %v497 = vunpack.c.h.b16 %v325
        %v498 = vunpack.c.l.b16 %v326
        %v499 = vunpack.c.h.b16 %v326
        %v500 = vunpack.c.l.b16 %v327
        %v501 = vunpack.c.h.b16 %v327
        %v502 = vunpack.c.l.b16 %v328
        %v503 = vunpack.c.h.b16 %v328
        %v504 = vunpack.c.l.b16 %v329
        %v505 = vunpack.c.h.b16 %v329
        %v506 = vunpack.c.l.b16 %v330
        %v507 = vunpack.c.h.b16 %v330
        %v508 = vunpack.c.l.b16 %v331
        %v509 = vunpack.c.h.b16 %v331
        %v510 = vunpack.c.l.b16 %v332
        %v511 = vunpack.c.h.b16 %v332
        %v512 = vunpack.c.l.b16 %v333
        %v513 = vunpack.c.h.b16 %v333
        %v514 = vunpack.c.l.b16 %v334
        %v515 = vunpack.c.h.b16 %v334
        %v516 = vunpack.c.l.b16 %v335
        %v517 = vunpack.c.h.b16 %v335
        %v518 = vunpack.c.l.b16 %v336
        %v519 = vunpack.c.h.b16 %v336
        %v520 = vunpack.c.l.b16 %v337
        %v521 = vunpack.c.h.b16 %v337
        %v522 = vunpack.c.l.b16 %v338
        %v523 = vunpack.c.h.b16 %v338
        %v524 = vunpack.c.l.b16 %v339
        %v525 = vunpack.c.h.b16 %v339
        %v526 = vunpack.c.l.b16 %v340
        %v527 = vunpack.c.h.b16 %v340
        %v528 = vunpack.c.l.b16 %v341
        %v529 = vunpack.c.h.b16 %v341
        %v530 = vunpack.c.l.b16 %v342
        %v531 = vunpack.c.h.b16 %v342
        %v532 = vunpack.c.l.b16 %v343
        %v533 = vunpack.c.h.b16 %v343
        %v534 = vunpack.c.l.b16 %v344
        %v535 = vunpack.c.h.b16 %v344
        %v536 = vunpack.c.l.b16 %v345
        %v537 = vunpack.c.h.b16 %v345
        %v538 = vpack.c.b16 %v414, %v410
        %v539 = vpack.c.b16 %v415, %v411
        %v540 = vpack.c.b16 %v416, %v412
        %v541 = vpack.c.b16 %v417, %v413
        %v542 = vpack.c.b16 %v422, %v418
        %v543 = vpack.c.b16 %v423, %v419
        %v544 = vpack.c.b16 %v424, %v420
        %v545 = vpack.c.b16 %v425, %v421
        %v546 = vpack.c.b16 %v430, %v426
        %v547 = vpack.c.b16 %v431, %v427
        %v548 = vpack.c.b16 %v432, %v428
        %v549 = vpack.c.b16 %v433, %v429
        %v550 = vpack.c.b16 %v438, %v434
        %v551 = vpack.c.b16 %v439, %v435
        %v552 = vpack.c.b16 %v440, %v436
        %v553 = vpack.c.b16 %v441, %v437
        %v554 = vpack.c.b16 %v446, %v442
        %v555 = vpack.c.b16 %v447, %v443
        %v556 = vpack.c.b16 %v448, %v444
        %v557 = vpack.c.b16 %v449, %v445
        %v558 = vpack.c.b16 %v454, %v450
        %v559 = vpack.c.b16 %v455, %v451
        %v560 = vpack.c.b16 %v456, %v452
        %v561 = vpack.c.b16 %v457, %v453
        %v562 = vpack.c.b16 %v462, %v458
        %v563 = vpack.c.b16 %v463, %v459
        %v564 = vpack.c.b16 %v464, %v460
        %v565 = vpack.c.b16 %v465, %v461
        %v566 = vpack.c.b16 %v470, %v466
        %v567 = vpack.c.b16 %v471, %v467
        %v568 = vpack.c.b16 %v472, %v468
        %v569 = vpack.c.b16 %v473, %v469
        %v570 = vpack.c.b16 %v478, %v474
        %v571 = vpack.c.b16 %v479, %v475
        %v572 = vpack.c.b16 %v480, %v476
        %v573 = vpack.c.b16 %v481, %v477
        %v574 = vpack.c.b16 %v486, %v482
        %v575 = vpack.c.b16 %v487, %v483
        %v576 = vpack.c.b16 %v488, %v484
        %v577 = vpack.c.b16 %v489, %v485
        %v578 = vpack.c.b16 %v494, %v490
        %v579 = vpack.c.b16 %v495, %v491
        %v580 = vpack.c.b16 %v496, %v492
        %v581 = vpack.c.b16 %v497, %v493
        %v582 = vpack.c.b16 %v502, %v498
        %v583 = vpack.c.b16 %v503, %v499
        %v584 = vpack.c.b16 %v504, %v500
        %v585 = vpack.c.b16 %v505, %v501
        %v586 = vpack.c.b16 %v510, %v506
        %v587 = vpack.c.b16 %v511, %v507
        %v588 = vpack.c.b16 %v512, %v508
        %v589 = vpack.c.b16 %v513, %v509
        %v590 = vpack.c.b16 %v518, %v514
        %v591 = vpack.c.b16 %v519, %v515
        %v592 = vpack.c.b16 %v520, %v516
        %v593 = vpack.c.b16 %v521, %v517
        %v594 = vpack.c.b16 %v526, %v522
        %v595 = vpack.c.b16 %v527, %v523
        %v596 = vpack.c.b16 %v528, %v524
        %v597 = vpack.c.b16 %v529, %v525
        %v598 = vpack.c.b16 %v534, %v530
        %v599 = vpack.c.b16 %v535, %v531
        %v600 = vpack.c.b16 %v536, %v532
        %v601 = vpack.c.b16 %v537, %v533
        %666 = vmatprep.subr.bf16.mxu0 %v539
        %667 = vmatpush1.bf16.msra.mxu0 %v538
        %668 = vmatprep.subr.bf16.mxu0 %v543
        %669 = vmatpush1.bf16.msra.mxu0 %v542
        %670 = vmatprep.subr.bf16.mxu0 %v547
        %671 = vmatpush1.bf16.msra.mxu0 %v546
        %672 = vmatprep.subr.bf16.mxu0 %v551
        %673 = vmatpush1.bf16.msra.mxu0 %v550
        %674 = vmatprep.subr.bf16.mxu0 %v555
        %675 = vmatpush1.bf16.msra.mxu0 %v554
        %676 = vmatprep.subr.bf16.mxu0 %v559
        %677 = vmatpush1.bf16.msra.mxu0 %v558
        %678 = vmatprep.subr.bf16.mxu0 %v563
        %679 = vmatpush1.bf16.msra.mxu0 %v562
        %680 = vmatprep.subr.bf16.mxu0 %v567
        %681 = vmatpush1.bf16.msra.mxu0 %v566
        %682 = vmatprep.subr.bf16.mxu0 %v571
        %683 = vmatpush1.bf16.msra.mxu0 %v570
        %684 = vmatprep.subr.bf16.mxu0 %v575
        %685 = vmatpush1.bf16.msra.mxu0 %v574
        %686 = vmatprep.subr.bf16.mxu0 %v579
        %687 = vmatpush1.bf16.msra.mxu0 %v578
        %688 = vmatprep.subr.bf16.mxu0 %v583
        %689 = vmatpush1.bf16.msra.mxu0 %v582
        %690 = vmatprep.subr.bf16.mxu0 %v587
        %691 = vmatpush1.bf16.msra.mxu0 %v586
        %692 = vmatprep.subr.bf16.mxu0 %v591
        %693 = vmatpush1.bf16.msra.mxu0 %v590
        %694 = vmatprep.subr.bf16.mxu0 %v595
        %695 = vmatpush1.bf16.msra.mxu0 %v594
        %696 = vmatprep.subr.bf16.mxu0 %v599
        %697 = vmatpush1.bf16.msra.mxu0 %v598
        %698 = vmatprep.mubr.bf16.mxu0 %v281
        %699 = vmatmul.mubr.bf16.gmra.mrb[0].mxu0 %v280
        %v700 = vpop.f32.mrb[0].mxu0
        %v701 = vadd.f32 0.0, %v700
        %v702 = vpop.f32.mrb[0].mxu0
        %v703 = vadd.f32 0.0, %v702
        %v704 = vpop.f32.mrb[0].mxu0
        %v705 = vadd.f32 0.0, %v704
        %v706 = vpop.f32.mrb[0].mxu0
        %v707 = vadd.f32 0.0, %v706
        %708 = vdwg.mxu0
        %709 = vmatprep.subr.bf16.mxu0 %v541
        %710 = vmatpush1.bf16.msra.mxu0 %v540
        %711 = vmatprep.subr.bf16.mxu0 %v545
        %712 = vmatpush1.bf16.msra.mxu0 %v544
        %713 = vmatprep.subr.bf16.mxu0 %v549
        %714 = vmatpush1.bf16.msra.mxu0 %v548
        %715 = vmatprep.subr.bf16.mxu0 %v553
        %716 = vmatpush1.bf16.msra.mxu0 %v552
        %717 = vmatprep.subr.bf16.mxu0 %v557
        %718 = vmatpush1.bf16.msra.mxu0 %v556
        %719 = vmatprep.subr.bf16.mxu0 %v561
        %720 = vmatpush1.bf16.msra.mxu0 %v560
        %721 = vmatprep.subr.bf16.mxu0 %v565
        %722 = vmatpush1.bf16.msra.mxu0 %v564
        %723 = vmatprep.subr.bf16.mxu0 %v569
        %724 = vmatpush1.bf16.msra.mxu0 %v568
        %725 = vmatprep.subr.bf16.mxu0 %v573
        %726 = vmatpush1.bf16.msra.mxu0 %v572
        %727 = vmatprep.subr.bf16.mxu0 %v577
        %728 = vmatpush1.bf16.msra.mxu0 %v576
        %729 = vmatprep.subr.bf16.mxu0 %v581
        %730 = vmatpush1.bf16.msra.mxu0 %v580
        %731 = vmatprep.subr.bf16.mxu0 %v585
        %732 = vmatpush1.bf16.msra.mxu0 %v584
        %733 = vmatprep.subr.bf16.mxu0 %v589
        %734 = vmatpush1.bf16.msra.mxu0 %v588
        %735 = vmatprep.subr.bf16.mxu0 %v593
        %736 = vmatpush1.bf16.msra.mxu0 %v592
        %737 = vmatprep.subr.bf16.mxu0 %v597
        %738 = vmatpush1.bf16.msra.mxu0 %v596
        %739 = vmatprep.subr.bf16.mxu0 %v601
        %740 = vmatpush1.bf16.msra.mxu0 %v600
        %741 = vmatprep.mubr.bf16.mxu0 %v281
        %742 = vmatmul.mubr.bf16.gmra.mrb[0].mxu0 %v280
        %v743 = vpop.f32.mrb[0].mxu0
        %v744 = vadd.f32 0.0, %v743
        %v745 = vpop.f32.mrb[0].mxu0
        %v746 = vadd.f32 0.0, %v745
        %v747 = vpop.f32.mrb[0].mxu0
        %v748 = vadd.f32 0.0, %v747
        %v749 = vpop.f32.mrb[0].mxu0
        %v750 = vadd.f32 0.0, %v749
        %751 = vdwg.mxu0
        %vm752 = vcmask 1015744
        %v753 = vsel %vm752, %v701, -inf
        %754 = vmax.xlane.f32.xlu0 %v753
        %v755 = vpop.xlane.xlu0 %754
        %v756 = vsel %vm752, %v705, -inf
        %757 = vmax.xlane.f32.xlu0 %v756
        %v758 = vpop.xlane.xlu0 %757
        %v759 = vsub.f32 %v701, %v755
        %v760 = vsub.f32 %v705, %v758
        %v761 = vmul.f32 %v759, 1.442695
        %v762 = vpow.pop %v761
        %v763 = vmul.f32 %v760, 1.442695
        %v764 = vpow.pop %v763
        %767 = vrot.lane.b32.xlu0 %v762, 8
        %v768 = vpop.permute.xlu0 %767
        %769 = vrot.lane.b32.xlu0 %v764, 8
        %v770 = vpop.permute.xlu0 %769
        %vm773 = vcmask 31744
        %v774 = vsel %vm773, %v768, 0.0
        %775 = vadd.xlane.f32.xlu0 %v774
        %v776 = vpop.xlane.xlu0 %775
        %v777 = vsel %vm773, %v770, 0.0
        %778 = vadd.xlane.f32.xlu0 %v777
        %v779 = vpop.xlane.xlu0 %778
        %v780 = vrcp.pop %v776
        %v781 = vrcp.pop %v779
        %v782 = vmul.f32 %v762, %v780
        %v783 = vmul.f32 %v764, %v781
        %v784 = vld [vmem:[%s2] sm:$0xf]
        %v785 = vlaneseq
        %v786 = vshrl.u32 %v785, 7
        %v787 = vsub.s32 0, %v786
        %v788 = vrot.slane %v784, %v787
        %v789 = vsub.f32 %v701, %v788
        %v790 = vsub.f32 %v705, %v788
        %792 = vset.pattern.permute.xlu0 120
        %793 = vperm.xlu0 %792, %v782
        %v794 = vpop.permute.xlu0 %793
        %797 = vset.pattern.permute.xlu0 120
        %798 = vperm.xlu0 %797, %v783
        %v799 = vpop.permute.xlu0 %798
        %v801 = vmul.f32 %v794, %v789
        %v802 = vmul.f32 %v799, %v790
        %v803 = vlaneseq
        %v804 = vshrl.u32 %v803, 7
        %v805 = vsub.s32 1, %v804
        %v806 = vrot.slane %v784, %v805
        %v807 = vsub.f32 %v703, %v806
        %v808 = vsub.f32 %v707, %v806
        %809 = vset.pattern.permute.xlu0 121
        %810 = vperm.xlu0 %809, %v782
        %v811 = vpop.permute.xlu0 %810
        %813 = vset.pattern.permute.xlu0 121
        %814 = vperm.xlu0 %813, %v783
        %v815 = vpop.permute.xlu0 %814
        %v817 = vmul.f32 %v811, %v807
        %v818 = vmul.f32 %v815, %v808
        %v819 = vadd.f32 %v801, %v817
        %v820 = vadd.f32 %v802, %v818
        %v821 = vlaneseq
        %v822 = vshrl.u32 %v821, 7
        %v823 = vsub.s32 2, %v822
        %v824 = vrot.slane %v784, %v823
        %v825 = vsub.f32 %v744, %v824
        %v826 = vsub.f32 %v748, %v824
        %827 = vset.pattern.permute.xlu0 122
        %828 = vperm.xlu0 %827, %v782
        %v829 = vpop.permute.xlu0 %828
        %831 = vset.pattern.permute.xlu0 122
        %832 = vperm.xlu0 %831, %v783
        %v833 = vpop.permute.xlu0 %832
        %v835 = vmul.f32 %v829, %v825
        %v836 = vmul.f32 %v833, %v826
        %v837 = vadd.f32 %v819, %v835
        %v838 = vadd.f32 %v820, %v836
        %v839 = vlaneseq
        %v840 = vshrl.u32 %v839, 7
        %v841 = vsub.s32 3, %v840
        %v842 = vrot.slane %v784, %v841
        %v843 = vsub.f32 %v746, %v842
        %v844 = vsub.f32 %v750, %v842
        %845 = vset.pattern.permute.xlu0 123
        %846 = vperm.xlu0 %845, %v782
        %v847 = vpop.permute.xlu0 %846
        %849 = vset.pattern.permute.xlu0 123
        %850 = vperm.xlu0 %849, %v783
        %v851 = vpop.permute.xlu0 %850
        %v853 = vmul.f32 %v847, %v843
        %v854 = vmul.f32 %v851, %v844
        %v855 = vadd.f32 %v837, %v853
        %v856 = vadd.f32 %v838, %v854
        %v857 = vpack.c.bf16 %v856, %v855
        %v858 = vld [vmem:[#allocation7] sm:$0xff]
        %v859 = vld [vmem:[#allocation7 + $0x8] sm:$0xff]
        %v860 = vld [vmem:[#allocation7 + $0x10] sm:$0xff]
        %v861 = vld [vmem:[#allocation7 + $0x18] sm:$0xff]
        %v862 = vld [vmem:[#allocation7 + $0x20] sm:$0xf]
        %v863 = vld [vmem:[#allocation7 + $0x24] sm:$0xff]
        %v864 = vld [vmem:[#allocation7 + $0x2c] sm:$0xff]
        %v865 = vld [vmem:[#allocation7 + $0x34] sm:$0xff]
        %v866 = vld [vmem:[#allocation7 + $0x3c] sm:$0xff]
        %v867 = vld [vmem:[#allocation7 + $0x44] sm:$0xf]
        %v868 = vld [vmem:[#allocation7 + $0x48] sm:$0xff]
        %v869 = vld [vmem:[#allocation7 + $0x50] sm:$0xff]
        %v870 = vld [vmem:[#allocation7 + $0x58] sm:$0xff]
        %v871 = vld [vmem:[#allocation7 + $0x60] sm:$0xff]
        %v872 = vld [vmem:[#allocation7 + $0x68] sm:$0xf]
        %v873 = vld [vmem:[#allocation7 + $0x6c] sm:$0xff]
        %v874 = vld [vmem:[#allocation7 + $0x74] sm:$0xff]
        %v875 = vld [vmem:[#allocation7 + $0x7c] sm:$0xff]
        %v876 = vld [vmem:[#allocation7 + $0x84] sm:$0xff]
        %v877 = vld [vmem:[#allocation7 + $0x8c] sm:$0xf]
        %v878 = vld [vmem:[#allocation7 + $0x90] sm:$0xff]
        %v879 = vld [vmem:[#allocation7 + $0x98] sm:$0xff]
        %v880 = vld [vmem:[#allocation7 + $0xa0] sm:$0xff]
        %v881 = vld [vmem:[#allocation7 + $0xa8] sm:$0xff]
        %v882 = vld [vmem:[#allocation7 + $0xb0] sm:$0xf]
        %v883 = vld [vmem:[#allocation7 + $0xb4] sm:$0xff]
        %v884 = vld [vmem:[#allocation7 + $0xbc] sm:$0xff]
        %v885 = vld [vmem:[#allocation7 + $0xc4] sm:$0xff]
        %v886 = vld [vmem:[#allocation7 + $0xcc] sm:$0xff]
        %v887 = vld [vmem:[#allocation7 + $0xd4] sm:$0xf]
        %v888 = vld [vmem:[#allocation7 + $0xd8] sm:$0xff]
        %v889 = vld [vmem:[#allocation7 + $0xe0] sm:$0xff]
        %v890 = vld [vmem:[#allocation7 + $0xe8] sm:$0xff]
        %v891 = vld [vmem:[#allocation7 + $0xf0] sm:$0xff]
        %v892 = vld [vmem:[#allocation7 + $0xf8] sm:$0xf]
        %v893 = vld [vmem:[#allocation7 + $0xfc] sm:$0xff]
        %v894 = vld [vmem:[#allocation7 + $0x104] sm:$0xff]
        %v895 = vld [vmem:[#allocation7 + $0x10c] sm:$0xff]
        %v896 = vld [vmem:[#allocation7 + $0x114] sm:$0xff]
        %v897 = vld [vmem:[#allocation7 + $0x11c] sm:$0xf]
        %v898 = vld [vmem:[#allocation7 + $0x120] sm:$0xff]
        %v899 = vld [vmem:[#allocation7 + $0x128] sm:$0xff]
        %v900 = vld [vmem:[#allocation7 + $0x130] sm:$0xff]
        %v901 = vld [vmem:[#allocation7 + $0x138] sm:$0xff]
        %v902 = vld [vmem:[#allocation7 + $0x140] sm:$0xf]
        %v903 = vld [vmem:[#allocation7 + $0x144] sm:$0xff]
        %v904 = vld [vmem:[#allocation7 + $0x14c] sm:$0xff]
        %v905 = vld [vmem:[#allocation7 + $0x154] sm:$0xff]
        %v906 = vld [vmem:[#allocation7 + $0x15c] sm:$0xff]
        %v907 = vld [vmem:[#allocation7 + $0x164] sm:$0xf]
        %v908 = vld [vmem:[#allocation7 + $0x168] sm:$0xff]
        %v909 = vld [vmem:[#allocation7 + $0x170] sm:$0xff]
        %v910 = vld [vmem:[#allocation7 + $0x178] sm:$0xff]
        %v911 = vld [vmem:[#allocation7 + $0x180] sm:$0xff]
        %v912 = vld [vmem:[#allocation7 + $0x188] sm:$0xf]
        %v913 = vld [vmem:[#allocation7 + $0x18c] sm:$0xff]
        %v914 = vld [vmem:[#allocation7 + $0x194] sm:$0xff]
        %v915 = vld [vmem:[#allocation7 + $0x19c] sm:$0xff]
        %v916 = vld [vmem:[#allocation7 + $0x1a4] sm:$0xff]
        %v917 = vld [vmem:[#allocation7 + $0x1ac] sm:$0xf]
        %v918 = vld [vmem:[#allocation7 + $0x1b0] sm:$0xff]
        %v919 = vld [vmem:[#allocation7 + $0x1b8] sm:$0xff]
        %v920 = vld [vmem:[#allocation7 + $0x1c0] sm:$0xff]
        %v921 = vld [vmem:[#allocation7 + $0x1c8] sm:$0xff]
        %v922 = vld [vmem:[#allocation7 + $0x1d0] sm:$0xf]
        %v923 = vld [vmem:[#allocation7 + $0x1d4] sm:$0xff]
        %v924 = vld [vmem:[#allocation7 + $0x1dc] sm:$0xff]
        %v925 = vld [vmem:[#allocation7 + $0x1e4] sm:$0xff]
        %v926 = vld [vmem:[#allocation7 + $0x1ec] sm:$0xff]
        %v927 = vld [vmem:[#allocation7 + $0x1f4] sm:$0xf]
        %v928 = vld [vmem:[#allocation7 + $0x1f8] sm:$0xff]
        %v929 = vld [vmem:[#allocation7 + $0x200] sm:$0xff]
        %v930 = vld [vmem:[#allocation7 + $0x208] sm:$0xff]
        %v931 = vld [vmem:[#allocation7 + $0x210] sm:$0xff]
        %v932 = vld [vmem:[#allocation7 + $0x218] sm:$0xf]
        %v933 = vld [vmem:[#allocation7 + $0x21c] sm:$0xff]
        %v934 = vld [vmem:[#allocation7 + $0x224] sm:$0xff]
        %v935 = vld [vmem:[#allocation7 + $0x22c] sm:$0xff]
        %v936 = vld [vmem:[#allocation7 + $0x234] sm:$0xff]
        %v937 = vld [vmem:[#allocation7 + $0x23c] sm:$0xf]
        %v1018 = vunpack.c.l.b16 %v858
        %v1019 = vunpack.c.h.b16 %v858
        %v1020 = vunpack.c.l.b16 %v859
        %v1021 = vunpack.c.h.b16 %v859
        %v1022 = vunpack.c.l.b16 %v860
        %v1023 = vunpack.c.h.b16 %v860
        %v1024 = vunpack.c.l.b16 %v861
        %v1025 = vunpack.c.h.b16 %v861
        %v1026 = vunpack.c.l.b16 %v862
        %v1027 = vunpack.c.l.b16 %v863
        %v1028 = vunpack.c.h.b16 %v863
        %v1029 = vunpack.c.l.b16 %v864
        %v1030 = vunpack.c.h.b16 %v864
        %v1031 = vunpack.c.l.b16 %v865
        %v1032 = vunpack.c.h.b16 %v865
        %v1033 = vunpack.c.l.b16 %v866
        %v1034 = vunpack.c.h.b16 %v866
        %v1035 = vunpack.c.l.b16 %v867
        %v1036 = vunpack.c.l.b16 %v868
        %v1037 = vunpack.c.h.b16 %v868
        %v1038 = vunpack.c.l.b16 %v869
        %v1039 = vunpack.c.h.b16 %v869
        %v1040 = vunpack.c.l.b16 %v870
        %v1041 = vunpack.c.h.b16 %v870
        %v1042 = vunpack.c.l.b16 %v871
        %v1043 = vunpack.c.h.b16 %v871
        %v1044 = vunpack.c.l.b16 %v872
        %v1045 = vunpack.c.l.b16 %v873
        %v1046 = vunpack.c.h.b16 %v873
        %v1047 = vunpack.c.l.b16 %v874
        %v1048 = vunpack.c.h.b16 %v874
        %v1049 = vunpack.c.l.b16 %v875
        %v1050 = vunpack.c.h.b16 %v875
        %v1051 = vunpack.c.l.b16 %v876
        %v1052 = vunpack.c.h.b16 %v876
        %v1053 = vunpack.c.l.b16 %v877
        %v1054 = vunpack.c.l.b16 %v878
        %v1055 = vunpack.c.h.b16 %v878
        %v1056 = vunpack.c.l.b16 %v879
        %v1057 = vunpack.c.h.b16 %v879
        %v1058 = vunpack.c.l.b16 %v880
        %v1059 = vunpack.c.h.b16 %v880
        %v1060 = vunpack.c.l.b16 %v881
        %v1061 = vunpack.c.h.b16 %v881
        %v1062 = vunpack.c.l.b16 %v882
        %v1063 = vunpack.c.l.b16 %v883
        %v1064 = vunpack.c.h.b16 %v883
        %v1065 = vunpack.c.l.b16 %v884
        %v1066 = vunpack.c.h.b16 %v884
        %v1067 = vunpack.c.l.b16 %v885
        %v1068 = vunpack.c.h.b16 %v885
        %v1069 = vunpack.c.l.b16 %v886
        %v1070 = vunpack.c.h.b16 %v886
        %v1071 = vunpack.c.l.b16 %v887
        %v1072 = vunpack.c.l.b16 %v888
        %v1073 = vunpack.c.h.b16 %v888
        %v1074 = vunpack.c.l.b16 %v889
        %v1075 = vunpack.c.h.b16 %v889
        %v1076 = vunpack.c.l.b16 %v890
        %v1077 = vunpack.c.h.b16 %v890
        %v1078 = vunpack.c.l.b16 %v891
        %v1079 = vunpack.c.h.b16 %v891
        %v1080 = vunpack.c.l.b16 %v892
        %v1081 = vunpack.c.l.b16 %v893
        %v1082 = vunpack.c.h.b16 %v893
        %v1083 = vunpack.c.l.b16 %v894
        %v1084 = vunpack.c.h.b16 %v894
        %v1085 = vunpack.c.l.b16 %v895
        %v1086 = vunpack.c.h.b16 %v895
        %v1087 = vunpack.c.l.b16 %v896
        %v1088 = vunpack.c.h.b16 %v896
        %v1089 = vunpack.c.l.b16 %v897
        %v1090 = vunpack.c.l.b16 %v898
        %v1091 = vunpack.c.h.b16 %v898
        %v1092 = vunpack.c.l.b16 %v899
        %v1093 = vunpack.c.h.b16 %v899
        %v1094 = vunpack.c.l.b16 %v900
        %v1095 = vunpack.c.h.b16 %v900
        %v1096 = vunpack.c.l.b16 %v901
        %v1097 = vunpack.c.h.b16 %v901
        %v1098 = vunpack.c.l.b16 %v902
        %v1099 = vunpack.c.l.b16 %v903
        %v1100 = vunpack.c.h.b16 %v903
        %v1101 = vunpack.c.l.b16 %v904
        %v1102 = vunpack.c.h.b16 %v904
        %v1103 = vunpack.c.l.b16 %v905
        %v1104 = vunpack.c.h.b16 %v905
        %v1105 = vunpack.c.l.b16 %v906
        %v1106 = vunpack.c.h.b16 %v906
        %v1107 = vunpack.c.l.b16 %v907
        %v1108 = vunpack.c.l.b16 %v908
        %v1109 = vunpack.c.h.b16 %v908
        %v1110 = vunpack.c.l.b16 %v909
        %v1111 = vunpack.c.h.b16 %v909
        %v1112 = vunpack.c.l.b16 %v910
        %v1113 = vunpack.c.h.b16 %v910
        %v1114 = vunpack.c.l.b16 %v911
        %v1115 = vunpack.c.h.b16 %v911
        %v1116 = vunpack.c.l.b16 %v912
        %v1117 = vunpack.c.l.b16 %v913
        %v1118 = vunpack.c.h.b16 %v913
        %v1119 = vunpack.c.l.b16 %v914
        %v1120 = vunpack.c.h.b16 %v914
        %v1121 = vunpack.c.l.b16 %v915
        %v1122 = vunpack.c.h.b16 %v915
        %v1123 = vunpack.c.l.b16 %v916
        %v1124 = vunpack.c.h.b16 %v916
        %v1125 = vunpack.c.l.b16 %v917
        %v1126 = vunpack.c.l.b16 %v918
        %v1127 = vunpack.c.h.b16 %v918
        %v1128 = vunpack.c.l.b16 %v919
        %v1129 = vunpack.c.h.b16 %v919
        %v1130 = vunpack.c.l.b16 %v920
        %v1131 = vunpack.c.h.b16 %v920
        %v1132 = vunpack.c.l.b16 %v921
        %v1133 = vunpack.c.h.b16 %v921
        %v1134 = vunpack.c.l.b16 %v922
        %v1135 = vunpack.c.l.b16 %v923
        %v1136 = vunpack.c.h.b16 %v923
        %v1137 = vunpack.c.l.b16 %v924
        %v1138 = vunpack.c.h.b16 %v924
        %v1139 = vunpack.c.l.b16 %v925
        %v1140 = vunpack.c.h.b16 %v925
        %v1141 = vunpack.c.l.b16 %v926
        %v1142 = vunpack.c.h.b16 %v926
        %v1143 = vunpack.c.l.b16 %v927
        %v1144 = vunpack.c.l.b16 %v928
        %v1145 = vunpack.c.h.b16 %v928
        %v1146 = vunpack.c.l.b16 %v929
        %v1147 = vunpack.c.h.b16 %v929
        %v1148 = vunpack.c.l.b16 %v930
        %v1149 = vunpack.c.h.b16 %v930
        %v1150 = vunpack.c.l.b16 %v931
        %v1151 = vunpack.c.h.b16 %v931
        %v1152 = vunpack.c.l.b16 %v932
        %v1153 = vunpack.c.l.b16 %v933
        %v1154 = vunpack.c.h.b16 %v933
        %v1155 = vunpack.c.l.b16 %v934
        %v1156 = vunpack.c.h.b16 %v934
        %v1157 = vunpack.c.l.b16 %v935
        %v1158 = vunpack.c.h.b16 %v935
        %v1159 = vunpack.c.l.b16 %v936
        %v1160 = vunpack.c.h.b16 %v936
        %v1161 = vunpack.c.l.b16 %v937
        %v1162 = vpack.c.b16 %v1027, %v1018
        %v1163 = vpack.c.b16 %v1028, %v1019
        %v1164 = vpack.c.b16 %v1029, %v1020
        %v1165 = vpack.c.b16 %v1030, %v1021
        %v1166 = vpack.c.b16 %v1031, %v1022
        %v1167 = vpack.c.b16 %v1032, %v1023
        %v1168 = vpack.c.b16 %v1033, %v1024
        %v1169 = vpack.c.b16 %v1034, %v1025
        %v1170 = vpack.c.b16 %v1035, %v1026
        %v1171 = vpack.c.b16 %v1045, %v1036
        %v1172 = vpack.c.b16 %v1046, %v1037
        %v1173 = vpack.c.b16 %v1047, %v1038
        %v1174 = vpack.c.b16 %v1048, %v1039
        %v1175 = vpack.c.b16 %v1049, %v1040
        %v1176 = vpack.c.b16 %v1050, %v1041
        %v1177 = vpack.c.b16 %v1051, %v1042
        %v1178 = vpack.c.b16 %v1052, %v1043
        %v1179 = vpack.c.b16 %v1053, %v1044
        %v1180 = vpack.c.b16 %v1063, %v1054
        %v1181 = vpack.c.b16 %v1064, %v1055
        %v1182 = vpack.c.b16 %v1065, %v1056
        %v1183 = vpack.c.b16 %v1066, %v1057
        %v1184 = vpack.c.b16 %v1067, %v1058
        %v1185 = vpack.c.b16 %v1068, %v1059
        %v1186 = vpack.c.b16 %v1069, %v1060
        %v1187 = vpack.c.b16 %v1070, %v1061
        %v1188 = vpack.c.b16 %v1071, %v1062
        %v1189 = vpack.c.b16 %v1081, %v1072
        %v1190 = vpack.c.b16 %v1082, %v1073
        %v1191 = vpack.c.b16 %v1083, %v1074
        %v1192 = vpack.c.b16 %v1084, %v1075
        %v1193 = vpack.c.b16 %v1085, %v1076
        %v1194 = vpack.c.b16 %v1086, %v1077
        %v1195 = vpack.c.b16 %v1087, %v1078
        %v1196 = vpack.c.b16 %v1088, %v1079
        %v1197 = vpack.c.b16 %v1089, %v1080
        %v1198 = vpack.c.b16 %v1099, %v1090
        %v1199 = vpack.c.b16 %v1100, %v1091
        %v1200 = vpack.c.b16 %v1101, %v1092
        %v1201 = vpack.c.b16 %v1102, %v1093
        %v1202 = vpack.c.b16 %v1103, %v1094
        %v1203 = vpack.c.b16 %v1104, %v1095
        %v1204 = vpack.c.b16 %v1105, %v1096
        %v1205 = vpack.c.b16 %v1106, %v1097
        %v1206 = vpack.c.b16 %v1107, %v1098
        %v1207 = vpack.c.b16 %v1117, %v1108
        %v1208 = vpack.c.b16 %v1118, %v1109
        %v1209 = vpack.c.b16 %v1119, %v1110
        %v1210 = vpack.c.b16 %v1120, %v1111
        %v1211 = vpack.c.b16 %v1121, %v1112
        %v1212 = vpack.c.b16 %v1122, %v1113
        %v1213 = vpack.c.b16 %v1123, %v1114
        %v1214 = vpack.c.b16 %v1124, %v1115
        %v1215 = vpack.c.b16 %v1125, %v1116
        %v1216 = vpack.c.b16 %v1135, %v1126
        %v1217 = vpack.c.b16 %v1136, %v1127
        %v1218 = vpack.c.b16 %v1137, %v1128
        %v1219 = vpack.c.b16 %v1138, %v1129
        %v1220 = vpack.c.b16 %v1139, %v1130
        %v1221 = vpack.c.b16 %v1140, %v1131
        %v1222 = vpack.c.b16 %v1141, %v1132
        %v1223 = vpack.c.b16 %v1142, %v1133
        %v1224 = vpack.c.b16 %v1143, %v1134
        %v1225 = vpack.c.b16 %v1153, %v1144
        %v1226 = vpack.c.b16 %v1154, %v1145
        %v1227 = vpack.c.b16 %v1155, %v1146
        %v1228 = vpack.c.b16 %v1156, %v1147
        %v1229 = vpack.c.b16 %v1157, %v1148
        %v1230 = vpack.c.b16 %v1158, %v1149
        %v1231 = vpack.c.b16 %v1159, %v1150
        %v1232 = vpack.c.b16 %v1160, %v1151
        %v1233 = vpack.c.b16 %v1161, %v1152
        %1306 = vmatprep.subr.bf16.mxu0 %v1163
        %1307 = vmatpush1.bf16.msra.mxu0 %v1162
        %1308 = vmatprep.subr.bf16.mxu0 %v1172
        %1309 = vmatpush1.bf16.msra.mxu0 %v1171
        %1310 = vmatprep.subr.bf16.mxu0 %v1181
        %1311 = vmatpush1.bf16.msra.mxu0 %v1180
        %1312 = vmatprep.subr.bf16.mxu0 %v1190
        %1313 = vmatpush1.bf16.msra.mxu0 %v1189
        %1314 = vmatprep.subr.bf16.mxu0 %v1199
        %1315 = vmatpush1.bf16.msra.mxu0 %v1198
        %1316 = vmatprep.subr.bf16.mxu0 %v1208
        %1317 = vmatpush1.bf16.msra.mxu0 %v1207
        %1318 = vmatprep.subr.bf16.mxu0 %v1217
        %1319 = vmatpush1.bf16.msra.mxu0 %v1216
        %1320 = vmatprep.subr.bf16.mxu0 %v1226
        %1321 = vmatpush1.bf16.msra.mxu0 %v1225
        %1322 = vmatprep.subr.bf16.mxu0 0
        %1323 = vmatpush1.bf16.msra.mxu0 0
        %1324 = vmatprep.subr.bf16.mxu0 0
        %1325 = vmatpush1.bf16.msra.mxu0 0
        %1326 = vmatprep.subr.bf16.mxu0 0
        %1327 = vmatpush1.bf16.msra.mxu0 0
        %1328 = vmatprep.subr.bf16.mxu0 0
        %1329 = vmatpush1.bf16.msra.mxu0 0
        %1330 = vmatprep.subr.bf16.mxu0 0
        %1331 = vmatpush1.bf16.msra.mxu0 0
        %1332 = vmatprep.subr.bf16.mxu0 0
        %1333 = vmatpush1.bf16.msra.mxu0 0
        %1334 = vmatprep.subr.bf16.mxu0 0
        %1335 = vmatpush1.bf16.msra.mxu0 0
        %1336 = vmatprep.subr.bf16.mxu0 0
        %1337 = vmatpush1.bf16.msra.mxu0 0
        %1338 = vmatprep.mubr.bf16.mxu0 0
        %1339 = vmatmul.mubr.bf16.gmra.mrb[0].mxu0 %v857
        %v1340 = vpop.f32.mrb[0].mxu0
        %v1341 = vadd.f32 0.0, %v1340
        %v1342 = vpop.f32.mrb[0].mxu0
        %v1343 = vadd.f32 0.0, %v1342
        %v1344 = vpop.f32.mrb[0].mxu0
        %v1345 = vadd.f32 0.0, %v1344
        %v1346 = vpop.f32.mrb[0].mxu0
        %v1347 = vadd.f32 0.0, %v1346
        %1348 = vdwg.mxu0
        %1349 = vmatprep.subr.bf16.mxu0 %v1165
        %1350 = vmatpush1.bf16.msra.mxu0 %v1164
        %1351 = vmatprep.subr.bf16.mxu0 %v1174
        %1352 = vmatpush1.bf16.msra.mxu0 %v1173
        %1353 = vmatprep.subr.bf16.mxu0 %v1183
        %1354 = vmatpush1.bf16.msra.mxu0 %v1182
        %1355 = vmatprep.subr.bf16.mxu0 %v1192
        %1356 = vmatpush1.bf16.msra.mxu0 %v1191
        %1357 = vmatprep.subr.bf16.mxu0 %v1201
        %1358 = vmatpush1.bf16.msra.mxu0 %v1200
        %1359 = vmatprep.subr.bf16.mxu0 %v1210
        %1360 = vmatpush1.bf16.msra.mxu0 %v1209
        %1361 = vmatprep.subr.bf16.mxu0 %v1219
        %1362 = vmatpush1.bf16.msra.mxu0 %v1218
        %1363 = vmatprep.subr.bf16.mxu0 %v1228
        %1364 = vmatpush1.bf16.msra.mxu0 %v1227
        %1365 = vmatprep.subr.bf16.mxu0 0
        %1366 = vmatpush1.bf16.msra.mxu0 0
        %1367 = vmatprep.subr.bf16.mxu0 0
        %1368 = vmatpush1.bf16.msra.mxu0 0
        %1369 = vmatprep.subr.bf16.mxu0 0
        %1370 = vmatpush1.bf16.msra.mxu0 0
        %1371 = vmatprep.subr.bf16.mxu0 0
        %1372 = vmatpush1.bf16.msra.mxu0 0
        %1373 = vmatprep.subr.bf16.mxu0 0
        %1374 = vmatpush1.bf16.msra.mxu0 0
        %1375 = vmatprep.subr.bf16.mxu0 0
        %1376 = vmatpush1.bf16.msra.mxu0 0
        %1377 = vmatprep.subr.bf16.mxu0 0
        %1378 = vmatpush1.bf16.msra.mxu0 0
        %1379 = vmatprep.subr.bf16.mxu0 0
        %1380 = vmatpush1.bf16.msra.mxu0 0
        %1381 = vmatprep.mubr.bf16.mxu0 0
        %1382 = vmatmul.mubr.bf16.gmra.mrb[0].mxu0 %v857
        %v1383 = vpop.f32.mrb[0].mxu0
        %v1384 = vadd.f32 0.0, %v1383
        %v1385 = vpop.f32.mrb[0].mxu0
        %v1386 = vadd.f32 0.0, %v1385
        %v1387 = vpop.f32.mrb[0].mxu0
        %v1388 = vadd.f32 0.0, %v1387
        %v1389 = vpop.f32.mrb[0].mxu0
        %v1390 = vadd.f32 0.0, %v1389
        %1391 = vdwg.mxu0
        %1392 = vmatprep.subr.bf16.mxu0 %v1167
        %1393 = vmatpush1.bf16.msra.mxu0 %v1166
        %1394 = vmatprep.subr.bf16.mxu0 %v1176
        %1395 = vmatpush1.bf16.msra.mxu0 %v1175
        %1396 = vmatprep.subr.bf16.mxu0 %v1185
        %1397 = vmatpush1.bf16.msra.mxu0 %v1184
        %1398 = vmatprep.subr.bf16.mxu0 %v1194
        %1399 = vmatpush1.bf16.msra.mxu0 %v1193
        %1400 = vmatprep.subr.bf16.mxu0 %v1203
        %1401 = vmatpush1.bf16.msra.mxu0 %v1202
        %1402 = vmatprep.subr.bf16.mxu0 %v1212
        %1403 = vmatpush1.bf16.msra.mxu0 %v1211
        %1404 = vmatprep.subr.bf16.mxu0 %v1221
        %1405 = vmatpush1.bf16.msra.mxu0 %v1220
        %1406 = vmatprep.subr.bf16.mxu0 %v1230
        %1407 = vmatpush1.bf16.msra.mxu0 %v1229
        %1408 = vmatprep.subr.bf16.mxu0 0
        %1409 = vmatpush1.bf16.msra.mxu0 0
        %1410 = vmatprep.subr.bf16.mxu0 0
        %1411 = vmatpush1.bf16.msra.mxu0 0
        %1412 = vmatprep.subr.bf16.mxu0 0
        %1413 = vmatpush1.bf16.msra.mxu0 0
        %1414 = vmatprep.subr.bf16.mxu0 0
        %1415 = vmatpush1.bf16.msra.mxu0 0
        %1416 = vmatprep.subr.bf16.mxu0 0
        %1417 = vmatpush1.bf16.msra.mxu0 0
        %1418 = vmatprep.subr.bf16.mxu0 0
        %1419 = vmatpush1.bf16.msra.mxu0 0
        %1420 = vmatprep.subr.bf16.mxu0 0
        %1421 = vmatpush1.bf16.msra.mxu0 0
        %1422 = vmatprep.subr.bf16.mxu0 0
        %1423 = vmatpush1.bf16.msra.mxu0 0
        %1424 = vmatprep.mubr.bf16.mxu0 0
        %1425 = vmatmul.mubr.bf16.gmra.mrb[0].mxu0 %v857
        %v1426 = vpop.f32.mrb[0].mxu0
        %v1427 = vadd.f32 0.0, %v1426
        %v1428 = vpop.f32.mrb[0].mxu0
        %v1429 = vadd.f32 0.0, %v1428
        %v1430 = vpop.f32.mrb[0].mxu0
        %v1431 = vadd.f32 0.0, %v1430
        %v1432 = vpop.f32.mrb[0].mxu0
        %v1433 = vadd.f32 0.0, %v1432
        %1434 = vdwg.mxu0
        %1435 = vmatprep.subr.bf16.mxu0 %v1169
        %1436 = vmatpush1.bf16.msra.mxu0 %v1168
        %1437 = vmatprep.subr.bf16.mxu0 %v1178
        %1438 = vmatpush1.bf16.msra.mxu0 %v1177
        %1439 = vmatprep.subr.bf16.mxu0 %v1187
        %1440 = vmatpush1.bf16.msra.mxu0 %v1186
        %1441 = vmatprep.subr.bf16.mxu0 %v1196
        %1442 = vmatpush1.bf16.msra.mxu0 %v1195
        %1443 = vmatprep.subr.bf16.mxu0 %v1205
        %1444 = vmatpush1.bf16.msra.mxu0 %v1204
        %1445 = vmatprep.subr.bf16.mxu0 %v1214
        %1446 = vmatpush1.bf16.msra.mxu0 %v1213
        %1447 = vmatprep.subr.bf16.mxu0 %v1223
        %1448 = vmatpush1.bf16.msra.mxu0 %v1222
        %1449 = vmatprep.subr.bf16.mxu0 %v1232
        %1450 = vmatpush1.bf16.msra.mxu0 %v1231
        %1451 = vmatprep.subr.bf16.mxu0 0
        %1452 = vmatpush1.bf16.msra.mxu0 0
        %1453 = vmatprep.subr.bf16.mxu0 0
        %1454 = vmatpush1.bf16.msra.mxu0 0
        %1455 = vmatprep.subr.bf16.mxu0 0
        %1456 = vmatpush1.bf16.msra.mxu0 0
        %1457 = vmatprep.subr.bf16.mxu0 0
        %1458 = vmatpush1.bf16.msra.mxu0 0
        %1459 = vmatprep.subr.bf16.mxu0 0
        %1460 = vmatpush1.bf16.msra.mxu0 0
        %1461 = vmatprep.subr.bf16.mxu0 0
        %1462 = vmatpush1.bf16.msra.mxu0 0
        %1463 = vmatprep.subr.bf16.mxu0 0
        %1464 = vmatpush1.bf16.msra.mxu0 0
        %1465 = vmatprep.subr.bf16.mxu0 0
        %1466 = vmatpush1.bf16.msra.mxu0 0
        %1467 = vmatprep.mubr.bf16.mxu0 0
        %1468 = vmatmul.mubr.bf16.gmra.mrb[0].mxu0 %v857
        %v1469 = vpop.f32.mrb[0].mxu0
        %v1470 = vadd.f32 0.0, %v1469
        %v1471 = vpop.f32.mrb[0].mxu0
        %v1472 = vadd.f32 0.0, %v1471
        %v1473 = vpop.f32.mrb[0].mxu0
        %v1474 = vadd.f32 0.0, %v1473
        %v1475 = vpop.f32.mrb[0].mxu0
        %v1476 = vadd.f32 0.0, %v1475
        %1477 = vdwg.mxu0
        %1478 = vmatprep.subr.bf16.mxu0 0
        %1479 = vmatpush1.bf16.msra.mxu0 %v1170
        %1480 = vmatprep.subr.bf16.mxu0 0
        %1481 = vmatpush1.bf16.msra.mxu0 %v1179
        %1482 = vmatprep.subr.bf16.mxu0 0
        %1483 = vmatpush1.bf16.msra.mxu0 %v1188
        %1484 = vmatprep.subr.bf16.mxu0 0
        %1485 = vmatpush1.bf16.msra.mxu0 %v1197
        %1486 = vmatprep.subr.bf16.mxu0 0
        %1487 = vmatpush1.bf16.msra.mxu0 %v1206
        %1488 = vmatprep.subr.bf16.mxu0 0
        %1489 = vmatpush1.bf16.msra.mxu0 %v1215
        %1490 = vmatprep.subr.bf16.mxu0 0
        %1491 = vmatpush1.bf16.msra.mxu0 %v1224
        %1492 = vmatprep.subr.bf16.mxu0 0
        %1493 = vmatpush1.bf16.msra.mxu0 %v1233
        %1494 = vmatprep.subr.bf16.mxu0 0
        %1495 = vmatpush1.bf16.msra.mxu0 0
        %1496 = vmatprep.subr.bf16.mxu0 0
        %1497 = vmatpush1.bf16.msra.mxu0 0
        %1498 = vmatprep.subr.bf16.mxu0 0
        %1499 = vmatpush1.bf16.msra.mxu0 0
        %1500 = vmatprep.subr.bf16.mxu0 0
        %1501 = vmatpush1.bf16.msra.mxu0 0
        %1502 = vmatprep.subr.bf16.mxu0 0
        %1503 = vmatpush1.bf16.msra.mxu0 0
        %1504 = vmatprep.subr.bf16.mxu0 0
        %1505 = vmatpush1.bf16.msra.mxu0 0
        %1506 = vmatprep.subr.bf16.mxu0 0
        %1507 = vmatpush1.bf16.msra.mxu0 0
        %1508 = vmatprep.subr.bf16.mxu0 0
        %1509 = vmatpush1.bf16.msra.mxu0 0
        %1510 = vmatprep.mubr.bf16.mxu0 0
        %1511 = vmatmul.mubr.bf16.gmra.mrb[0].mxu0 %v857
        %v1512 = vpop.f32.mrb[0].mxu0
        %v1513 = vadd.f32 0.0, %v1512
        %v1514 = vpop.f32.mrb[0].mxu0
        %v1515 = vpop.f32.mrb[0].mxu0
        %v1516 = vadd.f32 0.0, %v1515
        %v1517 = vpop.f32.mrb[0].mxu0
        %1518 = vdwg.mxu0
        %v1519 = vsel %vm773, %v1513, -inf
        %1520 = vmax.xlane.f32.xlu0 %v1519
        %v1521 = vpop.xlane.xlu0 %1520
        %v1522 = vsel %vm773, %v1516, -inf
        %1523 = vmax.xlane.f32.xlu0 %v1522
        %v1524 = vpop.xlane.xlu0 %1523
        %v1525 = vsub.f32 %v1513, %v1521
        %v1526 = vsub.f32 %v1516, %v1524
        %v1527 = vmul.f32 %v1525, 1.442695
        %v1528 = vpow.pop %v1527
        %v1529 = vmul.f32 %v1526, 1.442695
        %v1530 = vpow.pop %v1529
        %v1531 = vsel %vm773, %v1528, 0.0
        %1532 = vadd.xlane.f32.xlu0 %v1531
        %v1533 = vpop.xlane.xlu0 %1532
        %v1534 = vsel %vm773, %v1530, 0.0
        %1535 = vadd.xlane.f32.xlu0 %v1534
        %v1536 = vpop.xlane.xlu0 %1535
        %v1537 = vrcp.pop %v1533
        %v1538 = vrcp.pop %v1536
        %v1539 = vmul.f32 %v1528, %v1537
        %v1540 = vmul.f32 %v1530, %v1538
        %v1541 = vld [vmem:[%s4] sm:$0xff]
        %v1543 = vlaneseq
        %v1544 = vshrl.u32 %v1543, 7
        %v1545 = vsub.s32 0, %v1544
        %v1546 = vrot.slane %v1541, %v1545
        %v1547 = vlaneseq
        %v1548 = vshrl.u32 %v1547, 7
        %v1549 = vsub.s32 4, %v1548
        %v1550 = vrot.slane %v1541, %v1549
        %v1553 = vlaneseq
        %v1554 = vshrl.u32 %v1553, 7
        %v1555 = vsub.s32 0, %v1554
        %v1556 = vrot.slane %v1546, %v1555
        %v1557 = vlaneseq
        %v1558 = vshrl.u32 %v1557, 7
        %v1559 = vsub.s32 0, %v1558
        %v1560 = vrot.slane %v1550, %v1559
        %v1561 = vsub.f32 %v1341, %v1556
        %v1562 = vsub.f32 %v1343, %v1560
        %v1563 = vsub.f32 %v1345, %v1556
        %v1564 = vsub.f32 %v1347, %v1560
        %1566 = vset.pattern.permute.xlu0 0
        %1567 = vperm.xlu0 %1566, %v1539
        %v1568 = vpop.permute.xlu0 %1567
        %1571 = vset.pattern.permute.xlu0 0
        %1572 = vperm.xlu0 %1571, %v1540
        %v1573 = vpop.permute.xlu0 %1572
        %v1575 = vmul.f32 %v1568, %v1561
        %v1576 = vmul.f32 %v1568, %v1562
        %v1577 = vmul.f32 %v1573, %v1563
        %v1578 = vmul.f32 %v1573, %v1564
        %v1579 = vlaneseq
        %v1580 = vshrl.u32 %v1579, 7
        %v1581 = vsub.s32 1, %v1580
        %v1582 = vrot.slane %v1541, %v1581
        %v1583 = vlaneseq
        %v1584 = vshrl.u32 %v1583, 7
        %v1585 = vsub.s32 5, %v1584
        %v1586 = vrot.slane %v1541, %v1585
        %v1589 = vlaneseq
        %v1590 = vshrl.u32 %v1589, 7
        %v1591 = vsub.s32 1, %v1590
        %v1592 = vrot.slane %v1582, %v1591
        %v1593 = vlaneseq
        %v1594 = vshrl.u32 %v1593, 7
        %v1595 = vsub.s32 1, %v1594
        %v1596 = vrot.slane %v1586, %v1595
        %v1597 = vsub.f32 %v1384, %v1592
        %v1598 = vsub.f32 %v1386, %v1596
        %v1599 = vsub.f32 %v1388, %v1592
        %v1600 = vsub.f32 %v1390, %v1596
        %1601 = vset.pattern.permute.xlu0 1
        %1602 = vperm.xlu0 %1601, %v1539
        %v1603 = vpop.permute.xlu0 %1602
        %1605 = vset.pattern.permute.xlu0 1
        %1606 = vperm.xlu0 %1605, %v1540
        %v1607 = vpop.permute.xlu0 %1606
        %v1609 = vmul.f32 %v1603, %v1597
        %v1610 = vmul.f32 %v1603, %v1598
        %v1611 = vmul.f32 %v1607, %v1599
        %v1612 = vmul.f32 %v1607, %v1600
        %v1613 = vadd.f32 %v1575, %v1609
        %v1614 = vadd.f32 %v1576, %v1610
        %v1615 = vadd.f32 %v1577, %v1611
        %v1616 = vadd.f32 %v1578, %v1612
        %v1617 = vlaneseq
        %v1618 = vshrl.u32 %v1617, 7
        %v1619 = vsub.s32 2, %v1618
        %v1620 = vrot.slane %v1541, %v1619
        %v1621 = vlaneseq
        %v1622 = vshrl.u32 %v1621, 7
        %v1623 = vsub.s32 6, %v1622
        %v1624 = vrot.slane %v1541, %v1623
        %v1627 = vlaneseq
        %v1628 = vshrl.u32 %v1627, 7
        %v1629 = vsub.s32 2, %v1628
        %v1630 = vrot.slane %v1620, %v1629
        %v1631 = vlaneseq
        %v1632 = vshrl.u32 %v1631, 7
        %v1633 = vsub.s32 2, %v1632
        %v1634 = vrot.slane %v1624, %v1633
        %v1635 = vsub.f32 %v1427, %v1630
        %v1636 = vsub.f32 %v1429, %v1634
        %v1637 = vsub.f32 %v1431, %v1630
        %v1638 = vsub.f32 %v1433, %v1634
        %1639 = vset.pattern.permute.xlu0 2
        %1640 = vperm.xlu0 %1639, %v1539
        %v1641 = vpop.permute.xlu0 %1640
        %1643 = vset.pattern.permute.xlu0 2
        %1644 = vperm.xlu0 %1643, %v1540
        %v1645 = vpop.permute.xlu0 %1644
        %v1647 = vmul.f32 %v1641, %v1635
        %v1648 = vmul.f32 %v1641, %v1636
        %v1649 = vmul.f32 %v1645, %v1637
        %v1650 = vmul.f32 %v1645, %v1638
        %v1651 = vadd.f32 %v1613, %v1647
        %v1652 = vadd.f32 %v1614, %v1648
        %v1653 = vadd.f32 %v1615, %v1649
        %v1654 = vadd.f32 %v1616, %v1650
        %v1655 = vlaneseq
        %v1656 = vshrl.u32 %v1655, 7
        %v1657 = vsub.s32 3, %v1656
        %v1658 = vrot.slane %v1541, %v1657
        %v1659 = vlaneseq
        %v1660 = vshrl.u32 %v1659, 7
        %v1661 = vsub.s32 7, %v1660
        %v1662 = vrot.slane %v1541, %v1661
        %v1665 = vlaneseq
        %v1666 = vshrl.u32 %v1665, 7
        %v1667 = vsub.s32 3, %v1666
        %v1668 = vrot.slane %v1658, %v1667
        %v1669 = vlaneseq
        %v1670 = vshrl.u32 %v1669, 7
        %v1671 = vsub.s32 3, %v1670
        %v1672 = vrot.slane %v1662, %v1671
        %v1673 = vsub.f32 %v1470, %v1668
        %v1674 = vsub.f32 %v1472, %v1672
        %v1675 = vsub.f32 %v1474, %v1668
        %v1676 = vsub.f32 %v1476, %v1672
        %1677 = vset.pattern.permute.xlu0 3
        %1678 = vperm.xlu0 %1677, %v1539
        %v1679 = vpop.permute.xlu0 %1678
        %1681 = vset.pattern.permute.xlu0 3
        %1682 = vperm.xlu0 %1681, %v1540
        %v1683 = vpop.permute.xlu0 %1682
        %v1685 = vmul.f32 %v1679, %v1673
        %v1686 = vmul.f32 %v1679, %v1674
        %v1687 = vmul.f32 %v1683, %v1675
        %v1688 = vmul.f32 %v1683, %v1676
        %v1689 = vadd.f32 %v1651, %v1685
        %v1690 = vadd.f32 %v1652, %v1686
        %v1691 = vadd.f32 %v1653, %v1687
        %v1692 = vadd.f32 %v1654, %v1688
        %v1693 = vadd.f32 %v1689, %v276
        %v1694 = vadd.f32 %v1690, %v277
        %v1695 = vadd.f32 %v1691, %v278
        %v1696 = vadd.f32 %v1692, %v279
        %1697 = vst [vmem:[%s272] sm:$0xff] %v1693
        %1698 = vst [vmem:[%s272 + $0x8] sm:$0xff] %v1694
        %1699 = vst [vmem:[%s272 + $0x10] sm:$0xff] %v1695
        %1700 = vst [vmem:[%s272 + $0x18] sm:$0xff] %v1696
        %s1701 = sand.u32 %s141, 1
        %s1702 = scalar_lea.sflag [#allocation4], %s1701
        %s1703 = sand.u32 %s141, 1
        %s1704 = smul.addr %s1703, 32
        %s1705 = scalar_lea.vmem [#allocation8], %s1704
        // Predicated region
        $region53: #{tpu_custom_call.1} parent=39 // pred_check
          %p1706 = pneg %p151
        $region54: #{tpu_custom_call.1} parent=39 // pred_check_branch
          %1708 = sbr.rel (%p1706) target = $region56
        $region55: #{tpu_custom_call.1} parent=39 // pred_region
          %s1709 = smul.u32 2, %s23
          %s1711 = ssub.s32 512, 512
          %1712 = vsyncadd %s1702, %s1711
          %s1713 = smul.addr %s1709, 2
          %s1714 = smul.addr %s1713, 128
          %s1715 = scalar_lea.hbm %s5, %s1714
          %s1716 = sshll.u32 %s1705, 4
          %s1717 = int_to_ptr.vmem [resolvable:$true] %s1716
          %1722 = dma.vmem_to_hbm [thread:$0]  %s1717, 512, %s1715, %s1702, 256, 256, 16
        $region56: #{tpu_custom_call.1} parent=39 // pred_fallthru
          _
      $region40: #{tpu_custom_call.1} parent=5 // pred_fallthru
        _
      %p1723 = scmp.le.s32.totalorder 2, %s18
      // Predicated region
      $region57: #{tpu_custom_call.1} parent=5 // pred_check
        %p1724 = pneg %p1723
      $region58: #{tpu_custom_call.1} parent=5 // pred_check_branch
        %1726 = sbr.rel (%p1724) target = $region60
      $region59: #{tpu_custom_call.1} parent=5 // pred_region
        %s1727 = ssub.s32 %s18, 2
        // Predicated region
        $region61: #{tpu_custom_call.1} parent=59 // pred_check
          %p1728 = pneg %p157
        $region62: #{tpu_custom_call.1} parent=59 // pred_check_branch
          %1730 = sbr.rel (%p1728) target = $region64
        $region63: #{tpu_custom_call.1} parent=59 // pred_region
          %s1731 = sand.u32 %s142, 1
          %s1732 = scalar_lea.sflag [#allocation4], %s1731
          %s1733 = sand.u32 %s142, 1
          %s1734 = smul.addr %s1733, 32
          %s1735 = scalar_lea.vmem [#allocation8], %s1734
          %1736 = dma.done %s1732, 512
        $region64: #{tpu_custom_call.1} parent=59 // pred_fallthru
          _
      $region60: #{tpu_custom_call.1} parent=5 // pred_fallthru
        _
    $region6: #{tpu_custom_call.1} parent=1 // loop_footer
      %s22 = sadd.s32 1, %s18
    $region7: #{tpu_custom_call.1} parent=1 // loop_footer_branch
      %17 = sbr.rel target = $region3
    $region8: #{tpu_custom_call.1} parent=1 // loop_exit
      _
    %1737 = vsyncpa [#allocation3], 1
    %s1738 = scalar_lea.sflag [#allocation3], 1
    %1739 = vsyncpa %s1738, 1
    %1740 = vsyncpa [#allocation6], 1
    %1741 = vsyncpa [#allocation4], 1
    %s1742 = scalar_lea.sflag [#allocation4], 1
    %1743 = vsyncpa %s1742, 1

</llo_original>
